<compile_context>
chip_gen: v5e
topology: v5e:2x2
jax: 0.10.0
libtpu: 0.0.40
codegen_flags: <defaults>
</compile_context>

<pallas_src>
import functools
import math

import jax
import jax.numpy as jnp
import numpy as np
from jax.experimental import pallas as pl
from jax.experimental.pallas import tpu as pltpu


def _round_up(x, m):
    return ((x + m - 1) // m) * m


def _bilstm_layer_kernel(*refs, T, Bp, H, Gd, n_in):
    """One bidirectional LSTM layer, whole sequence, single kernel invocation.

    Refs (n_in = 1 for the embedding layer, 2 for deeper layers):
      x_a   : (T*Bp, Da) f32   time-aligned features (row block t = time t)
      [x_b  : (T*Bp, Gd) f32   bwd-half features of the previous layer]
      lens  : (Bp, 1)   i32    per-batch-row valid lengths (0 for pad rows)
      w_a   : (Da, 8*Gd) bf16  packed input weights for x_a
      [w_b  : (Gd, 8*Gd) bf16  packed input weights for x_b]
      w_hh  : (2*Gd, 8*Gd) f32 packed recurrent weights (block structured)
      bias  : (1, 8*Gd) f32    packed b_ih + b_hh
      out_f : (T, Bp, Gd) f32  row t = masked fwd hidden at time t
      out_b : (T, Bp, Gd) f32  row t = masked bwd hidden at time t (time-aligned)
      h_out : (Bp, 2*Gd) f32   final carried hidden  [h_f | h_b]
      c_out : (Bp, 2*Gd) f32   final carried cell    [c_f | c_b]
      pre   : (T*Bp, 8*Gd) f32 scratch: input-side gate pre-activations (+bias)
      vmask : (T, Bp, Gd) f32  scratch: vmask[t, b, :] = 1.0 iff t < lens[b]

    Gate columns (width 8*Gd, PyTorch gate order i,f,g,o, GB = 2*Gd per gate):
      [k*GB      : k*GB + Gd)  forward  gate k  (cols 0:H used, rest zero pad)
      [k*GB + Gd : k*GB + 2Gd) backward gate k
    State columns (width 2*Gd): [0:Gd) = fwd, [Gd:2Gd) = bwd (cols 0:H used).
    """
    if n_in == 1:
        (xa_ref, lens_ref, wa_ref, whh_ref, b_ref,
         out_f_ref, out_b_ref, h_ref, c_ref, pre_ref, vmask_ref) = refs
        xb_ref = wb_ref = None
    else:
        (xa_ref, xb_ref, lens_ref, wa_ref, wb_ref, whh_ref, b_ref,
         out_f_ref, out_b_ref, h_ref, c_ref, pre_ref, vmask_ref) = refs

    GB = 2 * Gd                      # per-gate block width (fwd 128 | bwd 128)

    # (1) Hoisted input projection: one/two big bf16 MXU matmuls for the whole
    #     sequence and both directions, bias folded in.  Off the serial path.
    acc = jnp.dot(xa_ref[...].astype(jnp.bfloat16), wa_ref[...],
                  preferred_element_type=jnp.float32)
    if n_in == 2:
        acc = acc + jnp.dot(xb_ref[...].astype(jnp.bfloat16), wb_ref[...],
                            preferred_element_type=jnp.float32)
    pre_ref[...] = acc + b_ref[...]

    # (2) Precompute packed-sequence validity masks (hoisted out of the loop):
    #     vmask[t, b, :] = 1.0 iff time step t is valid for batch row b.
    t_idx = jax.lax.broadcasted_iota(jnp.int32, (T, Bp, Gd), 0)
    lens3 = lens_ref[...].reshape(1, Bp, 1)
    vmask_ref[...] = (lens3 > t_idx).astype(jnp.float32)

    # (3) Loop-invariant values.
    whh = whh_ref[...]                                          # (2Gd, 8Gd) f32
    gcol = jax.lax.broadcasted_iota(jnp.int32, (Bp, 4 * GB), 1)
    is_fwd_gate_col = jax.lax.rem(gcol, GB) < Gd                # (Bp, 8Gd) bool

    # (4) Serial recurrence: h/c live in vregs as the fori_loop carry.
    def step(s, carry):
        h, c = carry
        rs = T - 1 - s                      # bwd time index handled at step s
        row_s = pl.multiple_of(s * Bp, Bp)
        row_r = pl.multiple_of(rs * Bp, Bp)
        # Input-side gate pre-activations: fwd gate columns read time s, bwd
        # gate columns read time T-1-s.  Depends only on s -> off the h chain.
        pre_s = pre_ref[pl.ds(row_s, Bp), :]
        pre_r = pre_ref[pl.ds(row_r, Bp), :]
        gates_in = jnp.where(is_fwd_gate_col, pre_s, pre_r)     # (Bp, 8Gd)

        # Single recurrent matmul per step; gate columns are block-structured
        # so the two directions never mix.  Kept in f32 for accuracy.
        # TODO(synk): keep w_hh staged in the MXU via pltpu.matmul_push_rhs /
        #             matmul_acc_lhs / matmul_pop (weight push >> 8-row acc).
        gates = gates_in + jnp.dot(h, whh, preferred_element_type=jnp.float32)

        i_g = jax.nn.sigmoid(gates[:, 0 * GB:1 * GB])
        f_g = jax.nn.sigmoid(gates[:, 1 * GB:2 * GB])
        g_g = jnp.tanh(gates[:, 2 * GB:3 * GB])
        o_g = jax.nn.sigmoid(gates[:, 3 * GB:4 * GB])
        c_new = f_g * c + i_g * g_g
        h_new = o_g * jnp.tanh(c_new)

        # Packed-sequence masking with precomputed masks: invalid steps freeze
        # the carried state and emit exact zeros (pack/pad_packed semantics).
        m = jnp.concatenate([vmask_ref[s], vmask_ref[rs]], axis=-1)  # (Bp, 2Gd)
        im = 1.0 - m
        hk = m * h_new
        ck = m * c_new
        out_f_ref[s] = hk[:, :Gd].astype(out_f_ref.dtype)   # fwd hidden, time s
        out_b_ref[rs] = hk[:, Gd:].astype(out_b_ref.dtype)  # bwd hidden, time T-1-s
        return (hk + im * h, ck + im * c)

    h0 = jnp.zeros((Bp, 2 * Gd), jnp.float32)
    c0 = jnp.zeros((Bp, 2 * Gd), jnp.float32)
    # Bounded unroll: full only for tiny static T (keeps LLO visibility without
    # blowing instruction memory / vreg live ranges at realistic T).
    unroll = T if T <= 16 else 8
    h_fin, c_fin = jax.lax.fori_loop(0, T, step, (h0, c0), unroll=unroll)

    # Final carried state written once (not per step).
    h_ref[...] = h_fin
    c_ref[...] = c_fin


def _vmem_limit_bytes(in_arrays, out_shapes, scratch_bytes):
    """Size the scoped-VMEM limit from actual slab sizes (+ headroom)."""
    def nbytes(shape, dtype):
        return math.prod(shape) * jnp.dtype(dtype).itemsize
    io = sum(nbytes(a.shape, a.dtype) for a in in_arrays)
    io += sum(nbytes(o.shape, o.dtype) for o in out_shapes)
    # Inputs/outputs may be double-buffered even at grid=(1,); add scratch and
    # margin.  TODO(synk): the time-chunked grid variant makes this constant.
    need = 2 * io + scratch_bytes + (4 << 20)
    return int(min(max(need, 16 << 20), 96 << 20))


def bilstm_layer(x_a, x_b, lens2d, lp, T, Bp, H, Gd):
    """Run one bidirectional LSTM layer over the full (padded) sequence.

    x_a: (T*Bp, Da) f32 time-aligned input slab (embedding, or previous layer's
         fwd-half output slab).  x_b: None, or the previous layer's bwd half.
    Returns (out_f (T,Bp,Gd), out_b (T,Bp,Gd), h_fin (Bp,2Gd), c_fin (Bp,2Gd)).
    """
    n_in = 1 if x_b is None else 2
    kernel = functools.partial(_bilstm_layer_kernel,
                               T=T, Bp=Bp, H=H, Gd=Gd, n_in=n_in)

    inputs = [x_a]
    in_specs = [pl.BlockSpec(x_a.shape, lambda i: (0, 0))]
    if n_in == 2:
        inputs.append(x_b)
        in_specs.append(pl.BlockSpec(x_b.shape, lambda i: (0, 0)))
    inputs += [lens2d, lp["w_in_a"]]
    in_specs += [pl.BlockSpec(lens2d.shape, lambda i: (0, 0)),
                 pl.BlockSpec(lp["w_in_a"].shape, lambda i: (0, 0))]
    if n_in == 2:
        inputs.append(lp["w_in_b"])
        in_specs.append(pl.BlockSpec(lp["w_in_b"].shape, lambda i: (0, 0)))
    inputs += [lp["w_hh"], lp["bias"]]
    in_specs += [pl.BlockSpec(lp["w_hh"].shape, lambda i: (0, 0)),
                 pl.BlockSpec(lp["bias"].shape, lambda i: (0, 0))]

    out_shape = [
        jax.ShapeDtypeStruct((T, Bp, Gd), jnp.float32),     # out_f (time-aligned)
        jax.ShapeDtypeStruct((T, Bp, Gd), jnp.float32),     # out_b (time-aligned)
        jax.ShapeDtypeStruct((Bp, 2 * Gd), jnp.float32),    # final h
        jax.ShapeDtypeStruct((Bp, 2 * Gd), jnp.float32),    # final c
    ]
    out_specs = [
        pl.BlockSpec((T, Bp, Gd), lambda i: (0, 0, 0)),
        pl.BlockSpec((T, Bp, Gd), lambda i: (0, 0, 0)),
        pl.BlockSpec((Bp, 2 * Gd), lambda i: (0, 0)),
        pl.BlockSpec((Bp, 2 * Gd), lambda i: (0, 0)),
    ]
    scratch_shapes = [pltpu.VMEM((T * Bp, 8 * Gd), jnp.float32),   # pre-activations
                      pltpu.VMEM((T, Bp, Gd), jnp.float32)]        # validity masks
    scratch_bytes = (T * Bp * 8 * Gd + T * Bp * Gd) * 4

    # TODO(synk): v7x — chunk time across a grid axis and split fwd/bwd across
    # the two TensorCores (core-parallel); single-shot here targets v5e/v6e.
    return pl.pallas_call(
        kernel,
        grid=(1,),
        in_specs=in_specs,
        out_specs=out_specs,
        out_shape=out_shape,
        scratch_shapes=scratch_shapes,
        compiler_params=pltpu.CompilerParams(
            dimension_semantics=("arbitrary",),
            vmem_limit_bytes=_vmem_limit_bytes(inputs, out_shape, scratch_bytes)),
    )(*inputs)


def _pack_layer(w_ih_f, w_hh_f, b_f, w_ih_b, w_hh_b, b_b, H, Gd, first):
    """Pack per-direction weights into the padded, block-structured layout.

    Zero pad blocks are load-bearing: with zero weights/bias in the pad columns,
    sigmoid(0)*tanh(0)=0 keeps the padded state columns exactly 0 (asserted).
    """
    din = w_ih_f.shape[0]
    GB = 2 * Gd
    w_hh = jnp.zeros((2 * Gd, 4 * GB), jnp.float32)
    bias = jnp.zeros((1, 4 * GB), jnp.float32)
    if first:
        w_a = jnp.zeros((din, 4 * GB), jnp.float32)    # rows = embedding features
        w_b = None
    else:
        w_a = jnp.zeros((Gd, 4 * GB), jnp.float32)     # rows = prev fwd-half feats
        w_b = jnp.zeros((Gd, 4 * GB), jnp.float32)     # rows = prev bwd-half feats
    valid_cols = np.zeros((4 * GB,), bool)
    for k in range(4):                        # PyTorch gate order [i, f, g, o]
        src = slice(k * H, (k + 1) * H)
        fcol = slice(k * GB, k * GB + H)
        bcol = slice(k * GB + Gd, k * GB + Gd + H)
        valid_cols[fcol] = True
        valid_cols[bcol] = True
        w_hh = w_hh.at[:H, fcol].set(w_hh_f[:, src])
        w_hh = w_hh.at[Gd:Gd + H, bcol].set(w_hh_b[:, src])
        bias = bias.at[:, fcol].set(b_f[:, src])
        bias = bias.at[:, bcol].set(b_b[:, src])
        if first:
            w_a = w_a.at[:, fcol].set(w_ih_f[:, src])
            w_a = w_a.at[:, bcol].set(w_ih_b[:, src])
        else:
            w_a = w_a.at[:H, fcol].set(w_ih_f[:H, src])
            w_a = w_a.at[:H, bcol].set(w_ih_b[:H, src])
            w_b = w_b.at[:H, fcol].set(w_ih_f[H:2 * H, src])
            w_b = w_b.at[:H, bcol].set(w_ih_b[H:2 * H, src])
    # Pad-column invariant (keeps pad state exactly zero through the recurrence).
    pad = jnp.asarray(~valid_cols)
    assert bool(jnp.all(jnp.where(pad, bias[0], 0.0) == 0.0))
    assert bool(jnp.all(jnp.where(pad[None, :], w_hh, 0.0) == 0.0))
    packed = {"w_in_a": w_a.astype(jnp.bfloat16),      # bf16: native MXU rate
              "w_hh": w_hh, "bias": bias}
    if w_b is not None:
        packed["w_in_b"] = w_b.astype(jnp.bfloat16)
    return packed


def init_params(key, input_size, hidden_size, embed_size, n_layers):
    """Deterministic parameter init mirroring LSTMEncoderRNN's shapes.

    hidden_size is the constructor hidden_size; the per-direction size is
    hidden_size // 2 (bidirectional), exactly as in __init__.  Weights are
    generated in (in_features, 4H) layout and packed ONCE into the padded
    kernel layout (pure parameter preprocessing, not per-step work).
    """
    H = hidden_size // 2
    Gd = _round_up(H, 128)            # per-direction 128-lane state/gate block
    k = 1.0 / float(np.sqrt(H))
    keys = jax.random.split(key, 1 + 8 * n_layers)
    params = {
        "hidden_size": H,
        "dir_pad": Gd,
        "n_layers": n_layers,
        "embedding": jax.random.normal(keys[0], (input_size, embed_size),
                                       jnp.float32),
        "layers": [],
    }
    ki = 1
    for layer in range(n_layers):
        din = embed_size if layer == 0 else 2 * H
        raw = {}
        for d in ("f", "b"):
            w_ih = jax.random.uniform(keys[ki], (din, 4 * H), jnp.float32, -k, k)
            w_hh = jax.random.uniform(keys[ki + 1], (H, 4 * H), jnp.float32, -k, k)
            b_ih = jax.random.uniform(keys[ki + 2], (1, 4 * H), jnp.float32, -k, k)
            b_hh = jax.random.uniform(keys[ki + 3], (1, 4 * H), jnp.float32, -k, k)
            ki += 4
            raw[d] = (w_ih, w_hh, b_ih + b_hh)     # nn.LSTM adds both biases
        params["layers"].append(
            _pack_layer(raw["f"][0], raw["f"][1], raw["f"][2],
                        raw["b"][0], raw["b"][1], raw["b"][2],
                        H, Gd, first=(layer == 0)))
    return params


def lstm_encoder_forward(params, input_seqs, input_lengths):
    """Matches LSTMEncoderRNN.forward (hidden=None, eval mode -> dropout off).

    input_seqs:    (B, T) int32 token ids (batch_first, like PyTorch)
    input_lengths: python list / 1-D array of per-example lengths.  Lengths are
                   treated as concrete values (list-of-ints API); distinct
                   length sets retrace under jit.
    Returns (outputs (B, max_len, 2H), (h (L, B, 2H), c (L, B, 2H))).
    NOTE: MXU matmuls use default precision (bf16-class passes); expect ~1e-3
    level deviation from f32 PyTorch nn.LSTM.
    """
    H = params["hidden_size"]
    Gd = params["dir_pad"]
    n_layers = params["n_layers"]
    B, T = input_seqs.shape
    Bp = max(8, _round_up(B, 8))                   # pad batch to 8 sublanes

    lengths = jnp.asarray(input_lengths, jnp.int32)
    lens_pad = jnp.zeros((Bp,), jnp.int32).at[:B].set(lengths).reshape(Bp, 1)

    embedded = params["embedding"][input_seqs]     # (B, T, E) gather (XLA glue)
    x = jnp.transpose(embedded, (1, 0, 2))         # (T, B, E) time-major
    x = jnp.pad(x, ((0, 0), (0, Bp - B), (0, 0)))  # (T, Bp, E)
    x_a = x.reshape(T * Bp, -1)                    # time-aligned input slab
    x_b = None                                     # layer 0 has a single slab

    hs, cs = [], []
    out_f = out_b = None
    for l in range(n_layers):
        out_f, out_b, h_fin, c_fin = bilstm_layer(
            x_a, x_b, lens_pad, params["layers"][l], T, Bp, H, Gd)
        # Next layer consumes the two time-aligned output slabs directly —
        # no flip / concat / duplicated-sequence glue between layers.
        x_a = out_f.reshape(T * Bp, Gd)
        x_b = out_b.reshape(T * Bp, Gd)
        hs.append(jnp.concatenate([h_fin[:B, :H], h_fin[:B, Gd:Gd + H]], axis=-1))
        cs.append(jnp.concatenate([c_fin[:B, :H], c_fin[:B, Gd:Gd + H]], axis=-1))
        # TODO(synk): inter-layer dropout skipped (inactive in eval mode).

    # pad_packed_sequence pads only up to the max length in the batch.
    max_len = int(max(int(v) for v in input_lengths))
    outs = jnp.concatenate([out_f[:, :B, :H], out_b[:, :B, :H]], axis=-1)
    outputs = jnp.transpose(outs, (1, 0, 2))[:, :max_len]      # (B, max_len, 2H)

    # _cat_directions: per-layer [fwd | bwd] concat along the feature dim.
    return outputs, (jnp.stack(hs), jnp.stack(cs))


if __name__ == "__main__":
    input_size = 50      # vocab
    hidden_size = 64     # module hidden_size -> per-direction H = 32
    embed_size = 32
    n_layers = 2
    B, T = 2, 8
    input_lengths = [8, 5]

    key = jax.random.PRNGKey(0)
    pkey, tkey = jax.random.split(key)
    params = init_params(pkey, input_size, hidden_size, embed_size, n_layers)
    input_seqs = jax.random.randint(tkey, (B, T), 0, input_size, jnp.int32)

    outputs, (h, c) = lstm_encoder_forward(params, input_seqs, input_lengths)
    jax.block_until_ready((outputs, h, c))

    assert outputs.shape == (B, max(input_lengths), hidden_size)
    assert h.shape == (n_layers, B, hidden_size)
    assert c.shape == (n_layers, B, hidden_size)
    # Packed-sequence semantics: positions beyond a sequence's length are zero.
    assert bool(jnp.all(outputs[1, input_lengths[1]:] == 0.0))
    assert bool(jnp.all(jnp.isfinite(outputs)))
    print("KERNEL_OK")
</pallas_src>

<mosaic_0001>
module attributes {stable_mosaic.version = 11 : i64} {
  func.func @_bilstm_layer_kernel(%arg0: i32, %arg1: memref<64x32xf32, #tpu.memory_space<vmem>>, %arg2: memref<8x1xi32, #tpu.memory_space<vmem>>, %arg3: memref<32x1024xbf16, #tpu.memory_space<vmem>>, %arg4: memref<256x1024xf32, #tpu.memory_space<vmem>>, %arg5: memref<1x1024xf32, #tpu.memory_space<vmem>>, %arg6: memref<8x8x128xf32, #tpu.memory_space<vmem>>, %arg7: memref<8x8x128xf32, #tpu.memory_space<vmem>>, %arg8: memref<8x256xf32, #tpu.memory_space<vmem>>, %arg9: memref<8x256xf32, #tpu.memory_space<vmem>>, %arg10: memref<64x1024xf32, #tpu.memory_space<vmem>>, %arg11: memref<8x8x128xf32, #tpu.memory_space<vmem>>) attributes {dimension_semantics = [#tpu.dimension_semantics<arbitrary>], iteration_bounds = array<i64: 1>, scalar_prefetch = 0 : i64, scratch_operands = 2 : i64, tpu.core_type = #tpu.core_type<tc>, window_params = [{pipeline_mode = #tpu.pipeline_mode<synchronous>, transform_indices = @transform_0, window_bounds = array<i64: 64, 32>}, {pipeline_mode = #tpu.pipeline_mode<synchronous>, transform_indices = @transform_1, window_bounds = array<i64: 8, 1>}, {pipeline_mode = #tpu.pipeline_mode<synchronous>, transform_indices = @transform_2, window_bounds = array<i64: 32, 1024>}, {pipeline_mode = #tpu.pipeline_mode<synchronous>, transform_indices = @transform_3, window_bounds = array<i64: 256, 1024>}, {pipeline_mode = #tpu.pipeline_mode<synchronous>, transform_indices = @transform_4, window_bounds = array<i64: 1, 1024>}, {pipeline_mode = #tpu.pipeline_mode<synchronous>, transform_indices = @transform_5, window_bounds = array<i64: 8, 8, 128>}, {pipeline_mode = #tpu.pipeline_mode<synchronous>, transform_indices = @transform_6, window_bounds = array<i64: 8, 8, 128>}, {pipeline_mode = #tpu.pipeline_mode<synchronous>, transform_indices = @transform_7, window_bounds = array<i64: 8, 256>}, {pipeline_mode = #tpu.pipeline_mode<synchronous>, transform_indices = @transform_8, window_bounds = array<i64: 8, 256>}]} {
    %c0 = arith.constant 0 : index
    %c0_0 = arith.constant 0 : index
    %0 = vector.load %arg1[%c0, %c0_0] : memref<64x32xf32, #tpu.memory_space<vmem>>, vector<64x32xf32>
    %1 = arith.truncf %0 : vector<64x32xf32> to vector<64x32xbf16>
    %c0_1 = arith.constant 0 : index
    %c0_2 = arith.constant 0 : index
    %2 = vector.load %arg3[%c0_1, %c0_2] : memref<32x1024xbf16, #tpu.memory_space<vmem>>, vector<32x1024xbf16>
    %cst = arith.constant dense<0.000000e+00> : vector<64x1024xf32>
    %3 = tpu.matmul %1, %2, %cst {dimension_numbers = #tpu.dot_dimension_numbers<[1], [0], [0], [1], [0, 0, 1, 1], [], []>} : vector<64x32xbf16>, vector<32x1024xbf16>, vector<64x1024xf32> -> vector<64x1024xf32>
    %c0_3 = arith.constant 0 : index
    %c0_4 = arith.constant 0 : index
    %4 = vector.load %arg5[%c0_3, %c0_4] : memref<1x1024xf32, #tpu.memory_space<vmem>>, vector<1x1024xf32>
    %5 = vector.broadcast %4 : vector<1x1024xf32> to vector<64x1024xf32>
    %6 = arith.addf %3, %5 : vector<64x1024xf32>
    %c0_5 = arith.constant 0 : index
    %c0_6 = arith.constant 0 : index
    %7 = vector.load %arg10[%c0_5, %c0_6] : memref<64x1024xf32, #tpu.memory_space<vmem>>, vector<64x1024xf32>
    tpu.vector_store %arg10[%c0_5, %c0_6], %6 {strides = array<i32>} : memref<64x1024xf32, #tpu.memory_space<vmem>>, vector<64x1024xf32>,
    %8 = tpu.iota {dimensions = array<i32: 0>} : vector<8x8x128xi32>
    %c0_7 = arith.constant 0 : index
    %c0_8 = arith.constant 0 : index
    %9 = vector.load %arg2[%c0_7, %c0_8] : memref<8x1xi32, #tpu.memory_space<vmem>>, vector<8x1xi32>
    %10 = vector.shape_cast %9 : vector<8x1xi32> to vector<1x8x1xi32>
    %11 = vector.broadcast %10 : vector<1x8x1xi32> to vector<8x8x128xi32>
    %12 = arith.cmpi sgt, %11, %8 : vector<8x8x128xi32>
    %13 = arith.extui %12 : vector<8x8x128xi1> to vector<8x8x128xi32>
    %14 = arith.sitofp %13 : vector<8x8x128xi32> to vector<8x8x128xf32>
    %c0_9 = arith.constant 0 : index
    %c0_10 = arith.constant 0 : index
    %c0_11 = arith.constant 0 : index
    %15 = vector.load %arg11[%c0_9, %c0_10, %c0_11] : memref<8x8x128xf32, #tpu.memory_space<vmem>>, vector<8x8x128xf32>
    tpu.vector_store %arg11[%c0_9, %c0_10, %c0_11], %14 {strides = array<i32>} : memref<8x8x128xf32, #tpu.memory_space<vmem>>, vector<8x8x128xf32>,
    %c0_12 = arith.constant 0 : index
    %c0_13 = arith.constant 0 : index
    %16 = vector.load %arg4[%c0_12, %c0_13] : memref<256x1024xf32, #tpu.memory_space<vmem>>, vector<256x1024xf32>
    %17 = tpu.iota {dimensions = array<i32: 1>} : vector<8x1024xi32>
    %c256_i32 = arith.constant 256 : i32
    %18 = vector.broadcast %c256_i32 : i32 to vector<8x1024xi32>
    %19 = arith.remsi %17, %18 : vector<8x1024xi32>
    %c128_i32 = arith.constant 128 : i32
    %20 = vector.broadcast %c128_i32 : i32 to vector<8x1024xi32>
    %21 = arith.cmpi slt, %19, %20 : vector<8x1024xi32>
    %cst_14 = arith.constant 0.000000e+00 : f32
    %22 = vector.broadcast %cst_14 : f32 to vector<8x256xf32>
    %cst_15 = arith.constant 0.000000e+00 : f32
    %23 = vector.broadcast %cst_15 : f32 to vector<8x256xf32>
    %c0_i32 = arith.constant 0 : i32
    %c7_i32 = arith.constant 7 : i32
    %24 = arith.subi %c7_i32, %c0_i32 : i32
    %c8_i32 = arith.constant 8 : i32
    %25 = arith.muli %c0_i32, %c8_i32 : i32
    %26 = tpu.assume_multiple %25, 8 : i32
    %c8_i32_16 = arith.constant 8 : i32
    %27 = arith.muli %24, %c8_i32_16 : i32
    %28 = tpu.assume_multiple %27, 8 : i32
    %29 = arith.index_cast %26 : i32 to index
    %c0_17 = arith.constant 0 : index
    %30 = vector.load %arg10[%29, %c0_17] : memref<64x1024xf32, #tpu.memory_space<vmem>>, vector<8x1024xf32>
    %31 = arith.index_cast %28 : i32 to index
    %c0_18 = arith.constant 0 : index
    %32 = vector.load %arg10[%31, %c0_18] : memref<64x1024xf32, #tpu.memory_space<vmem>>, vector<8x1024xf32>
    %33 = arith.select %21, %30, %32 : vector<8x1024xi1>, vector<8x1024xf32>
    %cst_19 = arith.constant dense<0.000000e+00> : vector<8x1024xf32>
    %34 = tpu.matmul %22, %16, %cst_19 {dimension_numbers = #tpu.dot_dimension_numbers<[1], [0], [0], [1], [0, 0, 1, 1], [], []>} : vector<8x256xf32>, vector<256x1024xf32>, vector<8x1024xf32> -> vector<8x1024xf32>
    %35 = arith.addf %33, %34 : vector<8x1024xf32>
    %36 = vector.extract_strided_slice %35 {offsets = [0, 0], sizes = [8, 256], strides = [1, 1]} : vector<8x1024xf32> to vector<8x256xf32>
    %37 = arith.negf %36 : vector<8x256xf32>
    %38 = math.exp %37 : vector<8x256xf32>
    %cst_20 = arith.constant 1.000000e+00 : f32
    %39 = vector.broadcast %cst_20 : f32 to vector<8x256xf32>
    %40 = arith.addf %39, %38 : vector<8x256xf32>
    %41 = arith.divf %39, %40 : vector<8x256xf32>
    %42 = vector.extract_strided_slice %35 {offsets = [0, 256], sizes = [8, 256], strides = [1, 1]} : vector<8x1024xf32> to vector<8x256xf32>
    %43 = arith.negf %42 : vector<8x256xf32>
    %44 = math.exp %43 : vector<8x256xf32>
    %cst_21 = arith.constant 1.000000e+00 : f32
    %45 = vector.broadcast %cst_21 : f32 to vector<8x256xf32>
    %46 = arith.addf %45, %44 : vector<8x256xf32>
    %47 = arith.divf %45, %46 : vector<8x256xf32>
    %48 = vector.extract_strided_slice %35 {offsets = [0, 512], sizes = [8, 256], strides = [1, 1]} : vector<8x1024xf32> to vector<8x256xf32>
    %49 = math.tanh %48 : vector<8x256xf32>
    %50 = vector.extract_strided_slice %35 {offsets = [0, 768], sizes = [8, 256], strides = [1, 1]} : vector<8x1024xf32> to vector<8x256xf32>
    %51 = arith.negf %50 : vector<8x256xf32>
    %52 = math.exp %51 : vector<8x256xf32>
    %cst_22 = arith.constant 1.000000e+00 : f32
    %53 = vector.broadcast %cst_22 : f32 to vector<8x256xf32>
    %54 = arith.addf %53, %52 : vector<8x256xf32>
    %55 = arith.divf %53, %54 : vector<8x256xf32>
    %56 = arith.mulf %47, %23 : vector<8x256xf32>
    %57 = arith.mulf %41, %49 : vector<8x256xf32>
    %58 = arith.addf %56, %57 : vector<8x256xf32>
    %59 = math.tanh %58 : vector<8x256xf32>
    %60 = arith.mulf %55, %59 : vector<8x256xf32>
    %61 = arith.index_cast %c0_i32 : i32 to index
    %c0_23 = arith.constant 0 : index
    %c0_24 = arith.constant 0 : index
    %62 = vector.load %arg11[%61, %c0_23, %c0_24] : memref<8x8x128xf32, #tpu.memory_space<vmem>>, vector<1x8x128xf32>
    %63 = vector.shape_cast %62 : vector<1x8x128xf32> to vector<8x128xf32>
    %64 = arith.index_cast %24 : i32 to index
    %c0_25 = arith.constant 0 : index
    %c0_26 = arith.constant 0 : index
    %65 = vector.load %arg11[%64, %c0_25, %c0_26] : memref<8x8x128xf32, #tpu.memory_space<vmem>>, vector<1x8x128xf32>
    %66 = vector.shape_cast %65 : vector<1x8x128xf32> to vector<8x128xf32>
    %67 = tpu.concatenate %63, %66 in 1 : vector<8x128xf32>, vector<8x128xf32> -> vector<8x256xf32>
    %cst_27 = arith.constant 1.000000e+00 : f32
    %68 = vector.broadcast %cst_27 : f32 to vector<8x256xf32>
    %69 = arith.subf %68, %67 : vector<8x256xf32>
    %70 = arith.mulf %67, %60 : vector<8x256xf32>
    %71 = arith.mulf %67, %58 : vector<8x256xf32>
    %72 = vector.extract_strided_slice %70 {offsets = [0, 0], sizes = [8, 128], strides = [1, 1]} : vector<8x256xf32> to vector<8x128xf32>
    %73 = arith.index_cast %c0_i32 : i32 to index
    %c0_28 = arith.constant 0 : index
    %c0_29 = arith.constant 0 : index
    %74 = vector.load %arg6[%73, %c0_28, %c0_29] : memref<8x8x128xf32, #tpu.memory_space<vmem>>, vector<1x8x128xf32>
    %75 = vector.shape_cast %74 : vector<1x8x128xf32> to vector<8x128xf32>
    %76 = vector.shape_cast %72 : vector<8x128xf32> to vector<1x8x128xf32>
    tpu.vector_store %arg6[%73, %c0_28, %c0_29], %76 {strides = array<i32>} : memref<8x8x128xf32, #tpu.memory_space<vmem>>, vector<1x8x128xf32>,
    %77 = vector.extract_strided_slice %70 {offsets = [0, 128], sizes = [8, 128], strides = [1, 1]} : vector<8x256xf32> to vector<8x128xf32>
    %78 = arith.index_cast %24 : i32 to index
    %c0_30 = arith.constant 0 : index
    %c0_31 = arith.constant 0 : index
    %79 = vector.load %arg7[%78, %c0_30, %c0_31] : memref<8x8x128xf32, #tpu.memory_space<vmem>>, vector<1x8x128xf32>
    %80 = vector.shape_cast %79 : vector<1x8x128xf32> to vector<8x128xf32>
    %81 = vector.shape_cast %77 : vector<8x128xf32> to vector<1x8x128xf32>
    tpu.vector_store %arg7[%78, %c0_30, %c0_31], %81 {strides = array<i32>} : memref<8x8x128xf32, #tpu.memory_space<vmem>>, vector<1x8x128xf32>,
    %82 = arith.mulf %69, %22 : vector<8x256xf32>
    %83 = arith.addf %70, %82 : vector<8x256xf32>
    %84 = arith.mulf %69, %23 : vector<8x256xf32>
    %85 = arith.addf %71, %84 : vector<8x256xf32>
    %c1_i32 = arith.constant 1 : i32
    %c7_i32_32 = arith.constant 7 : i32
    %86 = arith.subi %c7_i32_32, %c1_i32 : i32
    %c8_i32_33 = arith.constant 8 : i32
    %87 = arith.muli %c1_i32, %c8_i32_33 : i32
    %88 = tpu.assume_multiple %87, 8 : i32
    %c8_i32_34 = arith.constant 8 : i32
    %89 = arith.muli %86, %c8_i32_34 : i32
    %90 = tpu.assume_multiple %89, 8 : i32
    %91 = arith.index_cast %88 : i32 to index
    %c0_35 = arith.constant 0 : index
    %92 = vector.load %arg10[%91, %c0_35] : memref<64x1024xf32, #tpu.memory_space<vmem>>, vector<8x1024xf32>
    %93 = arith.index_cast %90 : i32 to index
    %c0_36 = arith.constant 0 : index
    %94 = vector.load %arg10[%93, %c0_36] : memref<64x1024xf32, #tpu.memory_space<vmem>>, vector<8x1024xf32>
    %95 = arith.select %21, %92, %94 : vector<8x1024xi1>, vector<8x1024xf32>
    %cst_37 = arith.constant dense<0.000000e+00> : vector<8x1024xf32>
    %96 = tpu.matmul %83, %16, %cst_37 {dimension_numbers = #tpu.dot_dimension_numbers<[1], [0], [0], [1], [0, 0, 1, 1], [], []>} : vector<8x256xf32>, vector<256x1024xf32>, vector<8x1024xf32> -> vector<8x1024xf32>
    %97 = arith.addf %95, %96 : vector<8x1024xf32>
    %98 = vector.extract_strided_slice %97 {offsets = [0, 0], sizes = [8, 256], strides = [1, 1]} : vector<8x1024xf32> to vector<8x256xf32>
    %99 = arith.negf %98 : vector<8x256xf32>
    %100 = math.exp %99 : vector<8x256xf32>
    %cst_38 = arith.constant 1.000000e+00 : f32
    %101 = vector.broadcast %cst_38 : f32 to vector<8x256xf32>
    %102 = arith.addf %101, %100 : vector<8x256xf32>
    %103 = arith.divf %101, %102 : vector<8x256xf32>
    %104 = vector.extract_strided_slice %97 {offsets = [0, 256], sizes = [8, 256], strides = [1, 1]} : vector<8x1024xf32> to vector<8x256xf32>
    %105 = arith.negf %104 : vector<8x256xf32>
    %106 = math.exp %105 : vector<8x256xf32>
    %cst_39 = arith.constant 1.000000e+00 : f32
    %107 = vector.broadcast %cst_39 : f32 to vector<8x256xf32>
    %108 = arith.addf %107, %106 : vector<8x256xf32>
    %109 = arith.divf %107, %108 : vector<8x256xf32>
    %110 = vector.extract_strided_slice %97 {offsets = [0, 512], sizes = [8, 256], strides = [1, 1]} : vector<8x1024xf32> to vector<8x256xf32>
    %111 = math.tanh %110 : vector<8x256xf32>
    %112 = vector.extract_strided_slice %97 {offsets = [0, 768], sizes = [8, 256], strides = [1, 1]} : vector<8x1024xf32> to vector<8x256xf32>
    %113 = arith.negf %112 : vector<8x256xf32>
    %114 = math.exp %113 : vector<8x256xf32>
    %cst_40 = arith.constant 1.000000e+00 : f32
    %115 = vector.broadcast %cst_40 : f32 to vector<8x256xf32>
    %116 = arith.addf %115, %114 : vector<8x256xf32>
    %117 = arith.divf %115, %116 : vector<8x256xf32>
    %118 = arith.mulf %109, %85 : vector<8x256xf32>
    %119 = arith.mulf %103, %111 : vector<8x256xf32>
    %120 = arith.addf %118, %119 : vector<8x256xf32>
    %121 = math.tanh %120 : vector<8x256xf32>
    %122 = arith.mulf %117, %121 : vector<8x256xf32>
    %123 = arith.index_cast %c1_i32 : i32 to index
    %c0_41 = arith.constant 0 : index
    %c0_42 = arith.constant 0 : index
    %124 = vector.load %arg11[%123, %c0_41, %c0_42] : memref<8x8x128xf32, #tpu.memory_space<vmem>>, vector<1x8x128xf32>
    %125 = vector.shape_cast %124 : vector<1x8x128xf32> to vector<8x128xf32>
    %126 = arith.index_cast %86 : i32 to index
    %c0_43 = arith.constant 0 : index
    %c0_44 = arith.constant 0 : index
    %127 = vector.load %arg11[%126, %c0_43, %c0_44] : memref<8x8x128xf32, #tpu.memory_space<vmem>>, vector<1x8x128xf32>
    %128 = vector.shape_cast %127 : vector<1x8x128xf32> to vector<8x128xf32>
    %129 = tpu.concatenate %125, %128 in 1 : vector<8x128xf32>, vector<8x128xf32> -> vector<8x256xf32>
    %cst_45 = arith.constant 1.000000e+00 : f32
    %130 = vector.broadcast %cst_45 : f32 to vector<8x256xf32>
    %131 = arith.subf %130, %129 : vector<8x256xf32>
    %132 = arith.mulf %129, %122 : vector<8x256xf32>
    %133 = arith.mulf %129, %120 : vector<8x256xf32>
    %134 = vector.extract_strided_slice %132 {offsets = [0, 0], sizes = [8, 128], strides = [1, 1]} : vector<8x256xf32> to vector<8x128xf32>
    %135 = arith.index_cast %c1_i32 : i32 to index
    %c0_46 = arith.constant 0 : index
    %c0_47 = arith.constant 0 : index
    %136 = vector.load %arg6[%135, %c0_46, %c0_47] : memref<8x8x128xf32, #tpu.memory_space<vmem>>, vector<1x8x128xf32>
    %137 = vector.shape_cast %136 : vector<1x8x128xf32> to vector<8x128xf32>
    %138 = vector.shape_cast %134 : vector<8x128xf32> to vector<1x8x128xf32>
    tpu.vector_store %arg6[%135, %c0_46, %c0_47], %138 {strides = array<i32>} : memref<8x8x128xf32, #tpu.memory_space<vmem>>, vector<1x8x128xf32>,
    %139 = vector.extract_strided_slice %132 {offsets = [0, 128], sizes = [8, 128], strides = [1, 1]} : vector<8x256xf32> to vector<8x128xf32>
    %140 = arith.index_cast %86 : i32 to index
    %c0_48 = arith.constant 0 : index
    %c0_49 = arith.constant 0 : index
    %141 = vector.load %arg7[%140, %c0_48, %c0_49] : memref<8x8x128xf32, #tpu.memory_space<vmem>>, vector<1x8x128xf32>
    %142 = vector.shape_cast %141 : vector<1x8x128xf32> to vector<8x128xf32>
    %143 = vector.shape_cast %139 : vector<8x128xf32> to vector<1x8x128xf32>
    tpu.vector_store %arg7[%140, %c0_48, %c0_49], %143 {strides = array<i32>} : memref<8x8x128xf32, #tpu.memory_space<vmem>>, vector<1x8x128xf32>,
    %144 = arith.mulf %131, %83 : vector<8x256xf32>
    %145 = arith.addf %132, %144 : vector<8x256xf32>
    %146 = arith.mulf %131, %85 : vector<8x256xf32>
    %147 = arith.addf %133, %146 : vector<8x256xf32>
    %c2_i32 = arith.constant 2 : i32
    %c7_i32_50 = arith.constant 7 : i32
    %148 = arith.subi %c7_i32_50, %c2_i32 : i32
    %c8_i32_51 = arith.constant 8 : i32
    %149 = arith.muli %c2_i32, %c8_i32_51 : i32
    %150 = tpu.assume_multiple %149, 8 : i32
    %c8_i32_52 = arith.constant 8 : i32
    %151 = arith.muli %148, %c8_i32_52 : i32
    %152 = tpu.assume_multiple %151, 8 : i32
    %153 = arith.index_cast %150 : i32 to index
    %c0_53 = arith.constant 0 : index
    %154 = vector.load %arg10[%153, %c0_53] : memref<64x1024xf32, #tpu.memory_space<vmem>>, vector<8x1024xf32>
    %155 = arith.index_cast %152 : i32 to index
    %c0_54 = arith.constant 0 : index
    %156 = vector.load %arg10[%155, %c0_54] : memref<64x1024xf32, #tpu.memory_space<vmem>>, vector<8x1024xf32>
    %157 = arith.select %21, %154, %156 : vector<8x1024xi1>, vector<8x1024xf32>
    %cst_55 = arith.constant dense<0.000000e+00> : vector<8x1024xf32>
    %158 = tpu.matmul %145, %16, %cst_55 {dimension_numbers = #tpu.dot_dimension_numbers<[1], [0], [0], [1], [0, 0, 1, 1], [], []>} : vector<8x256xf32>, vector<256x1024xf32>, vector<8x1024xf32> -> vector<8x1024xf32>
    %159 = arith.addf %157, %158 : vector<8x1024xf32>
    %160 = vector.extract_strided_slice %159 {offsets = [0, 0], sizes = [8, 256], strides = [1, 1]} : vector<8x1024xf32> to vector<8x256xf32>
    %161 = arith.negf %160 : vector<8x256xf32>
    %162 = math.exp %161 : vector<8x256xf32>
    %cst_56 = arith.constant 1.000000e+00 : f32
    %163 = vector.broadcast %cst_56 : f32 to vector<8x256xf32>
    %164 = arith.addf %163, %162 : vector<8x256xf32>
    %165 = arith.divf %163, %164 : vector<8x256xf32>
    %166 = vector.extract_strided_slice %159 {offsets = [0, 256], sizes = [8, 256], strides = [1, 1]} : vector<8x1024xf32> to vector<8x256xf32>
    %167 = arith.negf %166 : vector<8x256xf32>
    %168 = math.exp %167 : vector<8x256xf32>
    %cst_57 = arith.constant 1.000000e+00 : f32
    %169 = vector.broadcast %cst_57 : f32 to vector<8x256xf32>
    %170 = arith.addf %169, %168 : vector<8x256xf32>
    %171 = arith.divf %169, %170 : vector<8x256xf32>
    %172 = vector.extract_strided_slice %159 {offsets = [0, 512], sizes = [8, 256], strides = [1, 1]} : vector<8x1024xf32> to vector<8x256xf32>
    %173 = math.tanh %172 : vector<8x256xf32>
    %174 = vector.extract_strided_slice %159 {offsets = [0, 768], sizes = [8, 256], strides = [1, 1]} : vector<8x1024xf32> to vector<8x256xf32>
    %175 = arith.negf %174 : vector<8x256xf32>
    %176 = math.exp %175 : vector<8x256xf32>
    %cst_58 = arith.constant 1.000000e+00 : f32
    %177 = vector.broadcast %cst_58 : f32 to vector<8x256xf32>
    %178 = arith.addf %177, %176 : vector<8x256xf32>
    %179 = arith.divf %177, %178 : vector<8x256xf32>
    %180 = arith.mulf %171, %147 : vector<8x256xf32>
    %181 = arith.mulf %165, %173 : vector<8x256xf32>
    %182 = arith.addf %180, %181 : vector<8x256xf32>
    %183 = math.tanh %182 : vector<8x256xf32>
    %184 = arith.mulf %179, %183 : vector<8x256xf32>
    %185 = arith.index_cast %c2_i32 : i32 to index
    %c0_59 = arith.constant 0 : index
    %c0_60 = arith.constant 0 : index
    %186 = vector.load %arg11[%185, %c0_59, %c0_60] : memref<8x8x128xf32, #tpu.memory_space<vmem>>, vector<1x8x128xf32>
    %187 = vector.shape_cast %186 : vector<1x8x128xf32> to vector<8x128xf32>
    %188 = arith.index_cast %148 : i32 to index
    %c0_61 = arith.constant 0 : index
    %c0_62 = arith.constant 0 : index
    %189 = vector.load %arg11[%188, %c0_61, %c0_62] : memref<8x8x128xf32, #tpu.memory_space<vmem>>, vector<1x8x128xf32>
    %190 = vector.shape_cast %189 : vector<1x8x128xf32> to vector<8x128xf32>
    %191 = tpu.concatenate %187, %190 in 1 : vector<8x128xf32>, vector<8x128xf32> -> vector<8x256xf32>
    %cst_63 = arith.constant 1.000000e+00 : f32
    %192 = vector.broadcast %cst_63 : f32 to vector<8x256xf32>
    %193 = arith.subf %192, %191 : vector<8x256xf32>
    %194 = arith.mulf %191, %184 : vector<8x256xf32>
    %195 = arith.mulf %191, %182 : vector<8x256xf32>
    %196 = vector.extract_strided_slice %194 {offsets = [0, 0], sizes = [8, 128], strides = [1, 1]} : vector<8x256xf32> to vector<8x128xf32>
    %197 = arith.index_cast %c2_i32 : i32 to index
    %c0_64 = arith.constant 0 : index
    %c0_65 = arith.constant 0 : index
    %198 = vector.load %arg6[%197, %c0_64, %c0_65] : memref<8x8x128xf32, #tpu.memory_space<vmem>>, vector<1x8x128xf32>
    %199 = vector.shape_cast %198 : vector<1x8x128xf32> to vector<8x128xf32>
    %200 = vector.shape_cast %196 : vector<8x128xf32> to vector<1x8x128xf32>
    tpu.vector_store %arg6[%197, %c0_64, %c0_65], %200 {strides = array<i32>} : memref<8x8x128xf32, #tpu.memory_space<vmem>>, vector<1x8x128xf32>,
    %201 = vector.extract_strided_slice %194 {offsets = [0, 128], sizes = [8, 128], strides = [1, 1]} : vector<8x256xf32> to vector<8x128xf32>
    %202 = arith.index_cast %148 : i32 to index
    %c0_66 = arith.constant 0 : index
    %c0_67 = arith.constant 0 : index
    %203 = vector.load %arg7[%202, %c0_66, %c0_67] : memref<8x8x128xf32, #tpu.memory_space<vmem>>, vector<1x8x128xf32>
    %204 = vector.shape_cast %203 : vector<1x8x128xf32> to vector<8x128xf32>
    %205 = vector.shape_cast %201 : vector<8x128xf32> to vector<1x8x128xf32>
    tpu.vector_store %arg7[%202, %c0_66, %c0_67], %205 {strides = array<i32>} : memref<8x8x128xf32, #tpu.memory_space<vmem>>, vector<1x8x128xf32>,
    %206 = arith.mulf %193, %145 : vector<8x256xf32>
    %207 = arith.addf %194, %206 : vector<8x256xf32>
    %208 = arith.mulf %193, %147 : vector<8x256xf32>
    %209 = arith.addf %195, %208 : vector<8x256xf32>
    %c3_i32 = arith.constant 3 : i32
    %c7_i32_68 = arith.constant 7 : i32
    %210 = arith.subi %c7_i32_68, %c3_i32 : i32
    %c8_i32_69 = arith.constant 8 : i32
    %211 = arith.muli %c3_i32, %c8_i32_69 : i32
    %212 = tpu.assume_multiple %211, 8 : i32
    %c8_i32_70 = arith.constant 8 : i32
    %213 = arith.muli %210, %c8_i32_70 : i32
    %214 = tpu.assume_multiple %213, 8 : i32
    %215 = arith.index_cast %212 : i32 to index
    %c0_71 = arith.constant 0 : index
    %216 = vector.load %arg10[%215, %c0_71] : memref<64x1024xf32, #tpu.memory_space<vmem>>, vector<8x1024xf32>
    %217 = arith.index_cast %214 : i32 to index
    %c0_72 = arith.constant 0 : index
    %218 = vector.load %arg10[%217, %c0_72] : memref<64x1024xf32, #tpu.memory_space<vmem>>, vector<8x1024xf32>
    %219 = arith.select %21, %216, %218 : vector<8x1024xi1>, vector<8x1024xf32>
    %cst_73 = arith.constant dense<0.000000e+00> : vector<8x1024xf32>
    %220 = tpu.matmul %207, %16, %cst_73 {dimension_numbers = #tpu.dot_dimension_numbers<[1], [0], [0], [1], [0, 0, 1, 1], [], []>} : vector<8x256xf32>, vector<256x1024xf32>, vector<8x1024xf32> -> vector<8x1024xf32>
    %221 = arith.addf %219, %220 : vector<8x1024xf32>
    %222 = vector.extract_strided_slice %221 {offsets = [0, 0], sizes = [8, 256], strides = [1, 1]} : vector<8x1024xf32> to vector<8x256xf32>
    %223 = arith.negf %222 : vector<8x256xf32>
    %224 = math.exp %223 : vector<8x256xf32>
    %cst_74 = arith.constant 1.000000e+00 : f32
    %225 = vector.broadcast %cst_74 : f32 to vector<8x256xf32>
    %226 = arith.addf %225, %224 : vector<8x256xf32>
    %227 = arith.divf %225, %226 : vector<8x256xf32>
    %228 = vector.extract_strided_slice %221 {offsets = [0, 256], sizes = [8, 256], strides = [1, 1]} : vector<8x1024xf32> to vector<8x256xf32>
    %229 = arith.negf %228 : vector<8x256xf32>
    %230 = math.exp %229 : vector<8x256xf32>
    %cst_75 = arith.constant 1.000000e+00 : f32
    %231 = vector.broadcast %cst_75 : f32 to vector<8x256xf32>
    %232 = arith.addf %231, %230 : vector<8x256xf32>
    %233 = arith.divf %231, %232 : vector<8x256xf32>
    %234 = vector.extract_strided_slice %221 {offsets = [0, 512], sizes = [8, 256], strides = [1, 1]} : vector<8x1024xf32> to vector<8x256xf32>
    %235 = math.tanh %234 : vector<8x256xf32>
    %236 = vector.extract_strided_slice %221 {offsets = [0, 768], sizes = [8, 256], strides = [1, 1]} : vector<8x1024xf32> to vector<8x256xf32>
    %237 = arith.negf %236 : vector<8x256xf32>
    %238 = math.exp %237 : vector<8x256xf32>
    %cst_76 = arith.constant 1.000000e+00 : f32
    %239 = vector.broadcast %cst_76 : f32 to vector<8x256xf32>
    %240 = arith.addf %239, %238 : vector<8x256xf32>
    %241 = arith.divf %239, %240 : vector<8x256xf32>
    %242 = arith.mulf %233, %209 : vector<8x256xf32>
    %243 = arith.mulf %227, %235 : vector<8x256xf32>
    %244 = arith.addf %242, %243 : vector<8x256xf32>
    %245 = math.tanh %244 : vector<8x256xf32>
    %246 = arith.mulf %241, %245 : vector<8x256xf32>
    %247 = arith.index_cast %c3_i32 : i32 to index
    %c0_77 = arith.constant 0 : index
    %c0_78 = arith.constant 0 : index
    %248 = vector.load %arg11[%247, %c0_77, %c0_78] : memref<8x8x128xf32, #tpu.memory_space<vmem>>, vector<1x8x128xf32>
    %249 = vector.shape_cast %248 : vector<1x8x128xf32> to vector<8x128xf32>
    %250 = arith.index_cast %210 : i32 to index
    %c0_79 = arith.constant 0 : index
    %c0_80 = arith.constant 0 : index
    %251 = vector.load %arg11[%250, %c0_79, %c0_80] : memref<8x8x128xf32, #tpu.memory_space<vmem>>, vector<1x8x128xf32>
    %252 = vector.shape_cast %251 : vector<1x8x128xf32> to vector<8x128xf32>
    %253 = tpu.concatenate %249, %252 in 1 : vector<8x128xf32>, vector<8x128xf32> -> vector<8x256xf32>
    %cst_81 = arith.constant 1.000000e+00 : f32
    %254 = vector.broadcast %cst_81 : f32 to vector<8x256xf32>
    %255 = arith.subf %254, %253 : vector<8x256xf32>
    %256 = arith.mulf %253, %246 : vector<8x256xf32>
    %257 = arith.mulf %253, %244 : vector<8x256xf32>
    %258 = vector.extract_strided_slice %256 {offsets = [0, 0], sizes = [8, 128], strides = [1, 1]} : vector<8x256xf32> to vector<8x128xf32>
    %259 = arith.index_cast %c3_i32 : i32 to index
    %c0_82 = arith.constant 0 : index
    %c0_83 = arith.constant 0 : index
    %260 = vector.load %arg6[%259, %c0_82, %c0_83] : memref<8x8x128xf32, #tpu.memory_space<vmem>>, vector<1x8x128xf32>
    %261 = vector.shape_cast %260 : vector<1x8x128xf32> to vector<8x128xf32>
    %262 = vector.shape_cast %258 : vector<8x128xf32> to vector<1x8x128xf32>
    tpu.vector_store %arg6[%259, %c0_82, %c0_83], %262 {strides = array<i32>} : memref<8x8x128xf32, #tpu.memory_space<vmem>>, vector<1x8x128xf32>,
    %263 = vector.extract_strided_slice %256 {offsets = [0, 128], sizes = [8, 128], strides = [1, 1]} : vector<8x256xf32> to vector<8x128xf32>
    %264 = arith.index_cast %210 : i32 to index
    %c0_84 = arith.constant 0 : index
    %c0_85 = arith.constant 0 : index
    %265 = vector.load %arg7[%264, %c0_84, %c0_85] : memref<8x8x128xf32, #tpu.memory_space<vmem>>, vector<1x8x128xf32>
    %266 = vector.shape_cast %265 : vector<1x8x128xf32> to vector<8x128xf32>
    %267 = vector.shape_cast %263 : vector<8x128xf32> to vector<1x8x128xf32>
    tpu.vector_store %arg7[%264, %c0_84, %c0_85], %267 {strides = array<i32>} : memref<8x8x128xf32, #tpu.memory_space<vmem>>, vector<1x8x128xf32>,
    %268 = arith.mulf %255, %207 : vector<8x256xf32>
    %269 = arith.addf %256, %268 : vector<8x256xf32>
    %270 = arith.mulf %255, %209 : vector<8x256xf32>
    %271 = arith.addf %257, %270 : vector<8x256xf32>
    %c4_i32 = arith.constant 4 : i32
    %c7_i32_86 = arith.constant 7 : i32
    %272 = arith.subi %c7_i32_86, %c4_i32 : i32
    %c8_i32_87 = arith.constant 8 : i32
    %273 = arith.muli %c4_i32, %c8_i32_87 : i32
    %274 = tpu.assume_multiple %273, 8 : i32
    %c8_i32_88 = arith.constant 8 : i32
    %275 = arith.muli %272, %c8_i32_88 : i32
    %276 = tpu.assume_multiple %275, 8 : i32
    %277 = arith.index_cast %274 : i32 to index
    %c0_89 = arith.constant 0 : index
    %278 = vector.load %arg10[%277, %c0_89] : memref<64x1024xf32, #tpu.memory_space<vmem>>, vector<8x1024xf32>
    %279 = arith.index_cast %276 : i32 to index
    %c0_90 = arith.constant 0 : index
    %280 = vector.load %arg10[%279, %c0_90] : memref<64x1024xf32, #tpu.memory_space<vmem>>, vector<8x1024xf32>
    %281 = arith.select %21, %278, %280 : vector<8x1024xi1>, vector<8x1024xf32>
    %cst_91 = arith.constant dense<0.000000e+00> : vector<8x1024xf32>
    %282 = tpu.matmul %269, %16, %cst_91 {dimension_numbers = #tpu.dot_dimension_numbers<[1], [0], [0], [1], [0, 0, 1, 1], [], []>} : vector<8x256xf32>, vector<256x1024xf32>, vector<8x1024xf32> -> vector<8x1024xf32>
    %283 = arith.addf %281, %282 : vector<8x1024xf32>
    %284 = vector.extract_strided_slice %283 {offsets = [0, 0], sizes = [8, 256], strides = [1, 1]} : vector<8x1024xf32> to vector<8x256xf32>
    %285 = arith.negf %284 : vector<8x256xf32>
    %286 = math.exp %285 : vector<8x256xf32>
    %cst_92 = arith.constant 1.000000e+00 : f32
    %287 = vector.broadcast %cst_92 : f32 to vector<8x256xf32>
    %288 = arith.addf %287, %286 : vector<8x256xf32>
    %289 = arith.divf %287, %288 : vector<8x256xf32>
    %290 = vector.extract_strided_slice %283 {offsets = [0, 256], sizes = [8, 256], strides = [1, 1]} : vector<8x1024xf32> to vector<8x256xf32>
    %291 = arith.negf %290 : vector<8x256xf32>
    %292 = math.exp %291 : vector<8x256xf32>
    %cst_93 = arith.constant 1.000000e+00 : f32
    %293 = vector.broadcast %cst_93 : f32 to vector<8x256xf32>
    %294 = arith.addf %293, %292 : vector<8x256xf32>
    %295 = arith.divf %293, %294 : vector<8x256xf32>
    %296 = vector.extract_strided_slice %283 {offsets = [0, 512], sizes = [8, 256], strides = [1, 1]} : vector<8x1024xf32> to vector<8x256xf32>
    %297 = math.tanh %296 : vector<8x256xf32>
    %298 = vector.extract_strided_slice %283 {offsets = [0, 768], sizes = [8, 256], strides = [1, 1]} : vector<8x1024xf32> to vector<8x256xf32>
    %299 = arith.negf %298 : vector<8x256xf32>
    %300 = math.exp %299 : vector<8x256xf32>
    %cst_94 = arith.constant 1.000000e+00 : f32
    %301 = vector.broadcast %cst_94 : f32 to vector<8x256xf32>
    %302 = arith.addf %301, %300 : vector<8x256xf32>
    %303 = arith.divf %301, %302 : vector<8x256xf32>
    %304 = arith.mulf %295, %271 : vector<8x256xf32>
    %305 = arith.mulf %289, %297 : vector<8x256xf32>
    %306 = arith.addf %304, %305 : vector<8x256xf32>
    %307 = math.tanh %306 : vector<8x256xf32>
    %308 = arith.mulf %303, %307 : vector<8x256xf32>
    %309 = arith.index_cast %c4_i32 : i32 to index
    %c0_95 = arith.constant 0 : index
    %c0_96 = arith.constant 0 : index
    %310 = vector.load %arg11[%309, %c0_95, %c0_96] : memref<8x8x128xf32, #tpu.memory_space<vmem>>, vector<1x8x128xf32>
    %311 = vector.shape_cast %310 : vector<1x8x128xf32> to vector<8x128xf32>
    %312 = arith.index_cast %272 : i32 to index
    %c0_97 = arith.constant 0 : index
    %c0_98 = arith.constant 0 : index
    %313 = vector.load %arg11[%312, %c0_97, %c0_98] : memref<8x8x128xf32, #tpu.memory_space<vmem>>, vector<1x8x128xf32>
    %314 = vector.shape_cast %313 : vector<1x8x128xf32> to vector<8x128xf32>
    %315 = tpu.concatenate %311, %314 in 1 : vector<8x128xf32>, vector<8x128xf32> -> vector<8x256xf32>
    %cst_99 = arith.constant 1.000000e+00 : f32
    %316 = vector.broadcast %cst_99 : f32 to vector<8x256xf32>
    %317 = arith.subf %316, %315 : vector<8x256xf32>
    %318 = arith.mulf %315, %308 : vector<8x256xf32>
    %319 = arith.mulf %315, %306 : vector<8x256xf32>
    %320 = vector.extract_strided_slice %318 {offsets = [0, 0], sizes = [8, 128], strides = [1, 1]} : vector<8x256xf32> to vector<8x128xf32>
    %321 = arith.index_cast %c4_i32 : i32 to index
    %c0_100 = arith.constant 0 : index
    %c0_101 = arith.constant 0 : index
    %322 = vector.load %arg6[%321, %c0_100, %c0_101] : memref<8x8x128xf32, #tpu.memory_space<vmem>>, vector<1x8x128xf32>
    %323 = vector.shape_cast %322 : vector<1x8x128xf32> to vector<8x128xf32>
    %324 = vector.shape_cast %320 : vector<8x128xf32> to vector<1x8x128xf32>
    tpu.vector_store %arg6[%321, %c0_100, %c0_101], %324 {strides = array<i32>} : memref<8x8x128xf32, #tpu.memory_space<vmem>>, vector<1x8x128xf32>,
    %325 = vector.extract_strided_slice %318 {offsets = [0, 128], sizes = [8, 128], strides = [1, 1]} : vector<8x256xf32> to vector<8x128xf32>
    %326 = arith.index_cast %272 : i32 to index
    %c0_102 = arith.constant 0 : index
    %c0_103 = arith.constant 0 : index
    %327 = vector.load %arg7[%326, %c0_102, %c0_103] : memref<8x8x128xf32, #tpu.memory_space<vmem>>, vector<1x8x128xf32>
    %328 = vector.shape_cast %327 : vector<1x8x128xf32> to vector<8x128xf32>
    %329 = vector.shape_cast %325 : vector<8x128xf32> to vector<1x8x128xf32>
    tpu.vector_store %arg7[%326, %c0_102, %c0_103], %329 {strides = array<i32>} : memref<8x8x128xf32, #tpu.memory_space<vmem>>, vector<1x8x128xf32>,
    %330 = arith.mulf %317, %269 : vector<8x256xf32>
    %331 = arith.addf %318, %330 : vector<8x256xf32>
    %332 = arith.mulf %317, %271 : vector<8x256xf32>
    %333 = arith.addf %319, %332 : vector<8x256xf32>
    %c5_i32 = arith.constant 5 : i32
    %c7_i32_104 = arith.constant 7 : i32
    %334 = arith.subi %c7_i32_104, %c5_i32 : i32
    %c8_i32_105 = arith.constant 8 : i32
    %335 = arith.muli %c5_i32, %c8_i32_105 : i32
    %336 = tpu.assume_multiple %335, 8 : i32
    %c8_i32_106 = arith.constant 8 : i32
    %337 = arith.muli %334, %c8_i32_106 : i32
    %338 = tpu.assume_multiple %337, 8 : i32
    %339 = arith.index_cast %336 : i32 to index
    %c0_107 = arith.constant 0 : index
    %340 = vector.load %arg10[%339, %c0_107] : memref<64x1024xf32, #tpu.memory_space<vmem>>, vector<8x1024xf32>
    %341 = arith.index_cast %338 : i32 to index
    %c0_108 = arith.constant 0 : index
    %342 = vector.load %arg10[%341, %c0_108] : memref<64x1024xf32, #tpu.memory_space<vmem>>, vector<8x1024xf32>
    %343 = arith.select %21, %340, %342 : vector<8x1024xi1>, vector<8x1024xf32>
    %cst_109 = arith.constant dense<0.000000e+00> : vector<8x1024xf32>
    %344 = tpu.matmul %331, %16, %cst_109 {dimension_numbers = #tpu.dot_dimension_numbers<[1], [0], [0], [1], [0, 0, 1, 1], [], []>} : vector<8x256xf32>, vector<256x1024xf32>, vector<8x1024xf32> -> vector<8x1024xf32>
    %345 = arith.addf %343, %344 : vector<8x1024xf32>
    %346 = vector.extract_strided_slice %345 {offsets = [0, 0], sizes = [8, 256], strides = [1, 1]} : vector<8x1024xf32> to vector<8x256xf32>
    %347 = arith.negf %346 : vector<8x256xf32>
    %348 = math.exp %347 : vector<8x256xf32>
    %cst_110 = arith.constant 1.000000e+00 : f32
    %349 = vector.broadcast %cst_110 : f32 to vector<8x256xf32>
    %350 = arith.addf %349, %348 : vector<8x256xf32>
    %351 = arith.divf %349, %350 : vector<8x256xf32>
    %352 = vector.extract_strided_slice %345 {offsets = [0, 256], sizes = [8, 256], strides = [1, 1]} : vector<8x1024xf32> to vector<8x256xf32>
    %353 = arith.negf %352 : vector<8x256xf32>
    %354 = math.exp %353 : vector<8x256xf32>
    %cst_111 = arith.constant 1.000000e+00 : f32
    %355 = vector.broadcast %cst_111 : f32 to vector<8x256xf32>
    %356 = arith.addf %355, %354 : vector<8x256xf32>
    %357 = arith.divf %355, %356 : vector<8x256xf32>
    %358 = vector.extract_strided_slice %345 {offsets = [0, 512], sizes = [8, 256], strides = [1, 1]} : vector<8x1024xf32> to vector<8x256xf32>
    %359 = math.tanh %358 : vector<8x256xf32>
    %360 = vector.extract_strided_slice %345 {offsets = [0, 768], sizes = [8, 256], strides = [1, 1]} : vector<8x1024xf32> to vector<8x256xf32>
    %361 = arith.negf %360 : vector<8x256xf32>
    %362 = math.exp %361 : vector<8x256xf32>
    %cst_112 = arith.constant 1.000000e+00 : f32
    %363 = vector.broadcast %cst_112 : f32 to vector<8x256xf32>
    %364 = arith.addf %363, %362 : vector<8x256xf32>
    %365 = arith.divf %363, %364 : vector<8x256xf32>
    %366 = arith.mulf %357, %333 : vector<8x256xf32>
    %367 = arith.mulf %351, %359 : vector<8x256xf32>
    %368 = arith.addf %366, %367 : vector<8x256xf32>
    %369 = math.tanh %368 : vector<8x256xf32>
    %370 = arith.mulf %365, %369 : vector<8x256xf32>
    %371 = arith.index_cast %c5_i32 : i32 to index
    %c0_113 = arith.constant 0 : index
    %c0_114 = arith.constant 0 : index
    %372 = vector.load %arg11[%371, %c0_113, %c0_114] : memref<8x8x128xf32, #tpu.memory_space<vmem>>, vector<1x8x128xf32>
    %373 = vector.shape_cast %372 : vector<1x8x128xf32> to vector<8x128xf32>
    %374 = arith.index_cast %334 : i32 to index
    %c0_115 = arith.constant 0 : index
    %c0_116 = arith.constant 0 : index
    %375 = vector.load %arg11[%374, %c0_115, %c0_116] : memref<8x8x128xf32, #tpu.memory_space<vmem>>, vector<1x8x128xf32>
    %376 = vector.shape_cast %375 : vector<1x8x128xf32> to vector<8x128xf32>
    %377 = tpu.concatenate %373, %376 in 1 : vector<8x128xf32>, vector<8x128xf32> -> vector<8x256xf32>
    %cst_117 = arith.constant 1.000000e+00 : f32
    %378 = vector.broadcast %cst_117 : f32 to vector<8x256xf32>
    %379 = arith.subf %378, %377 : vector<8x256xf32>
    %380 = arith.mulf %377, %370 : vector<8x256xf32>
    %381 = arith.mulf %377, %368 : vector<8x256xf32>
    %382 = vector.extract_strided_slice %380 {offsets = [0, 0], sizes = [8, 128], strides = [1, 1]} : vector<8x256xf32> to vector<8x128xf32>
    %383 = arith.index_cast %c5_i32 : i32 to index
    %c0_118 = arith.constant 0 : index
    %c0_119 = arith.constant 0 : index
    %384 = vector.load %arg6[%383, %c0_118, %c0_119] : memref<8x8x128xf32, #tpu.memory_space<vmem>>, vector<1x8x128xf32>
    %385 = vector.shape_cast %384 : vector<1x8x128xf32> to vector<8x128xf32>
    %386 = vector.shape_cast %382 : vector<8x128xf32> to vector<1x8x128xf32>
    tpu.vector_store %arg6[%383, %c0_118, %c0_119], %386 {strides = array<i32>} : memref<8x8x128xf32, #tpu.memory_space<vmem>>, vector<1x8x128xf32>,
    %387 = vector.extract_strided_slice %380 {offsets = [0, 128], sizes = [8, 128], strides = [1, 1]} : vector<8x256xf32> to vector<8x128xf32>
    %388 = arith.index_cast %334 : i32 to index
    %c0_120 = arith.constant 0 : index
    %c0_121 = arith.constant 0 : index
    %389 = vector.load %arg7[%388, %c0_120, %c0_121] : memref<8x8x128xf32, #tpu.memory_space<vmem>>, vector<1x8x128xf32>
    %390 = vector.shape_cast %389 : vector<1x8x128xf32> to vector<8x128xf32>
    %391 = vector.shape_cast %387 : vector<8x128xf32> to vector<1x8x128xf32>
    tpu.vector_store %arg7[%388, %c0_120, %c0_121], %391 {strides = array<i32>} : memref<8x8x128xf32, #tpu.memory_space<vmem>>, vector<1x8x128xf32>,
    %392 = arith.mulf %379, %331 : vector<8x256xf32>
    %393 = arith.addf %380, %392 : vector<8x256xf32>
    %394 = arith.mulf %379, %333 : vector<8x256xf32>
    %395 = arith.addf %381, %394 : vector<8x256xf32>
    %c6_i32 = arith.constant 6 : i32
    %c7_i32_122 = arith.constant 7 : i32
    %396 = arith.subi %c7_i32_122, %c6_i32 : i32
    %c8_i32_123 = arith.constant 8 : i32
    %397 = arith.muli %c6_i32, %c8_i32_123 : i32
    %398 = tpu.assume_multiple %397, 8 : i32
    %c8_i32_124 = arith.constant 8 : i32
    %399 = arith.muli %396, %c8_i32_124 : i32
    %400 = tpu.assume_multiple %399, 8 : i32
    %401 = arith.index_cast %398 : i32 to index
    %c0_125 = arith.constant 0 : index
    %402 = vector.load %arg10[%401, %c0_125] : memref<64x1024xf32, #tpu.memory_space<vmem>>, vector<8x1024xf32>
    %403 = arith.index_cast %400 : i32 to index
    %c0_126 = arith.constant 0 : index
    %404 = vector.load %arg10[%403, %c0_126] : memref<64x1024xf32, #tpu.memory_space<vmem>>, vector<8x1024xf32>
    %405 = arith.select %21, %402, %404 : vector<8x1024xi1>, vector<8x1024xf32>
    %cst_127 = arith.constant dense<0.000000e+00> : vector<8x1024xf32>
    %406 = tpu.matmul %393, %16, %cst_127 {dimension_numbers = #tpu.dot_dimension_numbers<[1], [0], [0], [1], [0, 0, 1, 1], [], []>} : vector<8x256xf32>, vector<256x1024xf32>, vector<8x1024xf32> -> vector<8x1024xf32>
    %407 = arith.addf %405, %406 : vector<8x1024xf32>
    %408 = vector.extract_strided_slice %407 {offsets = [0, 0], sizes = [8, 256], strides = [1, 1]} : vector<8x1024xf32> to vector<8x256xf32>
    %409 = arith.negf %408 : vector<8x256xf32>
    %410 = math.exp %409 : vector<8x256xf32>
    %cst_128 = arith.constant 1.000000e+00 : f32
    %411 = vector.broadcast %cst_128 : f32 to vector<8x256xf32>
    %412 = arith.addf %411, %410 : vector<8x256xf32>
    %413 = arith.divf %411, %412 : vector<8x256xf32>
    %414 = vector.extract_strided_slice %407 {offsets = [0, 256], sizes = [8, 256], strides = [1, 1]} : vector<8x1024xf32> to vector<8x256xf32>
    %415 = arith.negf %414 : vector<8x256xf32>
    %416 = math.exp %415 : vector<8x256xf32>
    %cst_129 = arith.constant 1.000000e+00 : f32
    %417 = vector.broadcast %cst_129 : f32 to vector<8x256xf32>
    %418 = arith.addf %417, %416 : vector<8x256xf32>
    %419 = arith.divf %417, %418 : vector<8x256xf32>
    %420 = vector.extract_strided_slice %407 {offsets = [0, 512], sizes = [8, 256], strides = [1, 1]} : vector<8x1024xf32> to vector<8x256xf32>
    %421 = math.tanh %420 : vector<8x256xf32>
    %422 = vector.extract_strided_slice %407 {offsets = [0, 768], sizes = [8, 256], strides = [1, 1]} : vector<8x1024xf32> to vector<8x256xf32>
    %423 = arith.negf %422 : vector<8x256xf32>
    %424 = math.exp %423 : vector<8x256xf32>
    %cst_130 = arith.constant 1.000000e+00 : f32
    %425 = vector.broadcast %cst_130 : f32 to vector<8x256xf32>
    %426 = arith.addf %425, %424 : vector<8x256xf32>
    %427 = arith.divf %425, %426 : vector<8x256xf32>
    %428 = arith.mulf %419, %395 : vector<8x256xf32>
    %429 = arith.mulf %413, %421 : vector<8x256xf32>
    %430 = arith.addf %428, %429 : vector<8x256xf32>
    %431 = math.tanh %430 : vector<8x256xf32>
    %432 = arith.mulf %427, %431 : vector<8x256xf32>
    %433 = arith.index_cast %c6_i32 : i32 to index
    %c0_131 = arith.constant 0 : index
    %c0_132 = arith.constant 0 : index
    %434 = vector.load %arg11[%433, %c0_131, %c0_132] : memref<8x8x128xf32, #tpu.memory_space<vmem>>, vector<1x8x128xf32>
    %435 = vector.shape_cast %434 : vector<1x8x128xf32> to vector<8x128xf32>
    %436 = arith.index_cast %396 : i32 to index
    %c0_133 = arith.constant 0 : index
    %c0_134 = arith.constant 0 : index
    %437 = vector.load %arg11[%436, %c0_133, %c0_134] : memref<8x8x128xf32, #tpu.memory_space<vmem>>, vector<1x8x128xf32>
    %438 = vector.shape_cast %437 : vector<1x8x128xf32> to vector<8x128xf32>
    %439 = tpu.concatenate %435, %438 in 1 : vector<8x128xf32>, vector<8x128xf32> -> vector<8x256xf32>
    %cst_135 = arith.constant 1.000000e+00 : f32
    %440 = vector.broadcast %cst_135 : f32 to vector<8x256xf32>
    %441 = arith.subf %440, %439 : vector<8x256xf32>
    %442 = arith.mulf %439, %432 : vector<8x256xf32>
    %443 = arith.mulf %439, %430 : vector<8x256xf32>
    %444 = vector.extract_strided_slice %442 {offsets = [0, 0], sizes = [8, 128], strides = [1, 1]} : vector<8x256xf32> to vector<8x128xf32>
    %445 = arith.index_cast %c6_i32 : i32 to index
    %c0_136 = arith.constant 0 : index
    %c0_137 = arith.constant 0 : index
    %446 = vector.load %arg6[%445, %c0_136, %c0_137] : memref<8x8x128xf32, #tpu.memory_space<vmem>>, vector<1x8x128xf32>
    %447 = vector.shape_cast %446 : vector<1x8x128xf32> to vector<8x128xf32>
    %448 = vector.shape_cast %444 : vector<8x128xf32> to vector<1x8x128xf32>
    tpu.vector_store %arg6[%445, %c0_136, %c0_137], %448 {strides = array<i32>} : memref<8x8x128xf32, #tpu.memory_space<vmem>>, vector<1x8x128xf32>,
    %449 = vector.extract_strided_slice %442 {offsets = [0, 128], sizes = [8, 128], strides = [1, 1]} : vector<8x256xf32> to vector<8x128xf32>
    %450 = arith.index_cast %396 : i32 to index
    %c0_138 = arith.constant 0 : index
    %c0_139 = arith.constant 0 : index
    %451 = vector.load %arg7[%450, %c0_138, %c0_139] : memref<8x8x128xf32, #tpu.memory_space<vmem>>, vector<1x8x128xf32>
    %452 = vector.shape_cast %451 : vector<1x8x128xf32> to vector<8x128xf32>
    %453 = vector.shape_cast %449 : vector<8x128xf32> to vector<1x8x128xf32>
    tpu.vector_store %arg7[%450, %c0_138, %c0_139], %453 {strides = array<i32>} : memref<8x8x128xf32, #tpu.memory_space<vmem>>, vector<1x8x128xf32>,
    %454 = arith.mulf %441, %393 : vector<8x256xf32>
    %455 = arith.addf %442, %454 : vector<8x256xf32>
    %456 = arith.mulf %441, %395 : vector<8x256xf32>
    %457 = arith.addf %443, %456 : vector<8x256xf32>
    %c7_i32_140 = arith.constant 7 : i32
    %c7_i32_141 = arith.constant 7 : i32
    %458 = arith.subi %c7_i32_141, %c7_i32_140 : i32
    %c8_i32_142 = arith.constant 8 : i32
    %459 = arith.muli %c7_i32_140, %c8_i32_142 : i32
    %460 = tpu.assume_multiple %459, 8 : i32
    %c8_i32_143 = arith.constant 8 : i32
    %461 = arith.muli %458, %c8_i32_143 : i32
    %462 = tpu.assume_multiple %461, 8 : i32
    %463 = arith.index_cast %460 : i32 to index
    %c0_144 = arith.constant 0 : index
    %464 = vector.load %arg10[%463, %c0_144] : memref<64x1024xf32, #tpu.memory_space<vmem>>, vector<8x1024xf32>
    %465 = arith.index_cast %462 : i32 to index
    %c0_145 = arith.constant 0 : index
    %466 = vector.load %arg10[%465, %c0_145] : memref<64x1024xf32, #tpu.memory_space<vmem>>, vector<8x1024xf32>
    %467 = arith.select %21, %464, %466 : vector<8x1024xi1>, vector<8x1024xf32>
    %cst_146 = arith.constant dense<0.000000e+00> : vector<8x1024xf32>
    %468 = tpu.matmul %455, %16, %cst_146 {dimension_numbers = #tpu.dot_dimension_numbers<[1], [0], [0], [1], [0, 0, 1, 1], [], []>} : vector<8x256xf32>, vector<256x1024xf32>, vector<8x1024xf32> -> vector<8x1024xf32>
    %469 = arith.addf %467, %468 : vector<8x1024xf32>
    %470 = vector.extract_strided_slice %469 {offsets = [0, 0], sizes = [8, 256], strides = [1, 1]} : vector<8x1024xf32> to vector<8x256xf32>
    %471 = arith.negf %470 : vector<8x256xf32>
    %472 = math.exp %471 : vector<8x256xf32>
    %cst_147 = arith.constant 1.000000e+00 : f32
    %473 = vector.broadcast %cst_147 : f32 to vector<8x256xf32>
    %474 = arith.addf %473, %472 : vector<8x256xf32>
    %475 = arith.divf %473, %474 : vector<8x256xf32>
    %476 = vector.extract_strided_slice %469 {offsets = [0, 256], sizes = [8, 256], strides = [1, 1]} : vector<8x1024xf32> to vector<8x256xf32>
    %477 = arith.negf %476 : vector<8x256xf32>
    %478 = math.exp %477 : vector<8x256xf32>
    %cst_148 = arith.constant 1.000000e+00 : f32
    %479 = vector.broadcast %cst_148 : f32 to vector<8x256xf32>
    %480 = arith.addf %479, %478 : vector<8x256xf32>
    %481 = arith.divf %479, %480 : vector<8x256xf32>
    %482 = vector.extract_strided_slice %469 {offsets = [0, 512], sizes = [8, 256], strides = [1, 1]} : vector<8x1024xf32> to vector<8x256xf32>
    %483 = math.tanh %482 : vector<8x256xf32>
    %484 = vector.extract_strided_slice %469 {offsets = [0, 768], sizes = [8, 256], strides = [1, 1]} : vector<8x1024xf32> to vector<8x256xf32>
    %485 = arith.negf %484 : vector<8x256xf32>
    %486 = math.exp %485 : vector<8x256xf32>
    %cst_149 = arith.constant 1.000000e+00 : f32
    %487 = vector.broadcast %cst_149 : f32 to vector<8x256xf32>
    %488 = arith.addf %487, %486 : vector<8x256xf32>
    %489 = arith.divf %487, %488 : vector<8x256xf32>
    %490 = arith.mulf %481, %457 : vector<8x256xf32>
    %491 = arith.mulf %475, %483 : vector<8x256xf32>
    %492 = arith.addf %490, %491 : vector<8x256xf32>
    %493 = math.tanh %492 : vector<8x256xf32>
    %494 = arith.mulf %489, %493 : vector<8x256xf32>
    %495 = arith.index_cast %c7_i32_140 : i32 to index
    %c0_150 = arith.constant 0 : index
    %c0_151 = arith.constant 0 : index
    %496 = vector.load %arg11[%495, %c0_150, %c0_151] : memref<8x8x128xf32, #tpu.memory_space<vmem>>, vector<1x8x128xf32>
    %497 = vector.shape_cast %496 : vector<1x8x128xf32> to vector<8x128xf32>
    %498 = arith.index_cast %458 : i32 to index
    %c0_152 = arith.constant 0 : index
    %c0_153 = arith.constant 0 : index
    %499 = vector.load %arg11[%498, %c0_152, %c0_153] : memref<8x8x128xf32, #tpu.memory_space<vmem>>, vector<1x8x128xf32>
    %500 = vector.shape_cast %499 : vector<1x8x128xf32> to vector<8x128xf32>
    %501 = tpu.concatenate %497, %500 in 1 : vector<8x128xf32>, vector<8x128xf32> -> vector<8x256xf32>
    %cst_154 = arith.constant 1.000000e+00 : f32
    %502 = vector.broadcast %cst_154 : f32 to vector<8x256xf32>
    %503 = arith.subf %502, %501 : vector<8x256xf32>
    %504 = arith.mulf %501, %494 : vector<8x256xf32>
    %505 = arith.mulf %501, %492 : vector<8x256xf32>
    %506 = vector.extract_strided_slice %504 {offsets = [0, 0], sizes = [8, 128], strides = [1, 1]} : vector<8x256xf32> to vector<8x128xf32>
    %507 = arith.index_cast %c7_i32_140 : i32 to index
    %c0_155 = arith.constant 0 : index
    %c0_156 = arith.constant 0 : index
    %508 = vector.load %arg6[%507, %c0_155, %c0_156] : memref<8x8x128xf32, #tpu.memory_space<vmem>>, vector<1x8x128xf32>
    %509 = vector.shape_cast %508 : vector<1x8x128xf32> to vector<8x128xf32>
    %510 = vector.shape_cast %506 : vector<8x128xf32> to vector<1x8x128xf32>
    tpu.vector_store %arg6[%507, %c0_155, %c0_156], %510 {strides = array<i32>} : memref<8x8x128xf32, #tpu.memory_space<vmem>>, vector<1x8x128xf32>,
    %511 = vector.extract_strided_slice %504 {offsets = [0, 128], sizes = [8, 128], strides = [1, 1]} : vector<8x256xf32> to vector<8x128xf32>
    %512 = arith.index_cast %458 : i32 to index
    %c0_157 = arith.constant 0 : index
    %c0_158 = arith.constant 0 : index
    %513 = vector.load %arg7[%512, %c0_157, %c0_158] : memref<8x8x128xf32, #tpu.memory_space<vmem>>, vector<1x8x128xf32>
    %514 = vector.shape_cast %513 : vector<1x8x128xf32> to vector<8x128xf32>
    %515 = vector.shape_cast %511 : vector<8x128xf32> to vector<1x8x128xf32>
    tpu.vector_store %arg7[%512, %c0_157, %c0_158], %515 {strides = array<i32>} : memref<8x8x128xf32, #tpu.memory_space<vmem>>, vector<1x8x128xf32>,
    %516 = arith.mulf %503, %455 : vector<8x256xf32>
    %517 = arith.addf %504, %516 : vector<8x256xf32>
    %518 = arith.mulf %503, %457 : vector<8x256xf32>
    %519 = arith.addf %505, %518 : vector<8x256xf32>
    %c8_i32_159 = arith.constant 8 : i32
    %c0_160 = arith.constant 0 : index
    %c0_161 = arith.constant 0 : index
    %520 = vector.load %arg8[%c0_160, %c0_161] : memref<8x256xf32, #tpu.memory_space<vmem>>, vector<8x256xf32>
    tpu.vector_store %arg8[%c0_160, %c0_161], %517 {strides = array<i32>} : memref<8x256xf32, #tpu.memory_space<vmem>>, vector<8x256xf32>,
    %c0_162 = arith.constant 0 : index
    %c0_163 = arith.constant 0 : index
    %521 = vector.load %arg9[%c0_162, %c0_163] : memref<8x256xf32, #tpu.memory_space<vmem>>, vector<8x256xf32>
    tpu.vector_store %arg9[%c0_162, %c0_163], %519 {strides = array<i32>} : memref<8x256xf32, #tpu.memory_space<vmem>>, vector<8x256xf32>,
    return
  }
  func.func @transform_0(%arg0: i32) -> (i32, i32) {
    %c0_i32 = arith.constant 0 : i32
    %c0_i32_0 = arith.constant 0 : i32
    %c0_i32_1 = arith.constant 0 : i32
    return %c0_i32, %c0_i32_0 : i32, i32
  }
  func.func @transform_1(%arg0: i32) -> (i32, i32) {
    %c0_i32 = arith.constant 0 : i32
    %c0_i32_0 = arith.constant 0 : i32
    %c0_i32_1 = arith.constant 0 : i32
    return %c0_i32, %c0_i32_0 : i32, i32
  }
  func.func @transform_2(%arg0: i32) -> (i32, i32) {
    %c0_i32 = arith.constant 0 : i32
    %c0_i32_0 = arith.constant 0 : i32
    %c0_i32_1 = arith.constant 0 : i32
    return %c0_i32, %c0_i32_0 : i32, i32
  }
  func.func @transform_3(%arg0: i32) -> (i32, i32) {
    %c0_i32 = arith.constant 0 : i32
    %c0_i32_0 = arith.constant 0 : i32
    %c0_i32_1 = arith.constant 0 : i32
    return %c0_i32, %c0_i32_0 : i32, i32
  }
  func.func @transform_4(%arg0: i32) -> (i32, i32) {
    %c0_i32 = arith.constant 0 : i32
    %c0_i32_0 = arith.constant 0 : i32
    %c0_i32_1 = arith.constant 0 : i32
    return %c0_i32, %c0_i32_0 : i32, i32
  }
  func.func @transform_5(%arg0: i32) -> (i32, i32, i32) {
    %c0_i32 = arith.constant 0 : i32
    %c0_i32_0 = arith.constant 0 : i32
    %c0_i32_1 = arith.constant 0 : i32
    %c0_i32_2 = arith.constant 0 : i32
    return %c0_i32, %c0_i32_0, %c0_i32_1 : i32, i32, i32
  }
  func.func @transform_6(%arg0: i32) -> (i32, i32, i32) {
    %c0_i32 = arith.constant 0 : i32
    %c0_i32_0 = arith.constant 0 : i32
    %c0_i32_1 = arith.constant 0 : i32
    %c0_i32_2 = arith.constant 0 : i32
    return %c0_i32, %c0_i32_0, %c0_i32_1 : i32, i32, i32
  }
  func.func @transform_7(%arg0: i32) -> (i32, i32) {
    %c0_i32 = arith.constant 0 : i32
    %c0_i32_0 = arith.constant 0 : i32
    %c0_i32_1 = arith.constant 0 : i32
    return %c0_i32, %c0_i32_0 : i32, i32
  }
  func.func @transform_8(%arg0: i32) -> (i32, i32) {
    %c0_i32 = arith.constant 0 : i32
    %c0_i32_0 = arith.constant 0 : i32
    %c0_i32_1 = arith.constant 0 : i32
    return %c0_i32, %c0_i32_0 : i32, i32
  }
}

</mosaic_0001>

<llo_original>
// kernel: tpu_custom_call.1
$region0: #{tpu_custom_call.1}
  #allocation0 [shape = 'u32[]', space=smem, size = 0x4, offset = 0x4, fixed_abs, tag = 'smem constant byte address 0x4 - core index']
  #allocation1 [shape = 'u32[72,128]{1,0:T(1,128)}', space=vmem, size = 0x9000, scoped, tag = 'internal scratch']
  #allocation2 [shape = 'f32[64,1024]{1,0:T(8,128)}', space=vmem, size = 0x40000, scoped, tag = 'scratch operand']
  #allocation3 [shape = 'f32[8,8,128]{2,1,0:T(8,128)}', space=vmem, size = 0x8000, scoped, tag = 'scratch operand']
  %s0 = inlined_call_operand.vmem [shape: f32[64,32], index: 0, kind: input, shape index: {}]
  %s1 = inlined_call_operand.vmem [shape: s32[8,1], index: 1, kind: input, shape index: {}]
  %s2 = inlined_call_operand.hbm [shape: bf16[32,1024], index: 2, kind: input, shape index: {}]
  %s3 = inlined_call_operand.hbm [shape: f32[256,1024], index: 3, kind: input, shape index: {}]
  %s4 = inlined_call_operand.vmem [shape: f32[1,1024], index: 4, kind: input, shape index: {}]
  %s5 = inlined_call_operand.hbm [shape: f32[8,8,128], index: 5, kind: output, shape index: {0}]
  %s6 = inlined_call_operand.hbm [shape: f32[8,8,128], index: 6, kind: output, shape index: {1}]
  %s7 = inlined_call_operand.hbm [shape: f32[8,256], index: 7, kind: output, shape index: {2}]
  %s8 = inlined_call_operand.hbm [shape: f32[8,256], index: 8, kind: output, shape index: {3}]
  %9 = xla_tuple %s5, %s6, %s7, %s8
  %s10 = sld [smem:[#allocation0]]
  $region62: #{tpu_custom_call.1} parent=0
    _
  %s12 = ssub.s32 1, %s10
  %s13 = scalar_select 0, %s12, %s10
  $region1: #{tpu_custom_call.1} parent=0
    #allocation4 [shape = 'u8[65536]{0}', space=vmem, size = 0x10000, scoped, tag = 'input window, operand 2, single buffered']
    #allocation5 [shape = 's32[1]{0}', space=sflag, size = 0x4, scoped, tag = 'scoped memory for tpu_custom_call.1']
    #allocation6 [shape = 's32[1]{0}', space=sflag, size = 0x4, scoped, tag = 'scoped memory for tpu_custom_call.1']
    #allocation7 [shape = 'u8[1048576]{0}', space=vmem, size = 0x100000, scoped, tag = 'input window, operand 3, single buffered']
    #allocation8 [shape = 's32[1]{0}', space=sflag, size = 0x4, scoped, tag = 'scoped memory for tpu_custom_call.1']
    #allocation9 [shape = 'u8[32768]{0}', space=vmem, size = 0x8000, scoped, tag = 'output window, operand 0, single buffered']
    #allocation10 [shape = 'u8[32768]{0}', space=vmem, size = 0x8000, scoped, tag = 'output window, operand 1, single buffered']
    #allocation11 [shape = 's32[1]{0}', space=sflag, size = 0x4, scoped, tag = 'scoped memory for tpu_custom_call.1']
    #allocation12 [shape = 'u8[8192]{0}', space=vmem, size = 0x2000, scoped, tag = 'output window, operand 2, single buffered']
    #allocation13 [shape = 'u8[8192]{0}', space=vmem, size = 0x2000, scoped, tag = 'output window, operand 3, single buffered']
    #allocation14 [shape = 's32[1]{0}', space=sflag, size = 0x4, scoped, tag = 'scoped memory for tpu_custom_call.1']
    %14 = vsyncpa [#allocation5], 0
    %15 = vsyncpa [#allocation8], 0
    %16 = vsyncpa [#allocation6], 0
    %17 = vsyncpa [#allocation11], 0
    %18 = vsyncpa [#allocation14], 0
    // Predicated region
    $region2: #{tpu_custom_call.1} parent=1 // pred_check
      _
    $region3: #{tpu_custom_call.1} parent=1 // pred_check_branch
      %20 = sbr.rel (0) target = $region5
    $region4: #{tpu_custom_call.1} parent=1 // pred_region
      _
    $region5: #{tpu_custom_call.1} parent=1 // pred_fallthru
      _
    // Predicated region
    $region6: #{tpu_custom_call.1} parent=1 // pred_check
      _
    $region7: #{tpu_custom_call.1} parent=1 // pred_check_branch
      %22 = sbr.rel (0) target = $region9
    $region8: #{tpu_custom_call.1} parent=1 // pred_region
      _
    $region9: #{tpu_custom_call.1} parent=1 // pred_fallthru
      _
    // Predicated region
    $region10: #{tpu_custom_call.1} parent=1 // pred_check
      _
    $region11: #{tpu_custom_call.1} parent=1 // pred_check_branch
      %24 = sbr.rel (0) target = $region13
    $region12: #{tpu_custom_call.1} parent=1 // pred_region
      %26 = vsyncadd [#allocation5], 0
      %s27 = sshll.u32 %s2, 4
      %s28 = int_to_ptr.hbm [resolvable:$true] %s27
      %s29 = sshll.u32 [#allocation4], 4
      %s30 = int_to_ptr.vmem [resolvable:$true] %s29
      %35 = dma.hbm_to_vmem [thread:$0]  %s28, 2048, %s30, [#allocation5], 512, 512, 32
    $region13: #{tpu_custom_call.1} parent=1 // pred_fallthru
      _
    // Predicated region
    $region14: #{tpu_custom_call.1} parent=1 // pred_check
      _
    $region15: #{tpu_custom_call.1} parent=1 // pred_check_branch
      %37 = sbr.rel (0) target = $region17
    $region16: #{tpu_custom_call.1} parent=1 // pred_region
      %39 = vsyncadd [#allocation8], 0
      %s40 = sshll.u32 %s3, 4
      %s41 = int_to_ptr.hbm [resolvable:$true] %s40
      %s42 = sshll.u32 [#allocation7], 4
      %s43 = int_to_ptr.vmem [resolvable:$true] %s42
      %48 = dma.hbm_to_vmem [thread:$0]  %s41, 32768, %s43, [#allocation8], 1024, 1024, 64
    $region17: #{tpu_custom_call.1} parent=1 // pred_fallthru
      _
    // Predicated region
    $region18: #{tpu_custom_call.1} parent=1 // pred_check
      _
    $region19: #{tpu_custom_call.1} parent=1 // pred_check_branch
      %50 = sbr.rel (0) target = $region21
    $region20: #{tpu_custom_call.1} parent=1 // pred_region
      _
    $region21: #{tpu_custom_call.1} parent=1 // pred_fallthru
      _
    // Predicated region
    $region22: #{tpu_custom_call.1} parent=1 // pred_check
      _
    $region23: #{tpu_custom_call.1} parent=1 // pred_check_branch
      %52 = sbr.rel (0) target = $region25
    $region24: #{tpu_custom_call.1} parent=1 // pred_region
      %54 = dma.done [#allocation5], 2048
    $region25: #{tpu_custom_call.1} parent=1 // pred_fallthru
      _
    // Predicated region
    $region26: #{tpu_custom_call.1} parent=1 // pred_check
      _
    $region27: #{tpu_custom_call.1} parent=1 // pred_check_branch
      %56 = sbr.rel (0) target = $region29
    $region28: #{tpu_custom_call.1} parent=1 // pred_region
      %58 = dma.done [#allocation8], 32768
    $region29: #{tpu_custom_call.1} parent=1 // pred_fallthru
      _
    %v60 = vld [vmem:[%s0] sm:$0xff]
    %v61 = vld [vmem:[%s0 + $0x8] sm:$0xff]
    %v62 = vld [vmem:[%s0 + $0x10] sm:$0xff]
    %v63 = vld [vmem:[%s0 + $0x18] sm:$0xff]
    %v64 = vld [vmem:[%s0 + $0x20] sm:$0xff]
    %v65 = vld [vmem:[%s0 + $0x28] sm:$0xff]
    %v66 = vld [vmem:[%s0 + $0x30] sm:$0xff]
    %v67 = vld [vmem:[%s0 + $0x38] sm:$0xff]
    %v68 = vpack.c.bf16 %v61, %v60
    %v69 = vpack.c.bf16 %v63, %v62
    %v70 = vpack.c.bf16 %v65, %v64
    %v71 = vpack.c.bf16 %v67, %v66
    %v72 = vld [vmem:[#allocation4] sm:$0xff]
    %v73 = vld [vmem:[#allocation4 + $0x8] sm:$0xff]
    %v74 = vld [vmem:[#allocation4 + $0x10] sm:$0xff]
    %v75 = vld [vmem:[#allocation4 + $0x18] sm:$0xff]
    %v76 = vld [vmem:[#allocation4 + $0x20] sm:$0xff]
    %v77 = vld [vmem:[#allocation4 + $0x28] sm:$0xff]
    %v78 = vld [vmem:[#allocation4 + $0x30] sm:$0xff]
    %v79 = vld [vmem:[#allocation4 + $0x38] sm:$0xff]
    %v80 = vld [vmem:[#allocation4 + $0x40] sm:$0xff]
    %v81 = vld [vmem:[#allocation4 + $0x48] sm:$0xff]
    %v82 = vld [vmem:[#allocation4 + $0x50] sm:$0xff]
    %v83 = vld [vmem:[#allocation4 + $0x58] sm:$0xff]
    %v84 = vld [vmem:[#allocation4 + $0x60] sm:$0xff]
    %v85 = vld [vmem:[#allocation4 + $0x68] sm:$0xff]
    %v86 = vld [vmem:[#allocation4 + $0x70] sm:$0xff]
    %v87 = vld [vmem:[#allocation4 + $0x78] sm:$0xff]
    %v88 = vld [vmem:[%s4] sm:$0xff]
    %v90 = vperm.slane %v88, 0
    %v91 = vperm.slane %v88, 1
    %v92 = vperm.slane %v88, 2
    %v93 = vperm.slane %v88, 3
    %v94 = vperm.slane %v88, 4
    %v95 = vperm.slane %v88, 5
    %v96 = vperm.slane %v88, 6
    %v97 = vperm.slane %v88, 7
    %v122 = vunpack.c.l.b16 %v72
    %v123 = vunpack.c.h.b16 %v72
    %v124 = vunpack.c.l.b16 %v73
    %v125 = vunpack.c.h.b16 %v73
    %v126 = vunpack.c.l.b16 %v74
    %v127 = vunpack.c.h.b16 %v74
    %v128 = vunpack.c.l.b16 %v75
    %v129 = vunpack.c.h.b16 %v75
    %v130 = vunpack.c.l.b16 %v76
    %v131 = vunpack.c.h.b16 %v76
    %v132 = vunpack.c.l.b16 %v77
    %v133 = vunpack.c.h.b16 %v77
    %v134 = vunpack.c.l.b16 %v78
    %v135 = vunpack.c.h.b16 %v78
    %v136 = vunpack.c.l.b16 %v79
    %v137 = vunpack.c.h.b16 %v79
    %v138 = vunpack.c.l.b16 %v80
    %v139 = vunpack.c.h.b16 %v80
    %v140 = vunpack.c.l.b16 %v81
    %v141 = vunpack.c.h.b16 %v81
    %v142 = vunpack.c.l.b16 %v82
    %v143 = vunpack.c.h.b16 %v82
    %v144 = vunpack.c.l.b16 %v83
    %v145 = vunpack.c.h.b16 %v83
    %v146 = vunpack.c.l.b16 %v84
    %v147 = vunpack.c.h.b16 %v84
    %v148 = vunpack.c.l.b16 %v85
    %v149 = vunpack.c.h.b16 %v85
    %v150 = vunpack.c.l.b16 %v86
    %v151 = vunpack.c.h.b16 %v86
    %v152 = vunpack.c.l.b16 %v87
    %v153 = vunpack.c.h.b16 %v87
    %v154 = vpack.c.b16 %v130, %v122
    %v155 = vpack.c.b16 %v131, %v123
    %v156 = vpack.c.b16 %v132, %v124
    %v157 = vpack.c.b16 %v133, %v125
    %v158 = vpack.c.b16 %v134, %v126
    %v159 = vpack.c.b16 %v135, %v127
    %v160 = vpack.c.b16 %v136, %v128
    %v161 = vpack.c.b16 %v137, %v129
    %v162 = vpack.c.b16 %v146, %v138
    %v163 = vpack.c.b16 %v147, %v139
    %v164 = vpack.c.b16 %v148, %v140
    %v165 = vpack.c.b16 %v149, %v141
    %v166 = vpack.c.b16 %v150, %v142
    %v167 = vpack.c.b16 %v151, %v143
    %v168 = vpack.c.b16 %v152, %v144
    %v169 = vpack.c.b16 %v153, %v145
    %vm186 = vcmask 261120
    %v188 = vsel %vm186, %v68, 0
    %v191 = vsel %vm186, %v69, 0
    %v194 = vsel %vm186, %v70, 0
    %v197 = vsel %vm186, %v71, 0
    %199 = vmatpush.bf16.msra.mxu0 0
    %200 = vmatpush.bf16.msra.mxu0 0
    %201 = vmatpush.bf16.msra.mxu0 0
    %202 = vmatpush.bf16.msra.mxu0 0
    %203 = vmatpush.bf16.msra.mxu0 0
    %204 = vmatpush.bf16.msra.mxu0 0
    %205 = vmatpush.bf16.msra.mxu0 %v162
    %206 = vmatpush.bf16.msra.mxu0 %v154
    %207 = vmatmul.bf16.gmra.mxu0 %v188
    %v208 = vpop.f32.mrf.mxu0
    %v209 = vadd.f32 %v90, %v208
    %v210 = vpop.f32.mrf.mxu0
    %v211 = vadd.f32 %v90, %v210
    %212 = vmatmul.bf16.gmra.mxu0 %v191
    %v213 = vpop.f32.mrf.mxu0
    %v214 = vadd.f32 %v90, %v213
    %v215 = vpop.f32.mrf.mxu0
    %v216 = vadd.f32 %v90, %v215
    %217 = vmatmul.bf16.gmra.mxu0 %v194
    %v218 = vpop.f32.mrf.mxu0
    %v219 = vadd.f32 %v90, %v218
    %v220 = vpop.f32.mrf.mxu0
    %v221 = vadd.f32 %v90, %v220
    %222 = vmatmul.bf16.gmra.mxu0 %v197
    %v223 = vpop.f32.mrf.mxu0
    %v224 = vadd.f32 %v90, %v223
    %v225 = vpop.f32.mrf.mxu0
    %v226 = vadd.f32 %v90, %v225
    %227 = vdwg.mxu0
    %228 = vmatpush.bf16.msra.mxu0 0
    %229 = vmatpush.bf16.msra.mxu0 0
    %230 = vmatpush.bf16.msra.mxu0 0
    %231 = vmatpush.bf16.msra.mxu0 0
    %232 = vmatpush.bf16.msra.mxu0 0
    %233 = vmatpush.bf16.msra.mxu0 0
    %234 = vmatpush.bf16.msra.mxu0 %v163
    %235 = vmatpush.bf16.msra.mxu0 %v155
    %236 = vmatmul.bf16.gmra.mxu0 %v188
    %v237 = vpop.f32.mrf.mxu0
    %v238 = vadd.f32 %v91, %v237
    %v239 = vpop.f32.mrf.mxu0
    %v240 = vadd.f32 %v91, %v239
    %241 = vmatmul.bf16.gmra.mxu0 %v191
    %v242 = vpop.f32.mrf.mxu0
    %v243 = vadd.f32 %v91, %v242
    %v244 = vpop.f32.mrf.mxu0
    %v245 = vadd.f32 %v91, %v244
    %246 = vmatmul.bf16.gmra.mxu0 %v194
    %v247 = vpop.f32.mrf.mxu0
    %v248 = vadd.f32 %v91, %v247
    %v249 = vpop.f32.mrf.mxu0
    %v250 = vadd.f32 %v91, %v249
    %251 = vmatmul.bf16.gmra.mxu0 %v197
    %v252 = vpop.f32.mrf.mxu0
    %v253 = vadd.f32 %v91, %v252
    %v254 = vpop.f32.mrf.mxu0
    %v255 = vadd.f32 %v91, %v254
    %256 = vdwg.mxu0
    %257 = vmatpush.bf16.msra.mxu0 0
    %258 = vmatpush.bf16.msra.mxu0 0
    %259 = vmatpush.bf16.msra.mxu0 0
    %260 = vmatpush.bf16.msra.mxu0 0
    %261 = vmatpush.bf16.msra.mxu0 0
    %262 = vmatpush.bf16.msra.mxu0 0
    %263 = vmatpush.bf16.msra.mxu0 %v164
    %264 = vmatpush.bf16.msra.mxu0 %v156
    %265 = vmatmul.bf16.gmra.mxu0 %v188
    %v266 = vpop.f32.mrf.mxu0
    %v267 = vadd.f32 %v92, %v266
    %v268 = vpop.f32.mrf.mxu0
    %v269 = vadd.f32 %v92, %v268
    %270 = vmatmul.bf16.gmra.mxu0 %v191
    %v271 = vpop.f32.mrf.mxu0
    %v272 = vadd.f32 %v92, %v271
    %v273 = vpop.f32.mrf.mxu0
    %v274 = vadd.f32 %v92, %v273
    %275 = vmatmul.bf16.gmra.mxu0 %v194
    %v276 = vpop.f32.mrf.mxu0
    %v277 = vadd.f32 %v92, %v276
    %v278 = vpop.f32.mrf.mxu0
    %v279 = vadd.f32 %v92, %v278
    %280 = vmatmul.bf16.gmra.mxu0 %v197
    %v281 = vpop.f32.mrf.mxu0
    %v282 = vadd.f32 %v92, %v281
    %v283 = vpop.f32.mrf.mxu0
    %v284 = vadd.f32 %v92, %v283
    %285 = vdwg.mxu0
    %286 = vmatpush.bf16.msra.mxu0 0
    %287 = vmatpush.bf16.msra.mxu0 0
    %288 = vmatpush.bf16.msra.mxu0 0
    %289 = vmatpush.bf16.msra.mxu0 0
    %290 = vmatpush.bf16.msra.mxu0 0
    %291 = vmatpush.bf16.msra.mxu0 0
    %292 = vmatpush.bf16.msra.mxu0 %v165
    %293 = vmatpush.bf16.msra.mxu0 %v157
    %294 = vmatmul.bf16.gmra.mxu0 %v188
    %v295 = vpop.f32.mrf.mxu0
    %v296 = vadd.f32 %v93, %v295
    %v297 = vpop.f32.mrf.mxu0
    %v298 = vadd.f32 %v93, %v297
    %299 = vmatmul.bf16.gmra.mxu0 %v191
    %v300 = vpop.f32.mrf.mxu0
    %v301 = vadd.f32 %v93, %v300
    %v302 = vpop.f32.mrf.mxu0
    %v303 = vadd.f32 %v93, %v302
    %304 = vmatmul.bf16.gmra.mxu0 %v194
    %v305 = vpop.f32.mrf.mxu0
    %v306 = vadd.f32 %v93, %v305
    %v307 = vpop.f32.mrf.mxu0
    %v308 = vadd.f32 %v93, %v307
    %309 = vmatmul.bf16.gmra.mxu0 %v197
    %v310 = vpop.f32.mrf.mxu0
    %v311 = vadd.f32 %v93, %v310
    %v312 = vpop.f32.mrf.mxu0
    %v313 = vadd.f32 %v93, %v312
    %314 = vdwg.mxu0
    %315 = vmatpush.bf16.msra.mxu0 0
    %316 = vmatpush.bf16.msra.mxu0 0
    %317 = vmatpush.bf16.msra.mxu0 0
    %318 = vmatpush.bf16.msra.mxu0 0
    %319 = vmatpush.bf16.msra.mxu0 0
    %320 = vmatpush.bf16.msra.mxu0 0
    %321 = vmatpush.bf16.msra.mxu0 %v166
    %322 = vmatpush.bf16.msra.mxu0 %v158
    %323 = vmatmul.bf16.gmra.mxu0 %v188
    %v324 = vpop.f32.mrf.mxu0
    %v325 = vadd.f32 %v94, %v324
    %v326 = vpop.f32.mrf.mxu0
    %v327 = vadd.f32 %v94, %v326
    %328 = vmatmul.bf16.gmra.mxu0 %v191
    %v329 = vpop.f32.mrf.mxu0
    %v330 = vadd.f32 %v94, %v329
    %v331 = vpop.f32.mrf.mxu0
    %v332 = vadd.f32 %v94, %v331
    %333 = vmatmul.bf16.gmra.mxu0 %v194
    %v334 = vpop.f32.mrf.mxu0
    %v335 = vadd.f32 %v94, %v334
    %v336 = vpop.f32.mrf.mxu0
    %v337 = vadd.f32 %v94, %v336
    %338 = vmatmul.bf16.gmra.mxu0 %v197
    %v339 = vpop.f32.mrf.mxu0
    %v340 = vadd.f32 %v94, %v339
    %v341 = vpop.f32.mrf.mxu0
    %v342 = vadd.f32 %v94, %v341
    %343 = vdwg.mxu0
    %344 = vmatpush.bf16.msra.mxu0 0
    %345 = vmatpush.bf16.msra.mxu0 0
    %346 = vmatpush.bf16.msra.mxu0 0
    %347 = vmatpush.bf16.msra.mxu0 0
    %348 = vmatpush.bf16.msra.mxu0 0
    %349 = vmatpush.bf16.msra.mxu0 0
    %350 = vmatpush.bf16.msra.mxu0 %v167
    %351 = vmatpush.bf16.msra.mxu0 %v159
    %352 = vmatmul.bf16.gmra.mxu0 %v188
    %v353 = vpop.f32.mrf.mxu0
    %v354 = vadd.f32 %v95, %v353
    %v355 = vpop.f32.mrf.mxu0
    %v356 = vadd.f32 %v95, %v355
    %357 = vmatmul.bf16.gmra.mxu0 %v191
    %v358 = vpop.f32.mrf.mxu0
    %v359 = vadd.f32 %v95, %v358
    %v360 = vpop.f32.mrf.mxu0
    %v361 = vadd.f32 %v95, %v360
    %362 = vmatmul.bf16.gmra.mxu0 %v194
    %v363 = vpop.f32.mrf.mxu0
    %v364 = vadd.f32 %v95, %v363
    %v365 = vpop.f32.mrf.mxu0
    %v366 = vadd.f32 %v95, %v365
    %367 = vmatmul.bf16.gmra.mxu0 %v197
    %v368 = vpop.f32.mrf.mxu0
    %v369 = vadd.f32 %v95, %v368
    %v370 = vpop.f32.mrf.mxu0
    %v371 = vadd.f32 %v95, %v370
    %372 = vdwg.mxu0
    %373 = vmatpush.bf16.msra.mxu0 0
    %374 = vmatpush.bf16.msra.mxu0 0
    %375 = vmatpush.bf16.msra.mxu0 0
    %376 = vmatpush.bf16.msra.mxu0 0
    %377 = vmatpush.bf16.msra.mxu0 0
    %378 = vmatpush.bf16.msra.mxu0 0
    %379 = vmatpush.bf16.msra.mxu0 %v168
    %380 = vmatpush.bf16.msra.mxu0 %v160
    %381 = vmatmul.bf16.gmra.mxu0 %v188
    %v382 = vpop.f32.mrf.mxu0
    %v383 = vadd.f32 %v96, %v382
    %v384 = vpop.f32.mrf.mxu0
    %v385 = vadd.f32 %v96, %v384
    %386 = vmatmul.bf16.gmra.mxu0 %v191
    %v387 = vpop.f32.mrf.mxu0
    %v388 = vadd.f32 %v96, %v387
    %v389 = vpop.f32.mrf.mxu0
    %v390 = vadd.f32 %v96, %v389
    %391 = vmatmul.bf16.gmra.mxu0 %v194
    %v392 = vpop.f32.mrf.mxu0
    %v393 = vadd.f32 %v96, %v392
    %v394 = vpop.f32.mrf.mxu0
    %v395 = vadd.f32 %v96, %v394
    %396 = vmatmul.bf16.gmra.mxu0 %v197
    %v397 = vpop.f32.mrf.mxu0
    %v398 = vadd.f32 %v96, %v397
    %v399 = vpop.f32.mrf.mxu0
    %v400 = vadd.f32 %v96, %v399
    %401 = vdwg.mxu0
    %402 = vmatpush.bf16.msra.mxu0 0
    %403 = vmatpush.bf16.msra.mxu0 0
    %404 = vmatpush.bf16.msra.mxu0 0
    %405 = vmatpush.bf16.msra.mxu0 0
    %406 = vmatpush.bf16.msra.mxu0 0
    %407 = vmatpush.bf16.msra.mxu0 0
    %408 = vmatpush.bf16.msra.mxu0 %v169
    %409 = vmatpush.bf16.msra.mxu0 %v161
    %410 = vmatmul.bf16.gmra.mxu0 %v188
    %v411 = vpop.f32.mrf.mxu0
    %v412 = vadd.f32 %v97, %v411
    %v413 = vpop.f32.mrf.mxu0
    %v414 = vadd.f32 %v97, %v413
    %415 = vmatmul.bf16.gmra.mxu0 %v191
    %v416 = vpop.f32.mrf.mxu0
    %v417 = vadd.f32 %v97, %v416
    %v418 = vpop.f32.mrf.mxu0
    %v419 = vadd.f32 %v97, %v418
    %420 = vmatmul.bf16.gmra.mxu0 %v194
    %v421 = vpop.f32.mrf.mxu0
    %v422 = vadd.f32 %v97, %v421
    %v423 = vpop.f32.mrf.mxu0
    %v424 = vadd.f32 %v97, %v423
    %425 = vmatmul.bf16.gmra.mxu0 %v197
    %v426 = vpop.f32.mrf.mxu0
    %v427 = vadd.f32 %v97, %v426
    %v428 = vpop.f32.mrf.mxu0
    %v429 = vadd.f32 %v97, %v428
    %430 = vdwg.mxu0
    %431 = vst [vmem:[#allocation2] sm:$0xff] %v209
    %432 = vst [vmem:[#allocation2 + $0x8] sm:$0xff] %v238
    %433 = vst [vmem:[#allocation2 + $0x10] sm:$0xff] %v267
    %434 = vst [vmem:[#allocation2 + $0x18] sm:$0xff] %v296
    %435 = vst [vmem:[#allocation2 + $0x20] sm:$0xff] %v325
    %436 = vst [vmem:[#allocation2 + $0x28] sm:$0xff] %v354
    %437 = vst [vmem:[#allocation2 + $0x30] sm:$0xff] %v383
    %438 = vst [vmem:[#allocation2 + $0x38] sm:$0xff] %v412
    %439 = vst [vmem:[#allocation2 + $0x40] sm:$0xff] %v211
    %440 = vst [vmem:[#allocation2 + $0x48] sm:$0xff] %v240
    %441 = vst [vmem:[#allocation2 + $0x50] sm:$0xff] %v269
    %442 = vst [vmem:[#allocation2 + $0x58] sm:$0xff] %v298
    %443 = vst [vmem:[#allocation2 + $0x60] sm:$0xff] %v327
    %444 = vst [vmem:[#allocation2 + $0x68] sm:$0xff] %v356
    %445 = vst [vmem:[#allocation2 + $0x70] sm:$0xff] %v385
    %446 = vst [vmem:[#allocation2 + $0x78] sm:$0xff] %v414
    %447 = vst [vmem:[#allocation2 + $0x80] sm:$0xff] %v214
    %448 = vst [vmem:[#allocation2 + $0x88] sm:$0xff] %v243
    %449 = vst [vmem:[#allocation2 + $0x90] sm:$0xff] %v272
    %450 = vst [vmem:[#allocation2 + $0x98] sm:$0xff] %v301
    %451 = vst [vmem:[#allocation2 + $0xa0] sm:$0xff] %v330
    %452 = vst [vmem:[#allocation2 + $0xa8] sm:$0xff] %v359
    %453 = vst [vmem:[#allocation2 + $0xb0] sm:$0xff] %v388
    %454 = vst [vmem:[#allocation2 + $0xb8] sm:$0xff] %v417
    %455 = vst [vmem:[#allocation2 + $0xc0] sm:$0xff] %v216
    %456 = vst [vmem:[#allocation2 + $0xc8] sm:$0xff] %v245
    %457 = vst [vmem:[#allocation2 + $0xd0] sm:$0xff] %v274
    %458 = vst [vmem:[#allocation2 + $0xd8] sm:$0xff] %v303
    %459 = vst [vmem:[#allocation2 + $0xe0] sm:$0xff] %v332
    %460 = vst [vmem:[#allocation2 + $0xe8] sm:$0xff] %v361
    %461 = vst [vmem:[#allocation2 + $0xf0] sm:$0xff] %v390
    %462 = vst [vmem:[#allocation2 + $0xf8] sm:$0xff] %v419
    %463 = vst [vmem:[#allocation2 + $0x100] sm:$0xff] %v219
    %464 = vst [vmem:[#allocation2 + $0x108] sm:$0xff] %v248
    %465 = vst [vmem:[#allocation2 + $0x110] sm:$0xff] %v277
    %466 = vst [vmem:[#allocation2 + $0x118] sm:$0xff] %v306
    %467 = vst [vmem:[#allocation2 + $0x120] sm:$0xff] %v335
    %468 = vst [vmem:[#allocation2 + $0x128] sm:$0xff] %v364
    %469 = vst [vmem:[#allocation2 + $0x130] sm:$0xff] %v393
    %470 = vst [vmem:[#allocation2 + $0x138] sm:$0xff] %v422
    %471 = vst [vmem:[#allocation2 + $0x140] sm:$0xff] %v221
    %472 = vst [vmem:[#allocation2 + $0x148] sm:$0xff] %v250
    %473 = vst [vmem:[#allocation2 + $0x150] sm:$0xff] %v279
    %474 = vst [vmem:[#allocation2 + $0x158] sm:$0xff] %v308
    %475 = vst [vmem:[#allocation2 + $0x160] sm:$0xff] %v337
    %476 = vst [vmem:[#allocation2 + $0x168] sm:$0xff] %v366
    %477 = vst [vmem:[#allocation2 + $0x170] sm:$0xff] %v395
    %478 = vst [vmem:[#allocation2 + $0x178] sm:$0xff] %v424
    %479 = vst [vmem:[#allocation2 + $0x180] sm:$0xff] %v224
    %480 = vst [vmem:[#allocation2 + $0x188] sm:$0xff] %v253
    %481 = vst [vmem:[#allocation2 + $0x190] sm:$0xff] %v282
    %482 = vst [vmem:[#allocation2 + $0x198] sm:$0xff] %v311
    %483 = vst [vmem:[#allocation2 + $0x1a0] sm:$0xff] %v340
    %484 = vst [vmem:[#allocation2 + $0x1a8] sm:$0xff] %v369
    %485 = vst [vmem:[#allocation2 + $0x1b0] sm:$0xff] %v398
    %486 = vst [vmem:[#allocation2 + $0x1b8] sm:$0xff] %v427
    %487 = vst [vmem:[#allocation2 + $0x1c0] sm:$0xff] %v226
    %488 = vst [vmem:[#allocation2 + $0x1c8] sm:$0xff] %v255
    %489 = vst [vmem:[#allocation2 + $0x1d0] sm:$0xff] %v284
    %490 = vst [vmem:[#allocation2 + $0x1d8] sm:$0xff] %v313
    %491 = vst [vmem:[#allocation2 + $0x1e0] sm:$0xff] %v342
    %492 = vst [vmem:[#allocation2 + $0x1e8] sm:$0xff] %v371
    %493 = vst [vmem:[#allocation2 + $0x1f0] sm:$0xff] %v400
    %494 = vst [vmem:[#allocation2 + $0x1f8] sm:$0xff] %v429
    %v495 = vld [vmem:[%s1] sm:$0xff]
    %496 = vset.pattern.permute.xlu0 0
    %497 = vperm.xlu0 %496, %v495
    %v498 = vpop.permute.xlu0 %497
    %vm499 = vcmp.gt.s32.totalorder %v498, 0
    %vm500 = vcmp.gt.s32.totalorder %v498, 1
    %vm501 = vcmp.gt.s32.totalorder %v498, 2
    %vm502 = vcmp.gt.s32.totalorder %v498, 3
    %vm503 = vcmp.gt.s32.totalorder %v498, 4
    %vm504 = vcmp.gt.s32.totalorder %v498, 5
    %vm505 = vcmp.gt.s32.totalorder %v498, 6
    %vm506 = vcmp.gt.s32.totalorder %v498, 7
    %v507 = vsel %vm499, 1, 0
    %v508 = vsel %vm500, 1, 0
    %v509 = vsel %vm501, 1, 0
    %v510 = vsel %vm502, 1, 0
    %v511 = vsel %vm503, 1, 0
    %v512 = vsel %vm504, 1, 0
    %v513 = vsel %vm505, 1, 0
    %v514 = vsel %vm506, 1, 0
    %v515 = vcvt.s32.f32 %v507
    %v516 = vcvt.s32.f32 %v508
    %v517 = vcvt.s32.f32 %v509
    %v518 = vcvt.s32.f32 %v510
    %v519 = vcvt.s32.f32 %v511
    %v520 = vcvt.s32.f32 %v512
    %v521 = vcvt.s32.f32 %v513
    %v522 = vcvt.s32.f32 %v514
    %523 = vst [vmem:[#allocation3] sm:$0xff] %v515
    %524 = vst [vmem:[#allocation3 + $0x8] sm:$0xff] %v516
    %525 = vst [vmem:[#allocation3 + $0x10] sm:$0xff] %v517
    %526 = vst [vmem:[#allocation3 + $0x18] sm:$0xff] %v518
    %527 = vst [vmem:[#allocation3 + $0x20] sm:$0xff] %v519
    %528 = vst [vmem:[#allocation3 + $0x28] sm:$0xff] %v520
    %529 = vst [vmem:[#allocation3 + $0x30] sm:$0xff] %v521
    %530 = vst [vmem:[#allocation3 + $0x38] sm:$0xff] %v522
    %v531 = vld [vmem:[#allocation7] sm:$0xff]
    %v532 = vld [vmem:[#allocation7 + $0x8] sm:$0xff]
    %v533 = vld [vmem:[#allocation7 + $0x10] sm:$0xff]
    %v534 = vld [vmem:[#allocation7 + $0x18] sm:$0xff]
    %v535 = vld [vmem:[#allocation7 + $0x20] sm:$0xff]
    %v536 = vld [vmem:[#allocation7 + $0x28] sm:$0xff]
    %v537 = vld [vmem:[#allocation7 + $0x30] sm:$0xff]
    %v538 = vld [vmem:[#allocation7 + $0x38] sm:$0xff]
    %v539 = vld [vmem:[#allocation7 + $0x40] sm:$0xff]
    %v540 = vld [vmem:[#allocation7 + $0x48] sm:$0xff]
    %v541 = vld [vmem:[#allocation7 + $0x50] sm:$0xff]
    %v542 = vld [vmem:[#allocation7 + $0x58] sm:$0xff]
    %v543 = vld [vmem:[#allocation7 + $0x60] sm:$0xff]
    %v544 = vld [vmem:[#allocation7 + $0x68] sm:$0xff]
    %v545 = vld [vmem:[#allocation7 + $0x70] sm:$0xff]
    %v546 = vld [vmem:[#allocation7 + $0x78] sm:$0xff]
    %v547 = vld [vmem:[#allocation7 + $0x80] sm:$0xff]
    %v548 = vld [vmem:[#allocation7 + $0x88] sm:$0xff]
    %v549 = vld [vmem:[#allocation7 + $0x90] sm:$0xff]
    %v550 = vld [vmem:[#allocation7 + $0x98] sm:$0xff]
    %v551 = vld [vmem:[#allocation7 + $0xa0] sm:$0xff]
    %v552 = vld [vmem:[#allocation7 + $0xa8] sm:$0xff]
    %v553 = vld [vmem:[#allocation7 + $0xb0] sm:$0xff]
    %v554 = vld [vmem:[#allocation7 + $0xb8] sm:$0xff]
    %v555 = vld [vmem:[#allocation7 + $0xc0] sm:$0xff]
    %v556 = vld [vmem:[#allocation7 + $0xc8] sm:$0xff]
    %v557 = vld [vmem:[#allocation7 + $0xd0] sm:$0xff]
    %v558 = vld [vmem:[#allocation7 + $0xd8] sm:$0xff]
    %v559 = vld [vmem:[#allocation7 + $0xe0] sm:$0xff]
    %v560 = vld [vmem:[#allocation7 + $0xe8] sm:$0xff]
    %v561 = vld [vmem:[#allocation7 + $0xf0] sm:$0xff]
    %v562 = vld [vmem:[#allocation7 + $0xf8] sm:$0xff]
    %v563 = vld [vmem:[#allocation7 + $0x100] sm:$0xff]
    %v564 = vld [vmem:[#allocation7 + $0x108] sm:$0xff]
    %v565 = vld [vmem:[#allocation7 + $0x110] sm:$0xff]
    %v566 = vld [vmem:[#allocation7 + $0x118] sm:$0xff]
    %v567 = vld [vmem:[#allocation7 + $0x120] sm:$0xff]
    %v568 = vld [vmem:[#allocation7 + $0x128] sm:$0xff]
    %v569 = vld [vmem:[#allocation7 + $0x130] sm:$0xff]
    %v570 = vld [vmem:[#allocation7 + $0x138] sm:$0xff]
    %v571 = vld [vmem:[#allocation7 + $0x140] sm:$0xff]
    %v572 = vld [vmem:[#allocation7 + $0x148] sm:$0xff]
    %v573 = vld [vmem:[#allocation7 + $0x150] sm:$0xff]
    %v574 = vld [vmem:[#allocation7 + $0x158] sm:$0xff]
    %v575 = vld [vmem:[#allocation7 + $0x160] sm:$0xff]
    %v576 = vld [vmem:[#allocation7 + $0x168] sm:$0xff]
    %v577 = vld [vmem:[#allocation7 + $0x170] sm:$0xff]
    %v578 = vld [vmem:[#allocation7 + $0x178] sm:$0xff]
    %v579 = vld [vmem:[#allocation7 + $0x180] sm:$0xff]
    %v580 = vld [vmem:[#allocation7 + $0x188] sm:$0xff]
    %v581 = vld [vmem:[#allocation7 + $0x190] sm:$0xff]
    %v582 = vld [vmem:[#allocation7 + $0x198] sm:$0xff]
    %v583 = vld [vmem:[#allocation7 + $0x1a0] sm:$0xff]
    %v584 = vld [vmem:[#allocation7 + $0x1a8] sm:$0xff]
    %v585 = vld [vmem:[#allocation7 + $0x1b0] sm:$0xff]
    %v586 = vld [vmem:[#allocation7 + $0x1b8] sm:$0xff]
    %v587 = vld [vmem:[#allocation7 + $0x1c0] sm:$0xff]
    %v588 = vld [vmem:[#allocation7 + $0x1c8] sm:$0xff]
    %v589 = vld [vmem:[#allocation7 + $0x1d0] sm:$0xff]
    %v590 = vld [vmem:[#allocation7 + $0x1d8] sm:$0xff]
    %v591 = vld [vmem:[#allocation7 + $0x1e0] sm:$0xff]
    %v592 = vld [vmem:[#allocation7 + $0x1e8] sm:$0xff]
    %v593 = vld [vmem:[#allocation7 + $0x1f0] sm:$0xff]
    %v594 = vld [vmem:[#allocation7 + $0x1f8] sm:$0xff]
    %v595 = vld [vmem:[#allocation7 + $0x200] sm:$0xff]
    %v596 = vld [vmem:[#allocation7 + $0x208] sm:$0xff]
    %v597 = vld [vmem:[#allocation7 + $0x210] sm:$0xff]
    %v598 = vld [vmem:[#allocation7 + $0x218] sm:$0xff]
    %v599 = vld [vmem:[#allocation7 + $0x220] sm:$0xff]
    %v600 = vld [vmem:[#allocation7 + $0x228] sm:$0xff]
    %v601 = vld [vmem:[#allocation7 + $0x230] sm:$0xff]
    %v602 = vld [vmem:[#allocation7 + $0x238] sm:$0xff]
    %v603 = vld [vmem:[#allocation7 + $0x240] sm:$0xff]
    %v604 = vld [vmem:[#allocation7 + $0x248] sm:$0xff]
    %v605 = vld [vmem:[#allocation7 + $0x250] sm:$0xff]
    %v606 = vld [vmem:[#allocation7 + $0x258] sm:$0xff]
    %v607 = vld [vmem:[#allocation7 + $0x260] sm:$0xff]
    %v608 = vld [vmem:[#allocation7 + $0x268] sm:$0xff]
    %v609 = vld [vmem:[#allocation7 + $0x270] sm:$0xff]
    %v610 = vld [vmem:[#allocation7 + $0x278] sm:$0xff]
    %v611 = vld [vmem:[#allocation7 + $0x280] sm:$0xff]
    %v612 = vld [vmem:[#allocation7 + $0x288] sm:$0xff]
    %v613 = vld [vmem:[#allocation7 + $0x290] sm:$0xff]
    %v614 = vld [vmem:[#allocation7 + $0x298] sm:$0xff]
    %v615 = vld [vmem:[#allocation7 + $0x2a0] sm:$0xff]
    %v616 = vld [vmem:[#allocation7 + $0x2a8] sm:$0xff]
    %v617 = vld [vmem:[#allocation7 + $0x2b0] sm:$0xff]
    %v618 = vld [vmem:[#allocation7 + $0x2b8] sm:$0xff]
    %v619 = vld [vmem:[#allocation7 + $0x2c0] sm:$0xff]
    %v620 = vld [vmem:[#allocation7 + $0x2c8] sm:$0xff]
    %v621 = vld [vmem:[#allocation7 + $0x2d0] sm:$0xff]
    %v622 = vld [vmem:[#allocation7 + $0x2d8] sm:$0xff]
    %v623 = vld [vmem:[#allocation7 + $0x2e0] sm:$0xff]
    %v624 = vld [vmem:[#allocation7 + $0x2e8] sm:$0xff]
    %v625 = vld [vmem:[#allocation7 + $0x2f0] sm:$0xff]
    %v626 = vld [vmem:[#allocation7 + $0x2f8] sm:$0xff]
    %v627 = vld [vmem:[#allocation7 + $0x300] sm:$0xff]
    %v628 = vld [vmem:[#allocation7 + $0x308] sm:$0xff]
    %v629 = vld [vmem:[#allocation7 + $0x310] sm:$0xff]
    %v630 = vld [vmem:[#allocation7 + $0x318] sm:$0xff]
    %v631 = vld [vmem:[#allocation7 + $0x320] sm:$0xff]
    %v632 = vld [vmem:[#allocation7 + $0x328] sm:$0xff]
    %v633 = vld [vmem:[#allocation7 + $0x330] sm:$0xff]
    %v634 = vld [vmem:[#allocation7 + $0x338] sm:$0xff]
    %v635 = vld [vmem:[#allocation7 + $0x340] sm:$0xff]
    %v636 = vld [vmem:[#allocation7 + $0x348] sm:$0xff]
    %v637 = vld [vmem:[#allocation7 + $0x350] sm:$0xff]
    %v638 = vld [vmem:[#allocation7 + $0x358] sm:$0xff]
    %v639 = vld [vmem:[#allocation7 + $0x360] sm:$0xff]
    %v640 = vld [vmem:[#allocation7 + $0x368] sm:$0xff]
    %v641 = vld [vmem:[#allocation7 + $0x370] sm:$0xff]
    %v642 = vld [vmem:[#allocation7 + $0x378] sm:$0xff]
    %v643 = vld [vmem:[#allocation7 + $0x380] sm:$0xff]
    %v644 = vld [vmem:[#allocation7 + $0x388] sm:$0xff]
    %v645 = vld [vmem:[#allocation7 + $0x390] sm:$0xff]
    %v646 = vld [vmem:[#allocation7 + $0x398] sm:$0xff]
    %v647 = vld [vmem:[#allocation7 + $0x3a0] sm:$0xff]
    %v648 = vld [vmem:[#allocation7 + $0x3a8] sm:$0xff]
    %v649 = vld [vmem:[#allocation7 + $0x3b0] sm:$0xff]
    %v650 = vld [vmem:[#allocation7 + $0x3b8] sm:$0xff]
    %v651 = vld [vmem:[#allocation7 + $0x3c0] sm:$0xff]
    %v652 = vld [vmem:[#allocation7 + $0x3c8] sm:$0xff]
    %v653 = vld [vmem:[#allocation7 + $0x3d0] sm:$0xff]
    %v654 = vld [vmem:[#allocation7 + $0x3d8] sm:$0xff]
    %v655 = vld [vmem:[#allocation7 + $0x3e0] sm:$0xff]
    %v656 = vld [vmem:[#allocation7 + $0x3e8] sm:$0xff]
    %v657 = vld [vmem:[#allocation7 + $0x3f0] sm:$0xff]
    %v658 = vld [vmem:[#allocation7 + $0x3f8] sm:$0xff]
    %v659 = vld [vmem:[#allocation7 + $0x400] sm:$0xff]
    %v660 = vld [vmem:[#allocation7 + $0x408] sm:$0xff]
    %v661 = vld [vmem:[#allocation7 + $0x410] sm:$0xff]
    %v662 = vld [vmem:[#allocation7 + $0x418] sm:$0xff]
    %v663 = vld [vmem:[#allocation7 + $0x420] sm:$0xff]
    %v664 = vld [vmem:[#allocation7 + $0x428] sm:$0xff]
    %v665 = vld [vmem:[#allocation7 + $0x430] sm:$0xff]
    %v666 = vld [vmem:[#allocation7 + $0x438] sm:$0xff]
    %v667 = vld [vmem:[#allocation7 + $0x440] sm:$0xff]
    %v668 = vld [vmem:[#allocation7 + $0x448] sm:$0xff]
    %v669 = vld [vmem:[#allocation7 + $0x450] sm:$0xff]
    %v670 = vld [vmem:[#allocation7 + $0x458] sm:$0xff]
    %v671 = vld [vmem:[#allocation7 + $0x460] sm:$0xff]
    %v672 = vld [vmem:[#allocation7 + $0x468] sm:$0xff]
    %v673 = vld [vmem:[#allocation7 + $0x470] sm:$0xff]
    %v674 = vld [vmem:[#allocation7 + $0x478] sm:$0xff]
    %v675 = vld [vmem:[#allocation7 + $0x480] sm:$0xff]
    %v676 = vld [vmem:[#allocation7 + $0x488] sm:$0xff]
    %v677 = vld [vmem:[#allocation7 + $0x490] sm:$0xff]
    %v678 = vld [vmem:[#allocation7 + $0x498] sm:$0xff]
    %v679 = vld [vmem:[#allocation7 + $0x4a0] sm:$0xff]
    %v680 = vld [vmem:[#allocation7 + $0x4a8] sm:$0xff]
    %v681 = vld [vmem:[#allocation7 + $0x4b0] sm:$0xff]
    %v682 = vld [vmem:[#allocation7 + $0x4b8] sm:$0xff]
    %v683 = vld [vmem:[#allocation7 + $0x4c0] sm:$0xff]
    %v684 = vld [vmem:[#allocation7 + $0x4c8] sm:$0xff]
    %v685 = vld [vmem:[#allocation7 + $0x4d0] sm:$0xff]
    %v686 = vld [vmem:[#allocation7 + $0x4d8] sm:$0xff]
    %v687 = vld [vmem:[#allocation7 + $0x4e0] sm:$0xff]
    %v688 = vld [vmem:[#allocation7 + $0x4e8] sm:$0xff]
    %v689 = vld [vmem:[#allocation7 + $0x4f0] sm:$0xff]
    %v690 = vld [vmem:[#allocation7 + $0x4f8] sm:$0xff]
    %v691 = vld [vmem:[#allocation7 + $0x500] sm:$0xff]
    %v692 = vld [vmem:[#allocation7 + $0x508] sm:$0xff]
    %v693 = vld [vmem:[#allocation7 + $0x510] sm:$0xff]
    %v694 = vld [vmem:[#allocation7 + $0x518] sm:$0xff]
    %v695 = vld [vmem:[#allocation7 + $0x520] sm:$0xff]
    %v696 = vld [vmem:[#allocation7 + $0x528] sm:$0xff]
    %v697 = vld [vmem:[#allocation7 + $0x530] sm:$0xff]
    %v698 = vld [vmem:[#allocation7 + $0x538] sm:$0xff]
    %v699 = vld [vmem:[#allocation7 + $0x540] sm:$0xff]
    %v700 = vld [vmem:[#allocation7 + $0x548] sm:$0xff]
    %v701 = vld [vmem:[#allocation7 + $0x550] sm:$0xff]
    %v702 = vld [vmem:[#allocation7 + $0x558] sm:$0xff]
    %v703 = vld [vmem:[#allocation7 + $0x560] sm:$0xff]
    %v704 = vld [vmem:[#allocation7 + $0x568] sm:$0xff]
    %v705 = vld [vmem:[#allocation7 + $0x570] sm:$0xff]
    %v706 = vld [vmem:[#allocation7 + $0x578] sm:$0xff]
    %v707 = vld [vmem:[#allocation7 + $0x580] sm:$0xff]
    %v708 = vld [vmem:[#allocation7 + $0x588] sm:$0xff]
    %v709 = vld [vmem:[#allocation7 + $0x590] sm:$0xff]
    %v710 = vld [vmem:[#allocation7 + $0x598] sm:$0xff]
    %v711 = vld [vmem:[#allocation7 + $0x5a0] sm:$0xff]
    %v712 = vld [vmem:[#allocation7 + $0x5a8] sm:$0xff]
    %v713 = vld [vmem:[#allocation7 + $0x5b0] sm:$0xff]
    %v714 = vld [vmem:[#allocation7 + $0x5b8] sm:$0xff]
    %v715 = vld [vmem:[#allocation7 + $0x5c0] sm:$0xff]
    %v716 = vld [vmem:[#allocation7 + $0x5c8] sm:$0xff]
    %v717 = vld [vmem:[#allocation7 + $0x5d0] sm:$0xff]
    %v718 = vld [vmem:[#allocation7 + $0x5d8] sm:$0xff]
    %v719 = vld [vmem:[#allocation7 + $0x5e0] sm:$0xff]
    %v720 = vld [vmem:[#allocation7 + $0x5e8] sm:$0xff]
    %v721 = vld [vmem:[#allocation7 + $0x5f0] sm:$0xff]
    %v722 = vld [vmem:[#allocation7 + $0x5f8] sm:$0xff]
    %v723 = vld [vmem:[#allocation7 + $0x600] sm:$0xff]
    %v724 = vld [vmem:[#allocation7 + $0x608] sm:$0xff]
    %v725 = vld [vmem:[#allocation7 + $0x610] sm:$0xff]
    %v726 = vld [vmem:[#allocation7 + $0x618] sm:$0xff]
    %v727 = vld [vmem:[#allocation7 + $0x620] sm:$0xff]
    %v728 = vld [vmem:[#allocation7 + $0x628] sm:$0xff]
    %v729 = vld [vmem:[#allocation7 + $0x630] sm:$0xff]
    %v730 = vld [vmem:[#allocation7 + $0x638] sm:$0xff]
    %v731 = vld [vmem:[#allocation7 + $0x640] sm:$0xff]
    %v732 = vld [vmem:[#allocation7 + $0x648] sm:$0xff]
    %v733 = vld [vmem:[#allocation7 + $0x650] sm:$0xff]
    %v734 = vld [vmem:[#allocation7 + $0x658] sm:$0xff]
    %v735 = vld [vmem:[#allocation7 + $0x660] sm:$0xff]
    %v736 = vld [vmem:[#allocation7 + $0x668] sm:$0xff]
    %v737 = vld [vmem:[#allocation7 + $0x670] sm:$0xff]
    %v738 = vld [vmem:[#allocation7 + $0x678] sm:$0xff]
    %v739 = vld [vmem:[#allocation7 + $0x680] sm:$0xff]
    %v740 = vld [vmem:[#allocation7 + $0x688] sm:$0xff]
    %v741 = vld [vmem:[#allocation7 + $0x690] sm:$0xff]
    %v742 = vld [vmem:[#allocation7 + $0x698] sm:$0xff]
    %v743 = vld [vmem:[#allocation7 + $0x6a0] sm:$0xff]
    %v744 = vld [vmem:[#allocation7 + $0x6a8] sm:$0xff]
    %v745 = vld [vmem:[#allocation7 + $0x6b0] sm:$0xff]
    %v746 = vld [vmem:[#allocation7 + $0x6b8] sm:$0xff]
    %v747 = vld [vmem:[#allocation7 + $0x6c0] sm:$0xff]
    %v748 = vld [vmem:[#allocation7 + $0x6c8] sm:$0xff]
    %v749 = vld [vmem:[#allocation7 + $0x6d0] sm:$0xff]
    %v750 = vld [vmem:[#allocation7 + $0x6d8] sm:$0xff]
    %v751 = vld [vmem:[#allocation7 + $0x6e0] sm:$0xff]
    %v752 = vld [vmem:[#allocation7 + $0x6e8] sm:$0xff]
    %v753 = vld [vmem:[#allocation7 + $0x6f0] sm:$0xff]
    %v754 = vld [vmem:[#allocation7 + $0x6f8] sm:$0xff]
    %v755 = vld [vmem:[#allocation7 + $0x700] sm:$0xff]
    %v756 = vld [vmem:[#allocation7 + $0x708] sm:$0xff]
    %v757 = vld [vmem:[#allocation7 + $0x710] sm:$0xff]
    %v758 = vld [vmem:[#allocation7 + $0x718] sm:$0xff]
    %v759 = vld [vmem:[#allocation7 + $0x720] sm:$0xff]
    %v760 = vld [vmem:[#allocation7 + $0x728] sm:$0xff]
    %v761 = vld [vmem:[#allocation7 + $0x730] sm:$0xff]
    %v762 = vld [vmem:[#allocation7 + $0x738] sm:$0xff]
    %v763 = vld [vmem:[#allocation7 + $0x740] sm:$0xff]
    %v764 = vld [vmem:[#allocation7 + $0x748] sm:$0xff]
    %v765 = vld [vmem:[#allocation7 + $0x750] sm:$0xff]
    %v766 = vld [vmem:[#allocation7 + $0x758] sm:$0xff]
    %v767 = vld [vmem:[#allocation7 + $0x760] sm:$0xff]
    %v768 = vld [vmem:[#allocation7 + $0x768] sm:$0xff]
    %v769 = vld [vmem:[#allocation7 + $0x770] sm:$0xff]
    %v770 = vld [vmem:[#allocation7 + $0x778] sm:$0xff]
    %v771 = vld [vmem:[#allocation7 + $0x780] sm:$0xff]
    %v772 = vld [vmem:[#allocation7 + $0x788] sm:$0xff]
    %v773 = vld [vmem:[#allocation7 + $0x790] sm:$0xff]
    %v774 = vld [vmem:[#allocation7 + $0x798] sm:$0xff]
    %v775 = vld [vmem:[#allocation7 + $0x7a0] sm:$0xff]
    %v776 = vld [vmem:[#allocation7 + $0x7a8] sm:$0xff]
    %v777 = vld [vmem:[#allocation7 + $0x7b0] sm:$0xff]
    %v778 = vld [vmem:[#allocation7 + $0x7b8] sm:$0xff]
    %v779 = vld [vmem:[#allocation7 + $0x7c0] sm:$0xff]
    %v780 = vld [vmem:[#allocation7 + $0x7c8] sm:$0xff]
    %v781 = vld [vmem:[#allocation7 + $0x7d0] sm:$0xff]
    %v782 = vld [vmem:[#allocation7 + $0x7d8] sm:$0xff]
    %v783 = vld [vmem:[#allocation7 + $0x7e0] sm:$0xff]
    %v784 = vld [vmem:[#allocation7 + $0x7e8] sm:$0xff]
    %v785 = vld [vmem:[#allocation7 + $0x7f0] sm:$0xff]
    %v786 = vld [vmem:[#allocation7 + $0x7f8] sm:$0xff]
    %v787 = vlaneseq
    %v788 = vand.u32 %v787, 127
    %v789 = vadd.s32 %v788, 128
    %v790 = vadd.s32 %v788, 256
    %v791 = vadd.s32 %v788, 384
    %v792 = vadd.s32 %v788, 512
    %v793 = vadd.s32 %v788, 640
    %v794 = vadd.s32 %v788, 768
    %v795 = vadd.s32 %v788, 896
    %vm796 = vcmp.lt.s32.totalorder %v788, 0
    %v797 = vsub.s32 0, %v788
    %v798 = vsel %vm796, %v797, %v788
    %v799 = vshrl.u32 %v798, 8
    %v800 = vand.u32 %v798, 255
    %v801 = vsub.s32 0, %v800
    %v802 = vsel %vm796, %v801, %v800
    %vm803 = vcmp.lt.s32.totalorder %v789, 0
    %v804 = vsub.s32 0, %v789
    %v805 = vsel %vm803, %v804, %v789
    %v806 = vshrl.u32 %v805, 8
    %v807 = vand.u32 %v805, 255
    %v808 = vsub.s32 0, %v807
    %v809 = vsel %vm803, %v808, %v807
    %vm810 = vcmp.lt.s32.totalorder %v790, 0
    %v811 = vsub.s32 0, %v790
    %v812 = vsel %vm810, %v811, %v790
    %v813 = vshrl.u32 %v812, 8
    %v814 = vand.u32 %v812, 255
    %v815 = vsub.s32 0, %v814
    %v816 = vsel %vm810, %v815, %v814
    %vm817 = vcmp.lt.s32.totalorder %v791, 0
    %v818 = vsub.s32 0, %v791
    %v819 = vsel %vm817, %v818, %v791
    %v820 = vshrl.u32 %v819, 8
    %v821 = vand.u32 %v819, 255
    %v822 = vsub.s32 0, %v821
    %v823 = vsel %vm817, %v822, %v821
    %vm824 = vcmp.lt.s32.totalorder %v792, 0
    %v825 = vsub.s32 0, %v792
    %v826 = vsel %vm824, %v825, %v792
    %v827 = vshrl.u32 %v826, 8
    %v828 = vand.u32 %v826, 255
    %v829 = vsub.s32 0, %v828
    %v830 = vsel %vm824, %v829, %v828
    %vm831 = vcmp.lt.s32.totalorder %v793, 0
    %v832 = vsub.s32 0, %v793
    %v833 = vsel %vm831, %v832, %v793
    %v834 = vshrl.u32 %v833, 8
    %v835 = vand.u32 %v833, 255
    %v836 = vsub.s32 0, %v835
    %v837 = vsel %vm831, %v836, %v835
    %vm838 = vcmp.lt.s32.totalorder %v794, 0
    %v839 = vsub.s32 0, %v794
    %v840 = vsel %vm838, %v839, %v794
    %v841 = vshrl.u32 %v840, 8
    %v842 = vand.u32 %v840, 255
    %v843 = vsub.s32 0, %v842
    %v844 = vsel %vm838, %v843, %v842
    %vm845 = vcmp.lt.s32.totalorder %v795, 0
    %v846 = vsub.s32 0, %v795
    %v847 = vsel %vm845, %v846, %v795
    %v848 = vshrl.u32 %v847, 8
    %v849 = vand.u32 %v847, 255
    %v850 = vsub.s32 0, %v849
    %v851 = vsel %vm845, %v850, %v849
    %vm852 = vcmp.lt.s32.totalorder %v802, 128
    %vm853 = vcmp.lt.s32.totalorder %v809, 128
    %vm854 = vcmp.lt.s32.totalorder %v816, 128
    %vm855 = vcmp.lt.s32.totalorder %v823, 128
    %vm856 = vcmp.lt.s32.totalorder %v830, 128
    %vm857 = vcmp.lt.s32.totalorder %v837, 128
    %vm858 = vcmp.lt.s32.totalorder %v844, 128
    %vm859 = vcmp.lt.s32.totalorder %v851, 128
    %s860 = smul.u32 0, 8
    %s861 = smul.addr %s860, 8
    %s862 = scalar_lea.vmem [#allocation2], %s861
    %v863 = vld [vmem:[%s862] sm:$0xff]
    %v864 = vld [vmem:[%s862 + $0x8] sm:$0xff]
    %v865 = vld [vmem:[%s862 + $0x10] sm:$0xff]
    %v866 = vld [vmem:[%s862 + $0x18] sm:$0xff]
    %v867 = vld [vmem:[%s862 + $0x20] sm:$0xff]
    %v868 = vld [vmem:[%s862 + $0x28] sm:$0xff]
    %v869 = vld [vmem:[%s862 + $0x30] sm:$0xff]
    %v870 = vld [vmem:[%s862 + $0x38] sm:$0xff]
    %s871 = smul.u32 7, 8
    %s872 = smul.addr %s871, 8
    %s873 = scalar_lea.vmem [#allocation2], %s872
    %v874 = vld [vmem:[%s873] sm:$0xff]
    %v875 = vld [vmem:[%s873 + $0x8] sm:$0xff]
    %v876 = vld [vmem:[%s873 + $0x10] sm:$0xff]
    %v877 = vld [vmem:[%s873 + $0x18] sm:$0xff]
    %v878 = vld [vmem:[%s873 + $0x20] sm:$0xff]
    %v879 = vld [vmem:[%s873 + $0x28] sm:$0xff]
    %v880 = vld [vmem:[%s873 + $0x30] sm:$0xff]
    %v881 = vld [vmem:[%s873 + $0x38] sm:$0xff]
    %v882 = vsel %vm852, %v863, %v874
    %v883 = vsel %vm853, %v864, %v875
    %v884 = vsel %vm854, %v865, %v876
    %v885 = vsel %vm855, %v866, %v877
    %v886 = vsel %vm856, %v867, %v878
    %v887 = vsel %vm857, %v868, %v879
    %v888 = vsel %vm858, %v869, %v880
    %v889 = vsel %vm859, %v870, %v881
    %890 = vmatpush.msra.mxu0 %v651
    %891 = vmatpush.msra.mxu0 %v643
    %892 = vmatpush.msra.mxu0 %v635
    %893 = vmatpush.msra.mxu0 %v627
    %894 = vmatpush.msra.mxu0 %v619
    %895 = vmatpush.msra.mxu0 %v611
    %896 = vmatpush.msra.mxu0 %v603
    %897 = vmatpush.msra.mxu0 %v595
    %898 = vmatpush.msra.mxu0 %v587
    %899 = vmatpush.msra.mxu0 %v579
    %900 = vmatpush.msra.mxu0 %v571
    %901 = vmatpush.msra.mxu0 %v563
    %902 = vmatpush.msra.mxu0 %v555
    %903 = vmatpush.msra.mxu0 %v547
    %904 = vmatpush.msra.mxu0 %v539
    %905 = vmatpush.msra.mxu0 %v531
    %906 = vmatmul.f32.gmra.mxu0 0.0
    %v907 = vpop.f32.mrf.mxu0
    %v908 = vadd.f32 0.0, %v907
    %909 = vdwg.mxu0
    %910 = vmatpush.msra.mxu0 %v779
    %911 = vmatpush.msra.mxu0 %v771
    %912 = vmatpush.msra.mxu0 %v763
    %913 = vmatpush.msra.mxu0 %v755
    %914 = vmatpush.msra.mxu0 %v747
    %915 = vmatpush.msra.mxu0 %v739
    %916 = vmatpush.msra.mxu0 %v731
    %917 = vmatpush.msra.mxu0 %v723
    %918 = vmatpush.msra.mxu0 %v715
    %919 = vmatpush.msra.mxu0 %v707
    %920 = vmatpush.msra.mxu0 %v699
    %921 = vmatpush.msra.mxu0 %v691
    %922 = vmatpush.msra.mxu0 %v683
    %923 = vmatpush.msra.mxu0 %v675
    %924 = vmatpush.msra.mxu0 %v667
    %925 = vmatpush.msra.mxu0 %v659
    %926 = vmatmul.f32.gmra.mxu0 0.0
    %v927 = vpop.f32.mrf.mxu0
    %v928 = vadd.f32 %v908, %v927
    %929 = vdwg.mxu0
    %930 = vmatpush.msra.mxu0 %v652
    %931 = vmatpush.msra.mxu0 %v644
    %932 = vmatpush.msra.mxu0 %v636
    %933 = vmatpush.msra.mxu0 %v628
    %934 = vmatpush.msra.mxu0 %v620
    %935 = vmatpush.msra.mxu0 %v612
    %936 = vmatpush.msra.mxu0 %v604
    %937 = vmatpush.msra.mxu0 %v596
    %938 = vmatpush.msra.mxu0 %v588
    %939 = vmatpush.msra.mxu0 %v580
    %940 = vmatpush.msra.mxu0 %v572
    %941 = vmatpush.msra.mxu0 %v564
    %942 = vmatpush.msra.mxu0 %v556
    %943 = vmatpush.msra.mxu0 %v548
    %944 = vmatpush.msra.mxu0 %v540
    %945 = vmatpush.msra.mxu0 %v532
    %946 = vmatmul.f32.gmra.mxu0 0.0
    %v947 = vpop.f32.mrf.mxu0
    %v948 = vadd.f32 0.0, %v947
    %949 = vdwg.mxu0
    %950 = vmatpush.msra.mxu0 %v780
    %951 = vmatpush.msra.mxu0 %v772
    %952 = vmatpush.msra.mxu0 %v764
    %953 = vmatpush.msra.mxu0 %v756
    %954 = vmatpush.msra.mxu0 %v748
    %955 = vmatpush.msra.mxu0 %v740
    %956 = vmatpush.msra.mxu0 %v732
    %957 = vmatpush.msra.mxu0 %v724
    %958 = vmatpush.msra.mxu0 %v716
    %959 = vmatpush.msra.mxu0 %v708
    %960 = vmatpush.msra.mxu0 %v700
    %961 = vmatpush.msra.mxu0 %v692
    %962 = vmatpush.msra.mxu0 %v684
    %963 = vmatpush.msra.mxu0 %v676
    %964 = vmatpush.msra.mxu0 %v668
    %965 = vmatpush.msra.mxu0 %v660
    %966 = vmatmul.f32.gmra.mxu0 0.0
    %v967 = vpop.f32.mrf.mxu0
    %v968 = vadd.f32 %v948, %v967
    %969 = vdwg.mxu0
    %970 = vmatpush.msra.mxu0 %v653
    %971 = vmatpush.msra.mxu0 %v645
    %972 = vmatpush.msra.mxu0 %v637
    %973 = vmatpush.msra.mxu0 %v629
    %974 = vmatpush.msra.mxu0 %v621
    %975 = vmatpush.msra.mxu0 %v613
    %976 = vmatpush.msra.mxu0 %v605
    %977 = vmatpush.msra.mxu0 %v597
    %978 = vmatpush.msra.mxu0 %v589
    %979 = vmatpush.msra.mxu0 %v581
    %980 = vmatpush.msra.mxu0 %v573
    %981 = vmatpush.msra.mxu0 %v565
    %982 = vmatpush.msra.mxu0 %v557
    %983 = vmatpush.msra.mxu0 %v549
    %984 = vmatpush.msra.mxu0 %v541
    %985 = vmatpush.msra.mxu0 %v533
    %986 = vmatmul.f32.gmra.mxu0 0.0
    %v987 = vpop.f32.mrf.mxu0
    %v988 = vadd.f32 0.0, %v987
    %989 = vdwg.mxu0
    %990 = vmatpush.msra.mxu0 %v781
    %991 = vmatpush.msra.mxu0 %v773
    %992 = vmatpush.msra.mxu0 %v765
    %993 = vmatpush.msra.mxu0 %v757
    %994 = vmatpush.msra.mxu0 %v749
    %995 = vmatpush.msra.mxu0 %v741
    %996 = vmatpush.msra.mxu0 %v733
    %997 = vmatpush.msra.mxu0 %v725
    %998 = vmatpush.msra.mxu0 %v717
    %999 = vmatpush.msra.mxu0 %v709
    %1000 = vmatpush.msra.mxu0 %v701
    %1001 = vmatpush.msra.mxu0 %v693
    %1002 = vmatpush.msra.mxu0 %v685
    %1003 = vmatpush.msra.mxu0 %v677
    %1004 = vmatpush.msra.mxu0 %v669
    %1005 = vmatpush.msra.mxu0 %v661
    %1006 = vmatmul.f32.gmra.mxu0 0.0
    %v1007 = vpop.f32.mrf.mxu0
    %v1008 = vadd.f32 %v988, %v1007
    %1009 = vdwg.mxu0
    %1010 = vmatpush.msra.mxu0 %v654
    %1011 = vmatpush.msra.mxu0 %v646
    %1012 = vmatpush.msra.mxu0 %v638
    %1013 = vmatpush.msra.mxu0 %v630
    %1014 = vmatpush.msra.mxu0 %v622
    %1015 = vmatpush.msra.mxu0 %v614
    %1016 = vmatpush.msra.mxu0 %v606
    %1017 = vmatpush.msra.mxu0 %v598
    %1018 = vmatpush.msra.mxu0 %v590
    %1019 = vmatpush.msra.mxu0 %v582
    %1020 = vmatpush.msra.mxu0 %v574
    %1021 = vmatpush.msra.mxu0 %v566
    %1022 = vmatpush.msra.mxu0 %v558
    %1023 = vmatpush.msra.mxu0 %v550
    %1024 = vmatpush.msra.mxu0 %v542
    %1025 = vmatpush.msra.mxu0 %v534
    %1026 = vmatmul.f32.gmra.mxu0 0.0
    %v1027 = vpop.f32.mrf.mxu0
    %v1028 = vadd.f32 0.0, %v1027
    %1029 = vdwg.mxu0
    %1030 = vmatpush.msra.mxu0 %v782
    %1031 = vmatpush.msra.mxu0 %v774
    %1032 = vmatpush.msra.mxu0 %v766
    %1033 = vmatpush.msra.mxu0 %v758
    %1034 = vmatpush.msra.mxu0 %v750
    %1035 = vmatpush.msra.mxu0 %v742
    %1036 = vmatpush.msra.mxu0 %v734
    %1037 = vmatpush.msra.mxu0 %v726
    %1038 = vmatpush.msra.mxu0 %v718
    %1039 = vmatpush.msra.mxu0 %v710
    %1040 = vmatpush.msra.mxu0 %v702
    %1041 = vmatpush.msra.mxu0 %v694
    %1042 = vmatpush.msra.mxu0 %v686
    %1043 = vmatpush.msra.mxu0 %v678
    %1044 = vmatpush.msra.mxu0 %v670
    %1045 = vmatpush.msra.mxu0 %v662
    %1046 = vmatmul.f32.gmra.mxu0 0.0
    %v1047 = vpop.f32.mrf.mxu0
    %v1048 = vadd.f32 %v1028, %v1047
    %1049 = vdwg.mxu0
    %1050 = vmatpush.msra.mxu0 %v655
    %1051 = vmatpush.msra.mxu0 %v647
    %1052 = vmatpush.msra.mxu0 %v639
    %1053 = vmatpush.msra.mxu0 %v631
    %1054 = vmatpush.msra.mxu0 %v623
    %1055 = vmatpush.msra.mxu0 %v615
    %1056 = vmatpush.msra.mxu0 %v607
    %1057 = vmatpush.msra.mxu0 %v599
    %1058 = vmatpush.msra.mxu0 %v591
    %1059 = vmatpush.msra.mxu0 %v583
    %1060 = vmatpush.msra.mxu0 %v575
    %1061 = vmatpush.msra.mxu0 %v567
    %1062 = vmatpush.msra.mxu0 %v559
    %1063 = vmatpush.msra.mxu0 %v551
    %1064 = vmatpush.msra.mxu0 %v543
    %1065 = vmatpush.msra.mxu0 %v535
    %1066 = vmatmul.f32.gmra.mxu0 0.0
    %v1067 = vpop.f32.mrf.mxu0
    %v1068 = vadd.f32 0.0, %v1067
    %1069 = vdwg.mxu0
    %1070 = vmatpush.msra.mxu0 %v783
    %1071 = vmatpush.msra.mxu0 %v775
    %1072 = vmatpush.msra.mxu0 %v767
    %1073 = vmatpush.msra.mxu0 %v759
    %1074 = vmatpush.msra.mxu0 %v751
    %1075 = vmatpush.msra.mxu0 %v743
    %1076 = vmatpush.msra.mxu0 %v735
    %1077 = vmatpush.msra.mxu0 %v727
    %1078 = vmatpush.msra.mxu0 %v719
    %1079 = vmatpush.msra.mxu0 %v711
    %1080 = vmatpush.msra.mxu0 %v703
    %1081 = vmatpush.msra.mxu0 %v695
    %1082 = vmatpush.msra.mxu0 %v687
    %1083 = vmatpush.msra.mxu0 %v679
    %1084 = vmatpush.msra.mxu0 %v671
    %1085 = vmatpush.msra.mxu0 %v663
    %1086 = vmatmul.f32.gmra.mxu0 0.0
    %v1087 = vpop.f32.mrf.mxu0
    %v1088 = vadd.f32 %v1068, %v1087
    %1089 = vdwg.mxu0
    %1090 = vmatpush.msra.mxu0 %v656
    %1091 = vmatpush.msra.mxu0 %v648
    %1092 = vmatpush.msra.mxu0 %v640
    %1093 = vmatpush.msra.mxu0 %v632
    %1094 = vmatpush.msra.mxu0 %v624
    %1095 = vmatpush.msra.mxu0 %v616
    %1096 = vmatpush.msra.mxu0 %v608
    %1097 = vmatpush.msra.mxu0 %v600
    %1098 = vmatpush.msra.mxu0 %v592
    %1099 = vmatpush.msra.mxu0 %v584
    %1100 = vmatpush.msra.mxu0 %v576
    %1101 = vmatpush.msra.mxu0 %v568
    %1102 = vmatpush.msra.mxu0 %v560
    %1103 = vmatpush.msra.mxu0 %v552
    %1104 = vmatpush.msra.mxu0 %v544
    %1105 = vmatpush.msra.mxu0 %v536
    %1106 = vmatmul.f32.gmra.mxu0 0.0
    %v1107 = vpop.f32.mrf.mxu0
    %v1108 = vadd.f32 0.0, %v1107
    %1109 = vdwg.mxu0
    %1110 = vmatpush.msra.mxu0 %v784
    %1111 = vmatpush.msra.mxu0 %v776
    %1112 = vmatpush.msra.mxu0 %v768
    %1113 = vmatpush.msra.mxu0 %v760
    %1114 = vmatpush.msra.mxu0 %v752
    %1115 = vmatpush.msra.mxu0 %v744
    %1116 = vmatpush.msra.mxu0 %v736
    %1117 = vmatpush.msra.mxu0 %v728
    %1118 = vmatpush.msra.mxu0 %v720
    %1119 = vmatpush.msra.mxu0 %v712
    %1120 = vmatpush.msra.mxu0 %v704
    %1121 = vmatpush.msra.mxu0 %v696
    %1122 = vmatpush.msra.mxu0 %v688
    %1123 = vmatpush.msra.mxu0 %v680
    %1124 = vmatpush.msra.mxu0 %v672
    %1125 = vmatpush.msra.mxu0 %v664
    %1126 = vmatmul.f32.gmra.mxu0 0.0
    %v1127 = vpop.f32.mrf.mxu0
    %v1128 = vadd.f32 %v1108, %v1127
    %1129 = vdwg.mxu0
    %1130 = vmatpush.msra.mxu0 %v657
    %1131 = vmatpush.msra.mxu0 %v649
    %1132 = vmatpush.msra.mxu0 %v641
    %1133 = vmatpush.msra.mxu0 %v633
    %1134 = vmatpush.msra.mxu0 %v625
    %1135 = vmatpush.msra.mxu0 %v617
    %1136 = vmatpush.msra.mxu0 %v609
    %1137 = vmatpush.msra.mxu0 %v601
    %1138 = vmatpush.msra.mxu0 %v593
    %1139 = vmatpush.msra.mxu0 %v585
    %1140 = vmatpush.msra.mxu0 %v577
    %1141 = vmatpush.msra.mxu0 %v569
    %1142 = vmatpush.msra.mxu0 %v561
    %1143 = vmatpush.msra.mxu0 %v553
    %1144 = vmatpush.msra.mxu0 %v545
    %1145 = vmatpush.msra.mxu0 %v537
    %1146 = vmatmul.f32.gmra.mxu0 0.0
    %v1147 = vpop.f32.mrf.mxu0
    %v1148 = vadd.f32 0.0, %v1147
    %1149 = vdwg.mxu0
    %1150 = vmatpush.msra.mxu0 %v785
    %1151 = vmatpush.msra.mxu0 %v777
    %1152 = vmatpush.msra.mxu0 %v769
    %1153 = vmatpush.msra.mxu0 %v761
    %1154 = vmatpush.msra.mxu0 %v753
    %1155 = vmatpush.msra.mxu0 %v745
    %1156 = vmatpush.msra.mxu0 %v737
    %1157 = vmatpush.msra.mxu0 %v729
    %1158 = vmatpush.msra.mxu0 %v721
    %1159 = vmatpush.msra.mxu0 %v713
    %1160 = vmatpush.msra.mxu0 %v705
    %1161 = vmatpush.msra.mxu0 %v697
    %1162 = vmatpush.msra.mxu0 %v689
    %1163 = vmatpush.msra.mxu0 %v681
    %1164 = vmatpush.msra.mxu0 %v673
    %1165 = vmatpush.msra.mxu0 %v665
    %1166 = vmatmul.f32.gmra.mxu0 0.0
    %v1167 = vpop.f32.mrf.mxu0
    %v1168 = vadd.f32 %v1148, %v1167
    %1169 = vdwg.mxu0
    %1170 = vmatpush.msra.mxu0 %v658
    %1171 = vmatpush.msra.mxu0 %v650
    %1172 = vmatpush.msra.mxu0 %v642
    %1173 = vmatpush.msra.mxu0 %v634
    %1174 = vmatpush.msra.mxu0 %v626
    %1175 = vmatpush.msra.mxu0 %v618
    %1176 = vmatpush.msra.mxu0 %v610
    %1177 = vmatpush.msra.mxu0 %v602
    %1178 = vmatpush.msra.mxu0 %v594
    %1179 = vmatpush.msra.mxu0 %v586
    %1180 = vmatpush.msra.mxu0 %v578
    %1181 = vmatpush.msra.mxu0 %v570
    %1182 = vmatpush.msra.mxu0 %v562
    %1183 = vmatpush.msra.mxu0 %v554
    %1184 = vmatpush.msra.mxu0 %v546
    %1185 = vmatpush.msra.mxu0 %v538
    %1186 = vmatmul.f32.gmra.mxu0 0.0
    %v1187 = vpop.f32.mrf.mxu0
    %v1188 = vadd.f32 0.0, %v1187
    %1189 = vdwg.mxu0
    %1190 = vmatpush.msra.mxu0 %v786
    %1191 = vmatpush.msra.mxu0 %v778
    %1192 = vmatpush.msra.mxu0 %v770
    %1193 = vmatpush.msra.mxu0 %v762
    %1194 = vmatpush.msra.mxu0 %v754
    %1195 = vmatpush.msra.mxu0 %v746
    %1196 = vmatpush.msra.mxu0 %v738
    %1197 = vmatpush.msra.mxu0 %v730
    %1198 = vmatpush.msra.mxu0 %v722
    %1199 = vmatpush.msra.mxu0 %v714
    %1200 = vmatpush.msra.mxu0 %v706
    %1201 = vmatpush.msra.mxu0 %v698
    %1202 = vmatpush.msra.mxu0 %v690
    %1203 = vmatpush.msra.mxu0 %v682
    %1204 = vmatpush.msra.mxu0 %v674
    %1205 = vmatpush.msra.mxu0 %v666
    %1206 = vmatmul.f32.gmra.mxu0 0.0
    %v1207 = vpop.f32.mrf.mxu0
    %v1208 = vadd.f32 %v1188, %v1207
    %1209 = vdwg.mxu0
    %v1210 = vadd.f32 %v882, %v928
    %v1211 = vadd.f32 %v883, %v968
    %v1212 = vadd.f32 %v884, %v1008
    %v1213 = vadd.f32 %v885, %v1048
    %v1214 = vadd.f32 %v886, %v1088
    %v1215 = vadd.f32 %v887, %v1128
    %v1216 = vadd.f32 %v888, %v1168
    %v1217 = vadd.f32 %v889, %v1208
    %v1218 = vxor.u32 %v1210, 2147483648
    %v1219 = vxor.u32 %v1211, 2147483648
    %v1220 = vmul.f32 %v1218, 1.442695
    %v1221 = vpow.pop %v1220
    %v1222 = vmul.f32 %v1219, 1.442695
    %v1223 = vpow.pop %v1222
    %v1224 = vadd.f32 %v1221, 1.0
    %v1225 = vadd.f32 %v1223, 1.0
    %v1226 = vrcp.pop %v1224
    %v1227 = vmul.f32 %v1224, %v1226
    %v1228 = vsub.f32 1.0, %v1227
    %v1229 = vmul.f32 %v1226, %v1228
    %v1230 = vadd.f32 %v1226, %v1229
    %vm1231 = vweird.f32 %v1224
    %vm1232 = vweird.f32 %v1226
    %vm1233 = vmor %vm1231, %vm1232
    %v1234 = vsel %vm1233, %v1226, %v1230
    %v1235 = vand.u32 2147483647, %v1224
    %vm1236 = vcmp.eq.f32.partialorder %v1235, 8.507059e+37
    %v1237 = vand.u32 %v1224, 2147483648
    %v1238 = vor.u32 1.1754944e-38, %v1237
    %v1239 = vsel %vm1236, %v1238, %v1234
    %v1240 = vmul.f32 1.0, %v1239
    %v1241 = vrcp.pop %v1225
    %v1242 = vmul.f32 %v1225, %v1241
    %v1243 = vsub.f32 1.0, %v1242
    %v1244 = vmul.f32 %v1241, %v1243
    %v1245 = vadd.f32 %v1241, %v1244
    %vm1246 = vweird.f32 %v1225
    %vm1247 = vweird.f32 %v1241
    %vm1248 = vmor %vm1246, %vm1247
    %v1249 = vsel %vm1248, %v1241, %v1245
    %v1250 = vand.u32 2147483647, %v1225
    %vm1251 = vcmp.eq.f32.partialorder %v1250, 8.507059e+37
    %v1252 = vand.u32 %v1225, 2147483648
    %v1253 = vor.u32 1.1754944e-38, %v1252
    %v1254 = vsel %vm1251, %v1253, %v1249
    %v1255 = vmul.f32 1.0, %v1254
    %v1256 = vxor.u32 %v1212, 2147483648
    %v1257 = vxor.u32 %v1213, 2147483648
    %v1258 = vmul.f32 %v1256, 1.442695
    %v1259 = vpow.pop %v1258
    %v1260 = vmul.f32 %v1257, 1.442695
    %v1261 = vpow.pop %v1260
    %v1262 = vadd.f32 %v1259, 1.0
    %v1263 = vadd.f32 %v1261, 1.0
    %v1264 = vrcp.pop %v1262
    %v1265 = vmul.f32 %v1262, %v1264
    %v1266 = vsub.f32 1.0, %v1265
    %v1267 = vmul.f32 %v1264, %v1266
    %v1268 = vadd.f32 %v1264, %v1267
    %vm1269 = vweird.f32 %v1262
    %vm1270 = vweird.f32 %v1264
    %vm1271 = vmor %vm1269, %vm1270
    %v1272 = vsel %vm1271, %v1264, %v1268
    %v1273 = vand.u32 2147483647, %v1262
    %vm1274 = vcmp.eq.f32.partialorder %v1273, 8.507059e+37
    %v1275 = vand.u32 %v1262, 2147483648
    %v1276 = vor.u32 1.1754944e-38, %v1275
    %v1277 = vsel %vm1274, %v1276, %v1272
    %v1278 = vmul.f32 1.0, %v1277
    %v1279 = vrcp.pop %v1263
    %v1280 = vmul.f32 %v1263, %v1279
    %v1281 = vsub.f32 1.0, %v1280
    %v1282 = vmul.f32 %v1279, %v1281
    %v1283 = vadd.f32 %v1279, %v1282
    %vm1284 = vweird.f32 %v1263
    %vm1285 = vweird.f32 %v1279
    %vm1286 = vmor %vm1284, %vm1285
    %v1287 = vsel %vm1286, %v1279, %v1283
    %v1288 = vand.u32 2147483647, %v1263
    %vm1289 = vcmp.eq.f32.partialorder %v1288, 8.507059e+37
    %v1290 = vand.u32 %v1263, 2147483648
    %v1291 = vor.u32 1.1754944e-38, %v1290
    %v1292 = vsel %vm1289, %v1291, %v1287
    %v1293 = vmul.f32 1.0, %v1292
    %v1294 = vtanh.pop %v1214
    %v1295 = vtanh.pop %v1215
    %v1296 = vxor.u32 %v1216, 2147483648
    %v1297 = vxor.u32 %v1217, 2147483648
    %v1298 = vmul.f32 %v1296, 1.442695
    %v1299 = vpow.pop %v1298
    %v1300 = vmul.f32 %v1297, 1.442695
    %v1301 = vpow.pop %v1300
    %v1302 = vadd.f32 %v1299, 1.0
    %v1303 = vadd.f32 %v1301, 1.0
    %v1304 = vrcp.pop %v1302
    %v1305 = vmul.f32 %v1302, %v1304
    %v1306 = vsub.f32 1.0, %v1305
    %v1307 = vmul.f32 %v1304, %v1306
    %v1308 = vadd.f32 %v1304, %v1307
    %vm1309 = vweird.f32 %v1302
    %vm1310 = vweird.f32 %v1304
    %vm1311 = vmor %vm1309, %vm1310
    %v1312 = vsel %vm1311, %v1304, %v1308
    %v1313 = vand.u32 2147483647, %v1302
    %vm1314 = vcmp.eq.f32.partialorder %v1313, 8.507059e+37
    %v1315 = vand.u32 %v1302, 2147483648
    %v1316 = vor.u32 1.1754944e-38, %v1315
    %v1317 = vsel %vm1314, %v1316, %v1312
    %v1318 = vmul.f32 1.0, %v1317
    %v1319 = vrcp.pop %v1303
    %v1320 = vmul.f32 %v1303, %v1319
    %v1321 = vsub.f32 1.0, %v1320
    %v1322 = vmul.f32 %v1319, %v1321
    %v1323 = vadd.f32 %v1319, %v1322
    %vm1324 = vweird.f32 %v1303
    %vm1325 = vweird.f32 %v1319
    %vm1326 = vmor %vm1324, %vm1325
    %v1327 = vsel %vm1326, %v1319, %v1323
    %v1328 = vand.u32 2147483647, %v1303
    %vm1329 = vcmp.eq.f32.partialorder %v1328, 8.507059e+37
    %v1330 = vand.u32 %v1303, 2147483648
    %v1331 = vor.u32 1.1754944e-38, %v1330
    %v1332 = vsel %vm1329, %v1331, %v1327
    %v1333 = vmul.f32 1.0, %v1332
    %v1334 = vmul.f32 %v1278, 0.0
    %v1335 = vmul.f32 %v1293, 0.0
    %v1336 = vmul.f32 %v1240, %v1294
    %v1337 = vmul.f32 %v1255, %v1295
    %v1338 = vadd.f32 %v1334, %v1336
    %v1339 = vadd.f32 %v1335, %v1337
    %v1340 = vtanh.pop %v1338
    %v1341 = vtanh.pop %v1339
    %v1342 = vmul.f32 %v1318, %v1340
    %v1343 = vmul.f32 %v1333, %v1341
    %v1344 = vld [vmem:[#allocation3] sm:$0xff]
    %s1345 = scalar_lea.vmem [#allocation3], 56
    %v1346 = vld [vmem:[%s1345] sm:$0xff]
    %v1347 = vsub.f32 1.0, %v1344
    %v1348 = vsub.f32 1.0, %v1346
    %v1349 = vmul.f32 %v1344, %v1342
    %v1350 = vmul.f32 %v1346, %v1343
    %v1351 = vmul.f32 %v1344, %v1338
    %v1352 = vmul.f32 %v1346, %v1339
    %1353 = vst [vmem:[#allocation9] sm:$0xff] %v1349
    %s1354 = scalar_lea.vmem [#allocation10], 56
    %1355 = vst [vmem:[%s1354] sm:$0xff] %v1350
    %v1356 = vmul.f32 %v1347, 0.0
    %v1357 = vmul.f32 %v1348, 0.0
    %v1358 = vadd.f32 %v1349, %v1356
    %v1359 = vadd.f32 %v1350, %v1357
    %v1360 = vadd.f32 %v1351, %v1356
    %v1361 = vadd.f32 %v1352, %v1357
    %s1362 = smul.u32 1, 8
    %s1363 = smul.addr %s1362, 8
    %s1364 = scalar_lea.vmem [#allocation2], %s1363
    %v1365 = vld [vmem:[%s1364] sm:$0xff]
    %v1366 = vld [vmem:[%s1364 + $0x8] sm:$0xff]
    %v1367 = vld [vmem:[%s1364 + $0x10] sm:$0xff]
    %v1368 = vld [vmem:[%s1364 + $0x18] sm:$0xff]
    %v1369 = vld [vmem:[%s1364 + $0x20] sm:$0xff]
    %v1370 = vld [vmem:[%s1364 + $0x28] sm:$0xff]
    %v1371 = vld [vmem:[%s1364 + $0x30] sm:$0xff]
    %v1372 = vld [vmem:[%s1364 + $0x38] sm:$0xff]
    %s1373 = smul.u32 6, 8
    %s1374 = smul.addr %s1373, 8
    %s1375 = scalar_lea.vmem [#allocation2], %s1374
    %v1376 = vld [vmem:[%s1375] sm:$0xff]
    %v1377 = vld [vmem:[%s1375 + $0x8] sm:$0xff]
    %v1378 = vld [vmem:[%s1375 + $0x10] sm:$0xff]
    %v1379 = vld [vmem:[%s1375 + $0x18] sm:$0xff]
    %v1380 = vld [vmem:[%s1375 + $0x20] sm:$0xff]
    %v1381 = vld [vmem:[%s1375 + $0x28] sm:$0xff]
    %v1382 = vld [vmem:[%s1375 + $0x30] sm:$0xff]
    %v1383 = vld [vmem:[%s1375 + $0x38] sm:$0xff]
    %v1384 = vsel %vm852, %v1365, %v1376
    %v1385 = vsel %vm853, %v1366, %v1377
    %v1386 = vsel %vm854, %v1367, %v1378
    %v1387 = vsel %vm855, %v1368, %v1379
    %v1388 = vsel %vm856, %v1369, %v1380
    %v1389 = vsel %vm857, %v1370, %v1381
    %v1390 = vsel %vm858, %v1371, %v1382
    %v1391 = vsel %vm859, %v1372, %v1383
    %1392 = vmatpush.msra.mxu0 %v651
    %1393 = vmatpush.msra.mxu0 %v643
    %1394 = vmatpush.msra.mxu0 %v635
    %1395 = vmatpush.msra.mxu0 %v627
    %1396 = vmatpush.msra.mxu0 %v619
    %1397 = vmatpush.msra.mxu0 %v611
    %1398 = vmatpush.msra.mxu0 %v603
    %1399 = vmatpush.msra.mxu0 %v595
    %1400 = vmatpush.msra.mxu0 %v587
    %1401 = vmatpush.msra.mxu0 %v579
    %1402 = vmatpush.msra.mxu0 %v571
    %1403 = vmatpush.msra.mxu0 %v563
    %1404 = vmatpush.msra.mxu0 %v555
    %1405 = vmatpush.msra.mxu0 %v547
    %1406 = vmatpush.msra.mxu0 %v539
    %1407 = vmatpush.msra.mxu0 %v531
    %1408 = vmatmul.f32.gmra.mxu0 %v1358
    %v1409 = vpop.f32.mrf.mxu0
    %v1410 = vadd.f32 0.0, %v1409
    %1411 = vdwg.mxu0
    %1412 = vmatpush.msra.mxu0 %v779
    %1413 = vmatpush.msra.mxu0 %v771
    %1414 = vmatpush.msra.mxu0 %v763
    %1415 = vmatpush.msra.mxu0 %v755
    %1416 = vmatpush.msra.mxu0 %v747
    %1417 = vmatpush.msra.mxu0 %v739
    %1418 = vmatpush.msra.mxu0 %v731
    %1419 = vmatpush.msra.mxu0 %v723
    %1420 = vmatpush.msra.mxu0 %v715
    %1421 = vmatpush.msra.mxu0 %v707
    %1422 = vmatpush.msra.mxu0 %v699
    %1423 = vmatpush.msra.mxu0 %v691
    %1424 = vmatpush.msra.mxu0 %v683
    %1425 = vmatpush.msra.mxu0 %v675
    %1426 = vmatpush.msra.mxu0 %v667
    %1427 = vmatpush.msra.mxu0 %v659
    %1428 = vmatmul.f32.gmra.mxu0 %v1359
    %v1429 = vpop.f32.mrf.mxu0
    %v1430 = vadd.f32 %v1410, %v1429
    %1431 = vdwg.mxu0
    %1432 = vmatpush.msra.mxu0 %v652
    %1433 = vmatpush.msra.mxu0 %v644
    %1434 = vmatpush.msra.mxu0 %v636
    %1435 = vmatpush.msra.mxu0 %v628
    %1436 = vmatpush.msra.mxu0 %v620
    %1437 = vmatpush.msra.mxu0 %v612
    %1438 = vmatpush.msra.mxu0 %v604
    %1439 = vmatpush.msra.mxu0 %v596
    %1440 = vmatpush.msra.mxu0 %v588
    %1441 = vmatpush.msra.mxu0 %v580
    %1442 = vmatpush.msra.mxu0 %v572
    %1443 = vmatpush.msra.mxu0 %v564
    %1444 = vmatpush.msra.mxu0 %v556
    %1445 = vmatpush.msra.mxu0 %v548
    %1446 = vmatpush.msra.mxu0 %v540
    %1447 = vmatpush.msra.mxu0 %v532
    %1448 = vmatmul.f32.gmra.mxu0 %v1358
    %v1449 = vpop.f32.mrf.mxu0
    %v1450 = vadd.f32 0.0, %v1449
    %1451 = vdwg.mxu0
    %1452 = vmatpush.msra.mxu0 %v780
    %1453 = vmatpush.msra.mxu0 %v772
    %1454 = vmatpush.msra.mxu0 %v764
    %1455 = vmatpush.msra.mxu0 %v756
    %1456 = vmatpush.msra.mxu0 %v748
    %1457 = vmatpush.msra.mxu0 %v740
    %1458 = vmatpush.msra.mxu0 %v732
    %1459 = vmatpush.msra.mxu0 %v724
    %1460 = vmatpush.msra.mxu0 %v716
    %1461 = vmatpush.msra.mxu0 %v708
    %1462 = vmatpush.msra.mxu0 %v700
    %1463 = vmatpush.msra.mxu0 %v692
    %1464 = vmatpush.msra.mxu0 %v684
    %1465 = vmatpush.msra.mxu0 %v676
    %1466 = vmatpush.msra.mxu0 %v668
    %1467 = vmatpush.msra.mxu0 %v660
    %1468 = vmatmul.f32.gmra.mxu0 %v1359
    %v1469 = vpop.f32.mrf.mxu0
    %v1470 = vadd.f32 %v1450, %v1469
    %1471 = vdwg.mxu0
    %1472 = vmatpush.msra.mxu0 %v653
    %1473 = vmatpush.msra.mxu0 %v645
    %1474 = vmatpush.msra.mxu0 %v637
    %1475 = vmatpush.msra.mxu0 %v629
    %1476 = vmatpush.msra.mxu0 %v621
    %1477 = vmatpush.msra.mxu0 %v613
    %1478 = vmatpush.msra.mxu0 %v605
    %1479 = vmatpush.msra.mxu0 %v597
    %1480 = vmatpush.msra.mxu0 %v589
    %1481 = vmatpush.msra.mxu0 %v581
    %1482 = vmatpush.msra.mxu0 %v573
    %1483 = vmatpush.msra.mxu0 %v565
    %1484 = vmatpush.msra.mxu0 %v557
    %1485 = vmatpush.msra.mxu0 %v549
    %1486 = vmatpush.msra.mxu0 %v541
    %1487 = vmatpush.msra.mxu0 %v533
    %1488 = vmatmul.f32.gmra.mxu0 %v1358
    %v1489 = vpop.f32.mrf.mxu0
    %v1490 = vadd.f32 0.0, %v1489
    %1491 = vdwg.mxu0
    %1492 = vmatpush.msra.mxu0 %v781
    %1493 = vmatpush.msra.mxu0 %v773
    %1494 = vmatpush.msra.mxu0 %v765
    %1495 = vmatpush.msra.mxu0 %v757
    %1496 = vmatpush.msra.mxu0 %v749
    %1497 = vmatpush.msra.mxu0 %v741
    %1498 = vmatpush.msra.mxu0 %v733
    %1499 = vmatpush.msra.mxu0 %v725
    %1500 = vmatpush.msra.mxu0 %v717
    %1501 = vmatpush.msra.mxu0 %v709
    %1502 = vmatpush.msra.mxu0 %v701
    %1503 = vmatpush.msra.mxu0 %v693
    %1504 = vmatpush.msra.mxu0 %v685
    %1505 = vmatpush.msra.mxu0 %v677
    %1506 = vmatpush.msra.mxu0 %v669
    %1507 = vmatpush.msra.mxu0 %v661
    %1508 = vmatmul.f32.gmra.mxu0 %v1359
    %v1509 = vpop.f32.mrf.mxu0
    %v1510 = vadd.f32 %v1490, %v1509
    %1511 = vdwg.mxu0
    %1512 = vmatpush.msra.mxu0 %v654
    %1513 = vmatpush.msra.mxu0 %v646
    %1514 = vmatpush.msra.mxu0 %v638
    %1515 = vmatpush.msra.mxu0 %v630
    %1516 = vmatpush.msra.mxu0 %v622
    %1517 = vmatpush.msra.mxu0 %v614
    %1518 = vmatpush.msra.mxu0 %v606
    %1519 = vmatpush.msra.mxu0 %v598
    %1520 = vmatpush.msra.mxu0 %v590
    %1521 = vmatpush.msra.mxu0 %v582
    %1522 = vmatpush.msra.mxu0 %v574
    %1523 = vmatpush.msra.mxu0 %v566
    %1524 = vmatpush.msra.mxu0 %v558
    %1525 = vmatpush.msra.mxu0 %v550
    %1526 = vmatpush.msra.mxu0 %v542
    %1527 = vmatpush.msra.mxu0 %v534
    %1528 = vmatmul.f32.gmra.mxu0 %v1358
    %v1529 = vpop.f32.mrf.mxu0
    %v1530 = vadd.f32 0.0, %v1529
    %1531 = vdwg.mxu0
    %1532 = vmatpush.msra.mxu0 %v782
    %1533 = vmatpush.msra.mxu0 %v774
    %1534 = vmatpush.msra.mxu0 %v766
    %1535 = vmatpush.msra.mxu0 %v758
    %1536 = vmatpush.msra.mxu0 %v750
    %1537 = vmatpush.msra.mxu0 %v742
    %1538 = vmatpush.msra.mxu0 %v734
    %1539 = vmatpush.msra.mxu0 %v726
    %1540 = vmatpush.msra.mxu0 %v718
    %1541 = vmatpush.msra.mxu0 %v710
    %1542 = vmatpush.msra.mxu0 %v702
    %1543 = vmatpush.msra.mxu0 %v694
    %1544 = vmatpush.msra.mxu0 %v686
    %1545 = vmatpush.msra.mxu0 %v678
    %1546 = vmatpush.msra.mxu0 %v670
    %1547 = vmatpush.msra.mxu0 %v662
    %1548 = vmatmul.f32.gmra.mxu0 %v1359
    %v1549 = vpop.f32.mrf.mxu0
    %v1550 = vadd.f32 %v1530, %v1549
    %1551 = vdwg.mxu0
    %1552 = vmatpush.msra.mxu0 %v655
    %1553 = vmatpush.msra.mxu0 %v647
    %1554 = vmatpush.msra.mxu0 %v639
    %1555 = vmatpush.msra.mxu0 %v631
    %1556 = vmatpush.msra.mxu0 %v623
    %1557 = vmatpush.msra.mxu0 %v615
    %1558 = vmatpush.msra.mxu0 %v607
    %1559 = vmatpush.msra.mxu0 %v599
    %1560 = vmatpush.msra.mxu0 %v591
    %1561 = vmatpush.msra.mxu0 %v583
    %1562 = vmatpush.msra.mxu0 %v575
    %1563 = vmatpush.msra.mxu0 %v567
    %1564 = vmatpush.msra.mxu0 %v559
    %1565 = vmatpush.msra.mxu0 %v551
    %1566 = vmatpush.msra.mxu0 %v543
    %1567 = vmatpush.msra.mxu0 %v535
    %1568 = vmatmul.f32.gmra.mxu0 %v1358
    %v1569 = vpop.f32.mrf.mxu0
    %v1570 = vadd.f32 0.0, %v1569
    %1571 = vdwg.mxu0
    %1572 = vmatpush.msra.mxu0 %v783
    %1573 = vmatpush.msra.mxu0 %v775
    %1574 = vmatpush.msra.mxu0 %v767
    %1575 = vmatpush.msra.mxu0 %v759
    %1576 = vmatpush.msra.mxu0 %v751
    %1577 = vmatpush.msra.mxu0 %v743
    %1578 = vmatpush.msra.mxu0 %v735
    %1579 = vmatpush.msra.mxu0 %v727
    %1580 = vmatpush.msra.mxu0 %v719
    %1581 = vmatpush.msra.mxu0 %v711
    %1582 = vmatpush.msra.mxu0 %v703
    %1583 = vmatpush.msra.mxu0 %v695
    %1584 = vmatpush.msra.mxu0 %v687
    %1585 = vmatpush.msra.mxu0 %v679
    %1586 = vmatpush.msra.mxu0 %v671
    %1587 = vmatpush.msra.mxu0 %v663
    %1588 = vmatmul.f32.gmra.mxu0 %v1359
    %v1589 = vpop.f32.mrf.mxu0
    %v1590 = vadd.f32 %v1570, %v1589
    %1591 = vdwg.mxu0
    %1592 = vmatpush.msra.mxu0 %v656
    %1593 = vmatpush.msra.mxu0 %v648
    %1594 = vmatpush.msra.mxu0 %v640
    %1595 = vmatpush.msra.mxu0 %v632
    %1596 = vmatpush.msra.mxu0 %v624
    %1597 = vmatpush.msra.mxu0 %v616
    %1598 = vmatpush.msra.mxu0 %v608
    %1599 = vmatpush.msra.mxu0 %v600
    %1600 = vmatpush.msra.mxu0 %v592
    %1601 = vmatpush.msra.mxu0 %v584
    %1602 = vmatpush.msra.mxu0 %v576
    %1603 = vmatpush.msra.mxu0 %v568
    %1604 = vmatpush.msra.mxu0 %v560
    %1605 = vmatpush.msra.mxu0 %v552
    %1606 = vmatpush.msra.mxu0 %v544
    %1607 = vmatpush.msra.mxu0 %v536
    %1608 = vmatmul.f32.gmra.mxu0 %v1358
    %v1609 = vpop.f32.mrf.mxu0
    %v1610 = vadd.f32 0.0, %v1609
    %1611 = vdwg.mxu0
    %1612 = vmatpush.msra.mxu0 %v784
    %1613 = vmatpush.msra.mxu0 %v776
    %1614 = vmatpush.msra.mxu0 %v768
    %1615 = vmatpush.msra.mxu0 %v760
    %1616 = vmatpush.msra.mxu0 %v752
    %1617 = vmatpush.msra.mxu0 %v744
    %1618 = vmatpush.msra.mxu0 %v736
    %1619 = vmatpush.msra.mxu0 %v728
    %1620 = vmatpush.msra.mxu0 %v720
    %1621 = vmatpush.msra.mxu0 %v712
    %1622 = vmatpush.msra.mxu0 %v704
    %1623 = vmatpush.msra.mxu0 %v696
    %1624 = vmatpush.msra.mxu0 %v688
    %1625 = vmatpush.msra.mxu0 %v680
    %1626 = vmatpush.msra.mxu0 %v672
    %1627 = vmatpush.msra.mxu0 %v664
    %1628 = vmatmul.f32.gmra.mxu0 %v1359
    %v1629 = vpop.f32.mrf.mxu0
    %v1630 = vadd.f32 %v1610, %v1629
    %1631 = vdwg.mxu0
    %1632 = vmatpush.msra.mxu0 %v657
    %1633 = vmatpush.msra.mxu0 %v649
    %1634 = vmatpush.msra.mxu0 %v641
    %1635 = vmatpush.msra.mxu0 %v633
    %1636 = vmatpush.msra.mxu0 %v625
    %1637 = vmatpush.msra.mxu0 %v617
    %1638 = vmatpush.msra.mxu0 %v609
    %1639 = vmatpush.msra.mxu0 %v601
    %1640 = vmatpush.msra.mxu0 %v593
    %1641 = vmatpush.msra.mxu0 %v585
    %1642 = vmatpush.msra.mxu0 %v577
    %1643 = vmatpush.msra.mxu0 %v569
    %1644 = vmatpush.msra.mxu0 %v561
    %1645 = vmatpush.msra.mxu0 %v553
    %1646 = vmatpush.msra.mxu0 %v545
    %1647 = vmatpush.msra.mxu0 %v537
    %1648 = vmatmul.f32.gmra.mxu0 %v1358
    %v1649 = vpop.f32.mrf.mxu0
    %v1650 = vadd.f32 0.0, %v1649
    %1651 = vdwg.mxu0
    %1652 = vmatpush.msra.mxu0 %v785
    %1653 = vmatpush.msra.mxu0 %v777
    %1654 = vmatpush.msra.mxu0 %v769
    %1655 = vmatpush.msra.mxu0 %v761
    %1656 = vmatpush.msra.mxu0 %v753
    %1657 = vmatpush.msra.mxu0 %v745
    %1658 = vmatpush.msra.mxu0 %v737
    %1659 = vmatpush.msra.mxu0 %v729
    %1660 = vmatpush.msra.mxu0 %v721
    %1661 = vmatpush.msra.mxu0 %v713
    %1662 = vmatpush.msra.mxu0 %v705
    %1663 = vmatpush.msra.mxu0 %v697
    %1664 = vmatpush.msra.mxu0 %v689
    %1665 = vmatpush.msra.mxu0 %v681
    %1666 = vmatpush.msra.mxu0 %v673
    %1667 = vmatpush.msra.mxu0 %v665
    %1668 = vmatmul.f32.gmra.mxu0 %v1359
    %v1669 = vpop.f32.mrf.mxu0
    %v1670 = vadd.f32 %v1650, %v1669
    %1671 = vdwg.mxu0
    %1672 = vmatpush.msra.mxu0 %v658
    %1673 = vmatpush.msra.mxu0 %v650
    %1674 = vmatpush.msra.mxu0 %v642
    %1675 = vmatpush.msra.mxu0 %v634
    %1676 = vmatpush.msra.mxu0 %v626
    %1677 = vmatpush.msra.mxu0 %v618
    %1678 = vmatpush.msra.mxu0 %v610
    %1679 = vmatpush.msra.mxu0 %v602
    %1680 = vmatpush.msra.mxu0 %v594
    %1681 = vmatpush.msra.mxu0 %v586
    %1682 = vmatpush.msra.mxu0 %v578
    %1683 = vmatpush.msra.mxu0 %v570
    %1684 = vmatpush.msra.mxu0 %v562
    %1685 = vmatpush.msra.mxu0 %v554
    %1686 = vmatpush.msra.mxu0 %v546
    %1687 = vmatpush.msra.mxu0 %v538
    %1688 = vmatmul.f32.gmra.mxu0 %v1358
    %v1689 = vpop.f32.mrf.mxu0
    %v1690 = vadd.f32 0.0, %v1689
    %1691 = vdwg.mxu0
    %1692 = vmatpush.msra.mxu0 %v786
    %1693 = vmatpush.msra.mxu0 %v778
    %1694 = vmatpush.msra.mxu0 %v770
    %1695 = vmatpush.msra.mxu0 %v762
    %1696 = vmatpush.msra.mxu0 %v754
    %1697 = vmatpush.msra.mxu0 %v746
    %1698 = vmatpush.msra.mxu0 %v738
    %1699 = vmatpush.msra.mxu0 %v730
    %1700 = vmatpush.msra.mxu0 %v722
    %1701 = vmatpush.msra.mxu0 %v714
    %1702 = vmatpush.msra.mxu0 %v706
    %1703 = vmatpush.msra.mxu0 %v698
    %1704 = vmatpush.msra.mxu0 %v690
    %1705 = vmatpush.msra.mxu0 %v682
    %1706 = vmatpush.msra.mxu0 %v674
    %1707 = vmatpush.msra.mxu0 %v666
    %1708 = vmatmul.f32.gmra.mxu0 %v1359
    %v1709 = vpop.f32.mrf.mxu0
    %v1710 = vadd.f32 %v1690, %v1709
    %1711 = vdwg.mxu0
    %v1712 = vadd.f32 %v1384, %v1430
    %v1713 = vadd.f32 %v1385, %v1470
    %v1714 = vadd.f32 %v1386, %v1510
    %v1715 = vadd.f32 %v1387, %v1550
    %v1716 = vadd.f32 %v1388, %v1590
    %v1717 = vadd.f32 %v1389, %v1630
    %v1718 = vadd.f32 %v1390, %v1670
    %v1719 = vadd.f32 %v1391, %v1710
    %v1720 = vxor.u32 %v1712, 2147483648
    %v1721 = vxor.u32 %v1713, 2147483648
    %v1722 = vmul.f32 %v1720, 1.442695
    %v1723 = vpow.pop %v1722
    %v1724 = vmul.f32 %v1721, 1.442695
    %v1725 = vpow.pop %v1724
    %v1726 = vadd.f32 %v1723, 1.0
    %v1727 = vadd.f32 %v1725, 1.0
    %v1728 = vrcp.pop %v1726
    %v1729 = vmul.f32 %v1726, %v1728
    %v1730 = vsub.f32 1.0, %v1729
    %v1731 = vmul.f32 %v1728, %v1730
    %v1732 = vadd.f32 %v1728, %v1731
    %vm1733 = vweird.f32 %v1726
    %vm1734 = vweird.f32 %v1728
    %vm1735 = vmor %vm1733, %vm1734
    %v1736 = vsel %vm1735, %v1728, %v1732
    %v1737 = vand.u32 2147483647, %v1726
    %vm1738 = vcmp.eq.f32.partialorder %v1737, 8.507059e+37
    %v1739 = vand.u32 %v1726, 2147483648
    %v1740 = vor.u32 1.1754944e-38, %v1739
    %v1741 = vsel %vm1738, %v1740, %v1736
    %v1742 = vmul.f32 1.0, %v1741
    %v1743 = vrcp.pop %v1727
    %v1744 = vmul.f32 %v1727, %v1743
    %v1745 = vsub.f32 1.0, %v1744
    %v1746 = vmul.f32 %v1743, %v1745
    %v1747 = vadd.f32 %v1743, %v1746
    %vm1748 = vweird.f32 %v1727
    %vm1749 = vweird.f32 %v1743
    %vm1750 = vmor %vm1748, %vm1749
    %v1751 = vsel %vm1750, %v1743, %v1747
    %v1752 = vand.u32 2147483647, %v1727
    %vm1753 = vcmp.eq.f32.partialorder %v1752, 8.507059e+37
    %v1754 = vand.u32 %v1727, 2147483648
    %v1755 = vor.u32 1.1754944e-38, %v1754
    %v1756 = vsel %vm1753, %v1755, %v1751
    %v1757 = vmul.f32 1.0, %v1756
    %v1758 = vxor.u32 %v1714, 2147483648
    %v1759 = vxor.u32 %v1715, 2147483648
    %v1760 = vmul.f32 %v1758, 1.442695
    %v1761 = vpow.pop %v1760
    %v1762 = vmul.f32 %v1759, 1.442695
    %v1763 = vpow.pop %v1762
    %v1764 = vadd.f32 %v1761, 1.0
    %v1765 = vadd.f32 %v1763, 1.0
    %v1766 = vrcp.pop %v1764
    %v1767 = vmul.f32 %v1764, %v1766
    %v1768 = vsub.f32 1.0, %v1767
    %v1769 = vmul.f32 %v1766, %v1768
    %v1770 = vadd.f32 %v1766, %v1769
    %vm1771 = vweird.f32 %v1764
    %vm1772 = vweird.f32 %v1766
    %vm1773 = vmor %vm1771, %vm1772
    %v1774 = vsel %vm1773, %v1766, %v1770
    %v1775 = vand.u32 2147483647, %v1764
    %vm1776 = vcmp.eq.f32.partialorder %v1775, 8.507059e+37
    %v1777 = vand.u32 %v1764, 2147483648
    %v1778 = vor.u32 1.1754944e-38, %v1777
    %v1779 = vsel %vm1776, %v1778, %v1774
    %v1780 = vmul.f32 1.0, %v1779
    %v1781 = vrcp.pop %v1765
    %v1782 = vmul.f32 %v1765, %v1781
    %v1783 = vsub.f32 1.0, %v1782
    %v1784 = vmul.f32 %v1781, %v1783
    %v1785 = vadd.f32 %v1781, %v1784
    %vm1786 = vweird.f32 %v1765
    %vm1787 = vweird.f32 %v1781
    %vm1788 = vmor %vm1786, %vm1787
    %v1789 = vsel %vm1788, %v1781, %v1785
    %v1790 = vand.u32 2147483647, %v1765
    %vm1791 = vcmp.eq.f32.partialorder %v1790, 8.507059e+37
    %v1792 = vand.u32 %v1765, 2147483648
    %v1793 = vor.u32 1.1754944e-38, %v1792
    %v1794 = vsel %vm1791, %v1793, %v1789
    %v1795 = vmul.f32 1.0, %v1794
    %v1796 = vtanh.pop %v1716
    %v1797 = vtanh.pop %v1717
    %v1798 = vxor.u32 %v1718, 2147483648
    %v1799 = vxor.u32 %v1719, 2147483648
    %v1800 = vmul.f32 %v1798, 1.442695
    %v1801 = vpow.pop %v1800
    %v1802 = vmul.f32 %v1799, 1.442695
    %v1803 = vpow.pop %v1802
    %v1804 = vadd.f32 %v1801, 1.0
    %v1805 = vadd.f32 %v1803, 1.0
    %v1806 = vrcp.pop %v1804
    %v1807 = vmul.f32 %v1804, %v1806
    %v1808 = vsub.f32 1.0, %v1807
    %v1809 = vmul.f32 %v1806, %v1808
    %v1810 = vadd.f32 %v1806, %v1809
    %vm1811 = vweird.f32 %v1804
    %vm1812 = vweird.f32 %v1806
    %vm1813 = vmor %vm1811, %vm1812
    %v1814 = vsel %vm1813, %v1806, %v1810
    %v1815 = vand.u32 2147483647, %v1804
    %vm1816 = vcmp.eq.f32.partialorder %v1815, 8.507059e+37
    %v1817 = vand.u32 %v1804, 2147483648
    %v1818 = vor.u32 1.1754944e-38, %v1817
    %v1819 = vsel %vm1816, %v1818, %v1814
    %v1820 = vmul.f32 1.0, %v1819
    %v1821 = vrcp.pop %v1805
    %v1822 = vmul.f32 %v1805, %v1821
    %v1823 = vsub.f32 1.0, %v1822
    %v1824 = vmul.f32 %v1821, %v1823
    %v1825 = vadd.f32 %v1821, %v1824
    %vm1826 = vweird.f32 %v1805
    %vm1827 = vweird.f32 %v1821
    %vm1828 = vmor %vm1826, %vm1827
    %v1829 = vsel %vm1828, %v1821, %v1825
    %v1830 = vand.u32 2147483647, %v1805
    %vm1831 = vcmp.eq.f32.partialorder %v1830, 8.507059e+37
    %v1832 = vand.u32 %v1805, 2147483648
    %v1833 = vor.u32 1.1754944e-38, %v1832
    %v1834 = vsel %vm1831, %v1833, %v1829
    %v1835 = vmul.f32 1.0, %v1834
    %v1836 = vmul.f32 %v1780, %v1360
    %v1837 = vmul.f32 %v1795, %v1361
    %v1838 = vmul.f32 %v1742, %v1796
    %v1839 = vmul.f32 %v1757, %v1797
    %v1840 = vadd.f32 %v1836, %v1838
    %v1841 = vadd.f32 %v1837, %v1839
    %v1842 = vtanh.pop %v1840
    %v1843 = vtanh.pop %v1841
    %v1844 = vmul.f32 %v1820, %v1842
    %v1845 = vmul.f32 %v1835, %v1843
    %s1846 = scalar_lea.vmem [#allocation3], 8
    %v1847 = vld [vmem:[%s1846] sm:$0xff]
    %s1848 = scalar_lea.vmem [#allocation3], 48
    %v1849 = vld [vmem:[%s1848] sm:$0xff]
    %v1850 = vsub.f32 1.0, %v1847
    %v1851 = vsub.f32 1.0, %v1849
    %v1852 = vmul.f32 %v1847, %v1844
    %v1853 = vmul.f32 %v1849, %v1845
    %v1854 = vmul.f32 %v1847, %v1840
    %v1855 = vmul.f32 %v1849, %v1841
    %s1856 = scalar_lea.vmem [#allocation9], 8
    %1857 = vst [vmem:[%s1856] sm:$0xff] %v1852
    %s1858 = scalar_lea.vmem [#allocation10], 48
    %1859 = vst [vmem:[%s1858] sm:$0xff] %v1853
    %v1860 = vmul.f32 %v1850, %v1358
    %v1861 = vmul.f32 %v1851, %v1359
    %v1862 = vadd.f32 %v1852, %v1860
    %v1863 = vadd.f32 %v1853, %v1861
    %v1864 = vmul.f32 %v1850, %v1360
    %v1865 = vmul.f32 %v1851, %v1361
    %v1866 = vadd.f32 %v1854, %v1864
    %v1867 = vadd.f32 %v1855, %v1865
    %s1868 = smul.u32 2, 8
    %s1869 = smul.addr %s1868, 8
    %s1870 = scalar_lea.vmem [#allocation2], %s1869
    %v1871 = vld [vmem:[%s1870] sm:$0xff]
    %v1872 = vld [vmem:[%s1870 + $0x8] sm:$0xff]
    %v1873 = vld [vmem:[%s1870 + $0x10] sm:$0xff]
    %v1874 = vld [vmem:[%s1870 + $0x18] sm:$0xff]
    %v1875 = vld [vmem:[%s1870 + $0x20] sm:$0xff]
    %v1876 = vld [vmem:[%s1870 + $0x28] sm:$0xff]
    %v1877 = vld [vmem:[%s1870 + $0x30] sm:$0xff]
    %v1878 = vld [vmem:[%s1870 + $0x38] sm:$0xff]
    %s1879 = smul.u32 5, 8
    %s1880 = smul.addr %s1879, 8
    %s1881 = scalar_lea.vmem [#allocation2], %s1880
    %v1882 = vld [vmem:[%s1881] sm:$0xff]
    %v1883 = vld [vmem:[%s1881 + $0x8] sm:$0xff]
    %v1884 = vld [vmem:[%s1881 + $0x10] sm:$0xff]
    %v1885 = vld [vmem:[%s1881 + $0x18] sm:$0xff]
    %v1886 = vld [vmem:[%s1881 + $0x20] sm:$0xff]
    %v1887 = vld [vmem:[%s1881 + $0x28] sm:$0xff]
    %v1888 = vld [vmem:[%s1881 + $0x30] sm:$0xff]
    %v1889 = vld [vmem:[%s1881 + $0x38] sm:$0xff]
    %v1890 = vsel %vm852, %v1871, %v1882
    %v1891 = vsel %vm853, %v1872, %v1883
    %v1892 = vsel %vm854, %v1873, %v1884
    %v1893 = vsel %vm855, %v1874, %v1885
    %v1894 = vsel %vm856, %v1875, %v1886
    %v1895 = vsel %vm857, %v1876, %v1887
    %v1896 = vsel %vm858, %v1877, %v1888
    %v1897 = vsel %vm859, %v1878, %v1889
    %1898 = vmatpush.msra.mxu0 %v651
    %1899 = vmatpush.msra.mxu0 %v643
    %1900 = vmatpush.msra.mxu0 %v635
    %1901 = vmatpush.msra.mxu0 %v627
    %1902 = vmatpush.msra.mxu0 %v619
    %1903 = vmatpush.msra.mxu0 %v611
    %1904 = vmatpush.msra.mxu0 %v603
    %1905 = vmatpush.msra.mxu0 %v595
    %1906 = vmatpush.msra.mxu0 %v587
    %1907 = vmatpush.msra.mxu0 %v579
    %1908 = vmatpush.msra.mxu0 %v571
    %1909 = vmatpush.msra.mxu0 %v563
    %1910 = vmatpush.msra.mxu0 %v555
    %1911 = vmatpush.msra.mxu0 %v547
    %1912 = vmatpush.msra.mxu0 %v539
    %1913 = vmatpush.msra.mxu0 %v531
    %1914 = vmatmul.f32.gmra.mxu0 %v1862
    %v1915 = vpop.f32.mrf.mxu0
    %v1916 = vadd.f32 0.0, %v1915
    %1917 = vdwg.mxu0
    %1918 = vmatpush.msra.mxu0 %v779
    %1919 = vmatpush.msra.mxu0 %v771
    %1920 = vmatpush.msra.mxu0 %v763
    %1921 = vmatpush.msra.mxu0 %v755
    %1922 = vmatpush.msra.mxu0 %v747
    %1923 = vmatpush.msra.mxu0 %v739
    %1924 = vmatpush.msra.mxu0 %v731
    %1925 = vmatpush.msra.mxu0 %v723
    %1926 = vmatpush.msra.mxu0 %v715
    %1927 = vmatpush.msra.mxu0 %v707
    %1928 = vmatpush.msra.mxu0 %v699
    %1929 = vmatpush.msra.mxu0 %v691
    %1930 = vmatpush.msra.mxu0 %v683
    %1931 = vmatpush.msra.mxu0 %v675
    %1932 = vmatpush.msra.mxu0 %v667
    %1933 = vmatpush.msra.mxu0 %v659
    %1934 = vmatmul.f32.gmra.mxu0 %v1863
    %v1935 = vpop.f32.mrf.mxu0
    %v1936 = vadd.f32 %v1916, %v1935
    %1937 = vdwg.mxu0
    %1938 = vmatpush.msra.mxu0 %v652
    %1939 = vmatpush.msra.mxu0 %v644
    %1940 = vmatpush.msra.mxu0 %v636
    %1941 = vmatpush.msra.mxu0 %v628
    %1942 = vmatpush.msra.mxu0 %v620
    %1943 = vmatpush.msra.mxu0 %v612
    %1944 = vmatpush.msra.mxu0 %v604
    %1945 = vmatpush.msra.mxu0 %v596
    %1946 = vmatpush.msra.mxu0 %v588
    %1947 = vmatpush.msra.mxu0 %v580
    %1948 = vmatpush.msra.mxu0 %v572
    %1949 = vmatpush.msra.mxu0 %v564
    %1950 = vmatpush.msra.mxu0 %v556
    %1951 = vmatpush.msra.mxu0 %v548
    %1952 = vmatpush.msra.mxu0 %v540
    %1953 = vmatpush.msra.mxu0 %v532
    %1954 = vmatmul.f32.gmra.mxu0 %v1862
    %v1955 = vpop.f32.mrf.mxu0
    %v1956 = vadd.f32 0.0, %v1955
    %1957 = vdwg.mxu0
    %1958 = vmatpush.msra.mxu0 %v780
    %1959 = vmatpush.msra.mxu0 %v772
    %1960 = vmatpush.msra.mxu0 %v764
    %1961 = vmatpush.msra.mxu0 %v756
    %1962 = vmatpush.msra.mxu0 %v748
    %1963 = vmatpush.msra.mxu0 %v740
    %1964 = vmatpush.msra.mxu0 %v732
    %1965 = vmatpush.msra.mxu0 %v724
    %1966 = vmatpush.msra.mxu0 %v716
    %1967 = vmatpush.msra.mxu0 %v708
    %1968 = vmatpush.msra.mxu0 %v700
    %1969 = vmatpush.msra.mxu0 %v692
    %1970 = vmatpush.msra.mxu0 %v684
    %1971 = vmatpush.msra.mxu0 %v676
    %1972 = vmatpush.msra.mxu0 %v668
    %1973 = vmatpush.msra.mxu0 %v660
    %1974 = vmatmul.f32.gmra.mxu0 %v1863
    %v1975 = vpop.f32.mrf.mxu0
    %v1976 = vadd.f32 %v1956, %v1975
    %1977 = vdwg.mxu0
    %1978 = vmatpush.msra.mxu0 %v653
    %1979 = vmatpush.msra.mxu0 %v645
    %1980 = vmatpush.msra.mxu0 %v637
    %1981 = vmatpush.msra.mxu0 %v629
    %1982 = vmatpush.msra.mxu0 %v621
    %1983 = vmatpush.msra.mxu0 %v613
    %1984 = vmatpush.msra.mxu0 %v605
    %1985 = vmatpush.msra.mxu0 %v597
    %1986 = vmatpush.msra.mxu0 %v589
    %1987 = vmatpush.msra.mxu0 %v581
    %1988 = vmatpush.msra.mxu0 %v573
    %1989 = vmatpush.msra.mxu0 %v565
    %1990 = vmatpush.msra.mxu0 %v557
    %1991 = vmatpush.msra.mxu0 %v549
    %1992 = vmatpush.msra.mxu0 %v541
    %1993 = vmatpush.msra.mxu0 %v533
    %1994 = vmatmul.f32.gmra.mxu0 %v1862
    %v1995 = vpop.f32.mrf.mxu0
    %v1996 = vadd.f32 0.0, %v1995
    %1997 = vdwg.mxu0
    %1998 = vmatpush.msra.mxu0 %v781
    %1999 = vmatpush.msra.mxu0 %v773
    %2000 = vmatpush.msra.mxu0 %v765
    %2001 = vmatpush.msra.mxu0 %v757
    %2002 = vmatpush.msra.mxu0 %v749
    %2003 = vmatpush.msra.mxu0 %v741
    %2004 = vmatpush.msra.mxu0 %v733
    %2005 = vmatpush.msra.mxu0 %v725
    %2006 = vmatpush.msra.mxu0 %v717
    %2007 = vmatpush.msra.mxu0 %v709
    %2008 = vmatpush.msra.mxu0 %v701
    %2009 = vmatpush.msra.mxu0 %v693
    %2010 = vmatpush.msra.mxu0 %v685
    %2011 = vmatpush.msra.mxu0 %v677
    %2012 = vmatpush.msra.mxu0 %v669
    %2013 = vmatpush.msra.mxu0 %v661
    %2014 = vmatmul.f32.gmra.mxu0 %v1863
    %v2015 = vpop.f32.mrf.mxu0
    %v2016 = vadd.f32 %v1996, %v2015
    %2017 = vdwg.mxu0
    %2018 = vmatpush.msra.mxu0 %v654
    %2019 = vmatpush.msra.mxu0 %v646
    %2020 = vmatpush.msra.mxu0 %v638
    %2021 = vmatpush.msra.mxu0 %v630
    %2022 = vmatpush.msra.mxu0 %v622
    %2023 = vmatpush.msra.mxu0 %v614
    %2024 = vmatpush.msra.mxu0 %v606
    %2025 = vmatpush.msra.mxu0 %v598
    %2026 = vmatpush.msra.mxu0 %v590
    %2027 = vmatpush.msra.mxu0 %v582
    %2028 = vmatpush.msra.mxu0 %v574
    %2029 = vmatpush.msra.mxu0 %v566
    %2030 = vmatpush.msra.mxu0 %v558
    %2031 = vmatpush.msra.mxu0 %v550
    %2032 = vmatpush.msra.mxu0 %v542
    %2033 = vmatpush.msra.mxu0 %v534
    %2034 = vmatmul.f32.gmra.mxu0 %v1862
    %v2035 = vpop.f32.mrf.mxu0
    %v2036 = vadd.f32 0.0, %v2035
    %2037 = vdwg.mxu0
    %2038 = vmatpush.msra.mxu0 %v782
    %2039 = vmatpush.msra.mxu0 %v774
    %2040 = vmatpush.msra.mxu0 %v766
    %2041 = vmatpush.msra.mxu0 %v758
    %2042 = vmatpush.msra.mxu0 %v750
    %2043 = vmatpush.msra.mxu0 %v742
    %2044 = vmatpush.msra.mxu0 %v734
    %2045 = vmatpush.msra.mxu0 %v726
    %2046 = vmatpush.msra.mxu0 %v718
    %2047 = vmatpush.msra.mxu0 %v710
    %2048 = vmatpush.msra.mxu0 %v702
    %2049 = vmatpush.msra.mxu0 %v694
    %2050 = vmatpush.msra.mxu0 %v686
    %2051 = vmatpush.msra.mxu0 %v678
    %2052 = vmatpush.msra.mxu0 %v670
    %2053 = vmatpush.msra.mxu0 %v662
    %2054 = vmatmul.f32.gmra.mxu0 %v1863
    %v2055 = vpop.f32.mrf.mxu0
    %v2056 = vadd.f32 %v2036, %v2055
    %2057 = vdwg.mxu0
    %2058 = vmatpush.msra.mxu0 %v655
    %2059 = vmatpush.msra.mxu0 %v647
    %2060 = vmatpush.msra.mxu0 %v639
    %2061 = vmatpush.msra.mxu0 %v631
    %2062 = vmatpush.msra.mxu0 %v623
    %2063 = vmatpush.msra.mxu0 %v615
    %2064 = vmatpush.msra.mxu0 %v607
    %2065 = vmatpush.msra.mxu0 %v599
    %2066 = vmatpush.msra.mxu0 %v591
    %2067 = vmatpush.msra.mxu0 %v583
    %2068 = vmatpush.msra.mxu0 %v575
    %2069 = vmatpush.msra.mxu0 %v567
    %2070 = vmatpush.msra.mxu0 %v559
    %2071 = vmatpush.msra.mxu0 %v551
    %2072 = vmatpush.msra.mxu0 %v543
    %2073 = vmatpush.msra.mxu0 %v535
    %2074 = vmatmul.f32.gmra.mxu0 %v1862
    %v2075 = vpop.f32.mrf.mxu0
    %v2076 = vadd.f32 0.0, %v2075
    %2077 = vdwg.mxu0
    %2078 = vmatpush.msra.mxu0 %v783
    %2079 = vmatpush.msra.mxu0 %v775
    %2080 = vmatpush.msra.mxu0 %v767
    %2081 = vmatpush.msra.mxu0 %v759
    %2082 = vmatpush.msra.mxu0 %v751
    %2083 = vmatpush.msra.mxu0 %v743
    %2084 = vmatpush.msra.mxu0 %v735
    %2085 = vmatpush.msra.mxu0 %v727
    %2086 = vmatpush.msra.mxu0 %v719
    %2087 = vmatpush.msra.mxu0 %v711
    %2088 = vmatpush.msra.mxu0 %v703
    %2089 = vmatpush.msra.mxu0 %v695
    %2090 = vmatpush.msra.mxu0 %v687
    %2091 = vmatpush.msra.mxu0 %v679
    %2092 = vmatpush.msra.mxu0 %v671
    %2093 = vmatpush.msra.mxu0 %v663
    %2094 = vmatmul.f32.gmra.mxu0 %v1863
    %v2095 = vpop.f32.mrf.mxu0
    %v2096 = vadd.f32 %v2076, %v2095
    %2097 = vdwg.mxu0
    %2098 = vmatpush.msra.mxu0 %v656
    %2099 = vmatpush.msra.mxu0 %v648
    %2100 = vmatpush.msra.mxu0 %v640
    %2101 = vmatpush.msra.mxu0 %v632
    %2102 = vmatpush.msra.mxu0 %v624
    %2103 = vmatpush.msra.mxu0 %v616
    %2104 = vmatpush.msra.mxu0 %v608
    %2105 = vmatpush.msra.mxu0 %v600
    %2106 = vmatpush.msra.mxu0 %v592
    %2107 = vmatpush.msra.mxu0 %v584
    %2108 = vmatpush.msra.mxu0 %v576
    %2109 = vmatpush.msra.mxu0 %v568
    %2110 = vmatpush.msra.mxu0 %v560
    %2111 = vmatpush.msra.mxu0 %v552
    %2112 = vmatpush.msra.mxu0 %v544
    %2113 = vmatpush.msra.mxu0 %v536
    %2114 = vmatmul.f32.gmra.mxu0 %v1862
    %v2115 = vpop.f32.mrf.mxu0
    %v2116 = vadd.f32 0.0, %v2115
    %2117 = vdwg.mxu0
    %2118 = vmatpush.msra.mxu0 %v784
    %2119 = vmatpush.msra.mxu0 %v776
    %2120 = vmatpush.msra.mxu0 %v768
    %2121 = vmatpush.msra.mxu0 %v760
    %2122 = vmatpush.msra.mxu0 %v752
    %2123 = vmatpush.msra.mxu0 %v744
    %2124 = vmatpush.msra.mxu0 %v736
    %2125 = vmatpush.msra.mxu0 %v728
    %2126 = vmatpush.msra.mxu0 %v720
    %2127 = vmatpush.msra.mxu0 %v712
    %2128 = vmatpush.msra.mxu0 %v704
    %2129 = vmatpush.msra.mxu0 %v696
    %2130 = vmatpush.msra.mxu0 %v688
    %2131 = vmatpush.msra.mxu0 %v680
    %2132 = vmatpush.msra.mxu0 %v672
    %2133 = vmatpush.msra.mxu0 %v664
    %2134 = vmatmul.f32.gmra.mxu0 %v1863
    %v2135 = vpop.f32.mrf.mxu0
    %v2136 = vadd.f32 %v2116, %v2135
    %2137 = vdwg.mxu0
    %2138 = vmatpush.msra.mxu0 %v657
    %2139 = vmatpush.msra.mxu0 %v649
    %2140 = vmatpush.msra.mxu0 %v641
    %2141 = vmatpush.msra.mxu0 %v633
    %2142 = vmatpush.msra.mxu0 %v625
    %2143 = vmatpush.msra.mxu0 %v617
    %2144 = vmatpush.msra.mxu0 %v609
    %2145 = vmatpush.msra.mxu0 %v601
    %2146 = vmatpush.msra.mxu0 %v593
    %2147 = vmatpush.msra.mxu0 %v585
    %2148 = vmatpush.msra.mxu0 %v577
    %2149 = vmatpush.msra.mxu0 %v569
    %2150 = vmatpush.msra.mxu0 %v561
    %2151 = vmatpush.msra.mxu0 %v553
    %2152 = vmatpush.msra.mxu0 %v545
    %2153 = vmatpush.msra.mxu0 %v537
    %2154 = vmatmul.f32.gmra.mxu0 %v1862
    %v2155 = vpop.f32.mrf.mxu0
    %v2156 = vadd.f32 0.0, %v2155
    %2157 = vdwg.mxu0
    %2158 = vmatpush.msra.mxu0 %v785
    %2159 = vmatpush.msra.mxu0 %v777
    %2160 = vmatpush.msra.mxu0 %v769
    %2161 = vmatpush.msra.mxu0 %v761
    %2162 = vmatpush.msra.mxu0 %v753
    %2163 = vmatpush.msra.mxu0 %v745
    %2164 = vmatpush.msra.mxu0 %v737
    %2165 = vmatpush.msra.mxu0 %v729
    %2166 = vmatpush.msra.mxu0 %v721
    %2167 = vmatpush.msra.mxu0 %v713
    %2168 = vmatpush.msra.mxu0 %v705
    %2169 = vmatpush.msra.mxu0 %v697
    %2170 = vmatpush.msra.mxu0 %v689
    %2171 = vmatpush.msra.mxu0 %v681
    %2172 = vmatpush.msra.mxu0 %v673
    %2173 = vmatpush.msra.mxu0 %v665
    %2174 = vmatmul.f32.gmra.mxu0 %v1863
    %v2175 = vpop.f32.mrf.mxu0
    %v2176 = vadd.f32 %v2156, %v2175
    %2177 = vdwg.mxu0
    %2178 = vmatpush.msra.mxu0 %v658
    %2179 = vmatpush.msra.mxu0 %v650
    %2180 = vmatpush.msra.mxu0 %v642
    %2181 = vmatpush.msra.mxu0 %v634
    %2182 = vmatpush.msra.mxu0 %v626
    %2183 = vmatpush.msra.mxu0 %v618
    %2184 = vmatpush.msra.mxu0 %v610
    %2185 = vmatpush.msra.mxu0 %v602
    %2186 = vmatpush.msra.mxu0 %v594
    %2187 = vmatpush.msra.mxu0 %v586
    %2188 = vmatpush.msra.mxu0 %v578
    %2189 = vmatpush.msra.mxu0 %v570
    %2190 = vmatpush.msra.mxu0 %v562
    %2191 = vmatpush.msra.mxu0 %v554
    %2192 = vmatpush.msra.mxu0 %v546
    %2193 = vmatpush.msra.mxu0 %v538
    %2194 = vmatmul.f32.gmra.mxu0 %v1862
    %v2195 = vpop.f32.mrf.mxu0
    %v2196 = vadd.f32 0.0, %v2195
    %2197 = vdwg.mxu0
    %2198 = vmatpush.msra.mxu0 %v786
    %2199 = vmatpush.msra.mxu0 %v778
    %2200 = vmatpush.msra.mxu0 %v770
    %2201 = vmatpush.msra.mxu0 %v762
    %2202 = vmatpush.msra.mxu0 %v754
    %2203 = vmatpush.msra.mxu0 %v746
    %2204 = vmatpush.msra.mxu0 %v738
    %2205 = vmatpush.msra.mxu0 %v730
    %2206 = vmatpush.msra.mxu0 %v722
    %2207 = vmatpush.msra.mxu0 %v714
    %2208 = vmatpush.msra.mxu0 %v706
    %2209 = vmatpush.msra.mxu0 %v698
    %2210 = vmatpush.msra.mxu0 %v690
    %2211 = vmatpush.msra.mxu0 %v682
    %2212 = vmatpush.msra.mxu0 %v674
    %2213 = vmatpush.msra.mxu0 %v666
    %2214 = vmatmul.f32.gmra.mxu0 %v1863
    %v2215 = vpop.f32.mrf.mxu0
    %v2216 = vadd.f32 %v2196, %v2215
    %2217 = vdwg.mxu0
    %v2218 = vadd.f32 %v1890, %v1936
    %v2219 = vadd.f32 %v1891, %v1976
    %v2220 = vadd.f32 %v1892, %v2016
    %v2221 = vadd.f32 %v1893, %v2056
    %v2222 = vadd.f32 %v1894, %v2096
    %v2223 = vadd.f32 %v1895, %v2136
    %v2224 = vadd.f32 %v1896, %v2176
    %v2225 = vadd.f32 %v1897, %v2216
    %v2226 = vxor.u32 %v2218, 2147483648
    %v2227 = vxor.u32 %v2219, 2147483648
    %v2228 = vmul.f32 %v2226, 1.442695
    %v2229 = vpow.pop %v2228
    %v2230 = vmul.f32 %v2227, 1.442695
    %v2231 = vpow.pop %v2230
    %v2232 = vadd.f32 %v2229, 1.0
    %v2233 = vadd.f32 %v2231, 1.0
    %v2234 = vrcp.pop %v2232
    %v2235 = vmul.f32 %v2232, %v2234
    %v2236 = vsub.f32 1.0, %v2235
    %v2237 = vmul.f32 %v2234, %v2236
    %v2238 = vadd.f32 %v2234, %v2237
    %vm2239 = vweird.f32 %v2232
    %vm2240 = vweird.f32 %v2234
    %vm2241 = vmor %vm2239, %vm2240
    %v2242 = vsel %vm2241, %v2234, %v2238
    %v2243 = vand.u32 2147483647, %v2232
    %vm2244 = vcmp.eq.f32.partialorder %v2243, 8.507059e+37
    %v2245 = vand.u32 %v2232, 2147483648
    %v2246 = vor.u32 1.1754944e-38, %v2245
    %v2247 = vsel %vm2244, %v2246, %v2242
    %v2248 = vmul.f32 1.0, %v2247
    %v2249 = vrcp.pop %v2233
    %v2250 = vmul.f32 %v2233, %v2249
    %v2251 = vsub.f32 1.0, %v2250
    %v2252 = vmul.f32 %v2249, %v2251
    %v2253 = vadd.f32 %v2249, %v2252
    %vm2254 = vweird.f32 %v2233
    %vm2255 = vweird.f32 %v2249
    %vm2256 = vmor %vm2254, %vm2255
    %v2257 = vsel %vm2256, %v2249, %v2253
    %v2258 = vand.u32 2147483647, %v2233
    %vm2259 = vcmp.eq.f32.partialorder %v2258, 8.507059e+37
    %v2260 = vand.u32 %v2233, 2147483648
    %v2261 = vor.u32 1.1754944e-38, %v2260
    %v2262 = vsel %vm2259, %v2261, %v2257
    %v2263 = vmul.f32 1.0, %v2262
    %v2264 = vxor.u32 %v2220, 2147483648
    %v2265 = vxor.u32 %v2221, 2147483648
    %v2266 = vmul.f32 %v2264, 1.442695
    %v2267 = vpow.pop %v2266
    %v2268 = vmul.f32 %v2265, 1.442695
    %v2269 = vpow.pop %v2268
    %v2270 = vadd.f32 %v2267, 1.0
    %v2271 = vadd.f32 %v2269, 1.0
    %v2272 = vrcp.pop %v2270
    %v2273 = vmul.f32 %v2270, %v2272
    %v2274 = vsub.f32 1.0, %v2273
    %v2275 = vmul.f32 %v2272, %v2274
    %v2276 = vadd.f32 %v2272, %v2275
    %vm2277 = vweird.f32 %v2270
    %vm2278 = vweird.f32 %v2272
    %vm2279 = vmor %vm2277, %vm2278
    %v2280 = vsel %vm2279, %v2272, %v2276
    %v2281 = vand.u32 2147483647, %v2270
    %vm2282 = vcmp.eq.f32.partialorder %v2281, 8.507059e+37
    %v2283 = vand.u32 %v2270, 2147483648
    %v2284 = vor.u32 1.1754944e-38, %v2283
    %v2285 = vsel %vm2282, %v2284, %v2280
    %v2286 = vmul.f32 1.0, %v2285
    %v2287 = vrcp.pop %v2271
    %v2288 = vmul.f32 %v2271, %v2287
    %v2289 = vsub.f32 1.0, %v2288
    %v2290 = vmul.f32 %v2287, %v2289
    %v2291 = vadd.f32 %v2287, %v2290
    %vm2292 = vweird.f32 %v2271
    %vm2293 = vweird.f32 %v2287
    %vm2294 = vmor %vm2292, %vm2293
    %v2295 = vsel %vm2294, %v2287, %v2291
    %v2296 = vand.u32 2147483647, %v2271
    %vm2297 = vcmp.eq.f32.partialorder %v2296, 8.507059e+37
    %v2298 = vand.u32 %v2271, 2147483648
    %v2299 = vor.u32 1.1754944e-38, %v2298
    %v2300 = vsel %vm2297, %v2299, %v2295
    %v2301 = vmul.f32 1.0, %v2300
    %v2302 = vtanh.pop %v2222
    %v2303 = vtanh.pop %v2223
    %v2304 = vxor.u32 %v2224, 2147483648
    %v2305 = vxor.u32 %v2225, 2147483648
    %v2306 = vmul.f32 %v2304, 1.442695
    %v2307 = vpow.pop %v2306
    %v2308 = vmul.f32 %v2305, 1.442695
    %v2309 = vpow.pop %v2308
    %v2310 = vadd.f32 %v2307, 1.0
    %v2311 = vadd.f32 %v2309, 1.0
    %v2312 = vrcp.pop %v2310
    %v2313 = vmul.f32 %v2310, %v2312
    %v2314 = vsub.f32 1.0, %v2313
    %v2315 = vmul.f32 %v2312, %v2314
    %v2316 = vadd.f32 %v2312, %v2315
    %vm2317 = vweird.f32 %v2310
    %vm2318 = vweird.f32 %v2312
    %vm2319 = vmor %vm2317, %vm2318
    %v2320 = vsel %vm2319, %v2312, %v2316
    %v2321 = vand.u32 2147483647, %v2310
    %vm2322 = vcmp.eq.f32.partialorder %v2321, 8.507059e+37
    %v2323 = vand.u32 %v2310, 2147483648
    %v2324 = vor.u32 1.1754944e-38, %v2323
    %v2325 = vsel %vm2322, %v2324, %v2320
    %v2326 = vmul.f32 1.0, %v2325
    %v2327 = vrcp.pop %v2311
    %v2328 = vmul.f32 %v2311, %v2327
    %v2329 = vsub.f32 1.0, %v2328
    %v2330 = vmul.f32 %v2327, %v2329
    %v2331 = vadd.f32 %v2327, %v2330
    %vm2332 = vweird.f32 %v2311
    %vm2333 = vweird.f32 %v2327
    %vm2334 = vmor %vm2332, %vm2333
    %v2335 = vsel %vm2334, %v2327, %v2331
    %v2336 = vand.u32 2147483647, %v2311
    %vm2337 = vcmp.eq.f32.partialorder %v2336, 8.507059e+37
    %v2338 = vand.u32 %v2311, 2147483648
    %v2339 = vor.u32 1.1754944e-38, %v2338
    %v2340 = vsel %vm2337, %v2339, %v2335
    %v2341 = vmul.f32 1.0, %v2340
    %v2342 = vmul.f32 %v2286, %v1866
    %v2343 = vmul.f32 %v2301, %v1867
    %v2344 = vmul.f32 %v2248, %v2302
    %v2345 = vmul.f32 %v2263, %v2303
    %v2346 = vadd.f32 %v2342, %v2344
    %v2347 = vadd.f32 %v2343, %v2345
    %v2348 = vtanh.pop %v2346
    %v2349 = vtanh.pop %v2347
    %v2350 = vmul.f32 %v2326, %v2348
    %v2351 = vmul.f32 %v2341, %v2349
    %s2352 = scalar_lea.vmem [#allocation3], 16
    %v2353 = vld [vmem:[%s2352] sm:$0xff]
    %s2354 = scalar_lea.vmem [#allocation3], 40
    %v2355 = vld [vmem:[%s2354] sm:$0xff]
    %v2356 = vsub.f32 1.0, %v2353
    %v2357 = vsub.f32 1.0, %v2355
    %v2358 = vmul.f32 %v2353, %v2350
    %v2359 = vmul.f32 %v2355, %v2351
    %v2360 = vmul.f32 %v2353, %v2346
    %v2361 = vmul.f32 %v2355, %v2347
    %s2362 = scalar_lea.vmem [#allocation9], 16
    %2363 = vst [vmem:[%s2362] sm:$0xff] %v2358
    %s2364 = scalar_lea.vmem [#allocation10], 40
    %2365 = vst [vmem:[%s2364] sm:$0xff] %v2359
    %v2366 = vmul.f32 %v2356, %v1862
    %v2367 = vmul.f32 %v2357, %v1863
    %v2368 = vadd.f32 %v2358, %v2366
    %v2369 = vadd.f32 %v2359, %v2367
    %v2370 = vmul.f32 %v2356, %v1866
    %v2371 = vmul.f32 %v2357, %v1867
    %v2372 = vadd.f32 %v2360, %v2370
    %v2373 = vadd.f32 %v2361, %v2371
    %s2374 = smul.u32 3, 8
    %s2375 = smul.addr %s2374, 8
    %s2376 = scalar_lea.vmem [#allocation2], %s2375
    %v2377 = vld [vmem:[%s2376] sm:$0xff]
    %v2378 = vld [vmem:[%s2376 + $0x8] sm:$0xff]
    %v2379 = vld [vmem:[%s2376 + $0x10] sm:$0xff]
    %v2380 = vld [vmem:[%s2376 + $0x18] sm:$0xff]
    %v2381 = vld [vmem:[%s2376 + $0x20] sm:$0xff]
    %v2382 = vld [vmem:[%s2376 + $0x28] sm:$0xff]
    %v2383 = vld [vmem:[%s2376 + $0x30] sm:$0xff]
    %v2384 = vld [vmem:[%s2376 + $0x38] sm:$0xff]
    %s2385 = smul.u32 4, 8
    %s2386 = smul.addr %s2385, 8
    %s2387 = scalar_lea.vmem [#allocation2], %s2386
    %v2388 = vld [vmem:[%s2387] sm:$0xff]
    %v2389 = vld [vmem:[%s2387 + $0x8] sm:$0xff]
    %v2390 = vld [vmem:[%s2387 + $0x10] sm:$0xff]
    %v2391 = vld [vmem:[%s2387 + $0x18] sm:$0xff]
    %v2392 = vld [vmem:[%s2387 + $0x20] sm:$0xff]
    %v2393 = vld [vmem:[%s2387 + $0x28] sm:$0xff]
    %v2394 = vld [vmem:[%s2387 + $0x30] sm:$0xff]
    %v2395 = vld [vmem:[%s2387 + $0x38] sm:$0xff]
    %v2396 = vsel %vm852, %v2377, %v2388
    %v2397 = vsel %vm853, %v2378, %v2389
    %v2398 = vsel %vm854, %v2379, %v2390
    %v2399 = vsel %vm855, %v2380, %v2391
    %v2400 = vsel %vm856, %v2381, %v2392
    %v2401 = vsel %vm857, %v2382, %v2393
    %v2402 = vsel %vm858, %v2383, %v2394
    %v2403 = vsel %vm859, %v2384, %v2395
    %2404 = vmatpush.msra.mxu0 %v651
    %2405 = vmatpush.msra.mxu0 %v643
    %2406 = vmatpush.msra.mxu0 %v635
    %2407 = vmatpush.msra.mxu0 %v627
    %2408 = vmatpush.msra.mxu0 %v619
    %2409 = vmatpush.msra.mxu0 %v611
    %2410 = vmatpush.msra.mxu0 %v603
    %2411 = vmatpush.msra.mxu0 %v595
    %2412 = vmatpush.msra.mxu0 %v587
    %2413 = vmatpush.msra.mxu0 %v579
    %2414 = vmatpush.msra.mxu0 %v571
    %2415 = vmatpush.msra.mxu0 %v563
    %2416 = vmatpush.msra.mxu0 %v555
    %2417 = vmatpush.msra.mxu0 %v547
    %2418 = vmatpush.msra.mxu0 %v539
    %2419 = vmatpush.msra.mxu0 %v531
    %2420 = vmatmul.f32.gmra.mxu0 %v2368
    %v2421 = vpop.f32.mrf.mxu0
    %v2422 = vadd.f32 0.0, %v2421
    %2423 = vdwg.mxu0
    %2424 = vmatpush.msra.mxu0 %v779
    %2425 = vmatpush.msra.mxu0 %v771
    %2426 = vmatpush.msra.mxu0 %v763
    %2427 = vmatpush.msra.mxu0 %v755
    %2428 = vmatpush.msra.mxu0 %v747
    %2429 = vmatpush.msra.mxu0 %v739
    %2430 = vmatpush.msra.mxu0 %v731
    %2431 = vmatpush.msra.mxu0 %v723
    %2432 = vmatpush.msra.mxu0 %v715
    %2433 = vmatpush.msra.mxu0 %v707
    %2434 = vmatpush.msra.mxu0 %v699
    %2435 = vmatpush.msra.mxu0 %v691
    %2436 = vmatpush.msra.mxu0 %v683
    %2437 = vmatpush.msra.mxu0 %v675
    %2438 = vmatpush.msra.mxu0 %v667
    %2439 = vmatpush.msra.mxu0 %v659
    %2440 = vmatmul.f32.gmra.mxu0 %v2369
    %v2441 = vpop.f32.mrf.mxu0
    %v2442 = vadd.f32 %v2422, %v2441
    %2443 = vdwg.mxu0
    %2444 = vmatpush.msra.mxu0 %v652
    %2445 = vmatpush.msra.mxu0 %v644
    %2446 = vmatpush.msra.mxu0 %v636
    %2447 = vmatpush.msra.mxu0 %v628
    %2448 = vmatpush.msra.mxu0 %v620
    %2449 = vmatpush.msra.mxu0 %v612
    %2450 = vmatpush.msra.mxu0 %v604
    %2451 = vmatpush.msra.mxu0 %v596
    %2452 = vmatpush.msra.mxu0 %v588
    %2453 = vmatpush.msra.mxu0 %v580
    %2454 = vmatpush.msra.mxu0 %v572
    %2455 = vmatpush.msra.mxu0 %v564
    %2456 = vmatpush.msra.mxu0 %v556
    %2457 = vmatpush.msra.mxu0 %v548
    %2458 = vmatpush.msra.mxu0 %v540
    %2459 = vmatpush.msra.mxu0 %v532
    %2460 = vmatmul.f32.gmra.mxu0 %v2368
    %v2461 = vpop.f32.mrf.mxu0
    %v2462 = vadd.f32 0.0, %v2461
    %2463 = vdwg.mxu0
    %2464 = vmatpush.msra.mxu0 %v780
    %2465 = vmatpush.msra.mxu0 %v772
    %2466 = vmatpush.msra.mxu0 %v764
    %2467 = vmatpush.msra.mxu0 %v756
    %2468 = vmatpush.msra.mxu0 %v748
    %2469 = vmatpush.msra.mxu0 %v740
    %2470 = vmatpush.msra.mxu0 %v732
    %2471 = vmatpush.msra.mxu0 %v724
    %2472 = vmatpush.msra.mxu0 %v716
    %2473 = vmatpush.msra.mxu0 %v708
    %2474 = vmatpush.msra.mxu0 %v700
    %2475 = vmatpush.msra.mxu0 %v692
    %2476 = vmatpush.msra.mxu0 %v684
    %2477 = vmatpush.msra.mxu0 %v676
    %2478 = vmatpush.msra.mxu0 %v668
    %2479 = vmatpush.msra.mxu0 %v660
    %2480 = vmatmul.f32.gmra.mxu0 %v2369
    %v2481 = vpop.f32.mrf.mxu0
    %v2482 = vadd.f32 %v2462, %v2481
    %2483 = vdwg.mxu0
    %2484 = vmatpush.msra.mxu0 %v653
    %2485 = vmatpush.msra.mxu0 %v645
    %2486 = vmatpush.msra.mxu0 %v637
    %2487 = vmatpush.msra.mxu0 %v629
    %2488 = vmatpush.msra.mxu0 %v621
    %2489 = vmatpush.msra.mxu0 %v613
    %2490 = vmatpush.msra.mxu0 %v605
    %2491 = vmatpush.msra.mxu0 %v597
    %2492 = vmatpush.msra.mxu0 %v589
    %2493 = vmatpush.msra.mxu0 %v581
    %2494 = vmatpush.msra.mxu0 %v573
    %2495 = vmatpush.msra.mxu0 %v565
    %2496 = vmatpush.msra.mxu0 %v557
    %2497 = vmatpush.msra.mxu0 %v549
    %2498 = vmatpush.msra.mxu0 %v541
    %2499 = vmatpush.msra.mxu0 %v533
    %2500 = vmatmul.f32.gmra.mxu0 %v2368
    %v2501 = vpop.f32.mrf.mxu0
    %v2502 = vadd.f32 0.0, %v2501
    %2503 = vdwg.mxu0
    %2504 = vmatpush.msra.mxu0 %v781
    %2505 = vmatpush.msra.mxu0 %v773
    %2506 = vmatpush.msra.mxu0 %v765
    %2507 = vmatpush.msra.mxu0 %v757
    %2508 = vmatpush.msra.mxu0 %v749
    %2509 = vmatpush.msra.mxu0 %v741
    %2510 = vmatpush.msra.mxu0 %v733
    %2511 = vmatpush.msra.mxu0 %v725
    %2512 = vmatpush.msra.mxu0 %v717
    %2513 = vmatpush.msra.mxu0 %v709
    %2514 = vmatpush.msra.mxu0 %v701
    %2515 = vmatpush.msra.mxu0 %v693
    %2516 = vmatpush.msra.mxu0 %v685
    %2517 = vmatpush.msra.mxu0 %v677
    %2518 = vmatpush.msra.mxu0 %v669
    %2519 = vmatpush.msra.mxu0 %v661
    %2520 = vmatmul.f32.gmra.mxu0 %v2369
    %v2521 = vpop.f32.mrf.mxu0
    %v2522 = vadd.f32 %v2502, %v2521
    %2523 = vdwg.mxu0
    %2524 = vmatpush.msra.mxu0 %v654
    %2525 = vmatpush.msra.mxu0 %v646
    %2526 = vmatpush.msra.mxu0 %v638
    %2527 = vmatpush.msra.mxu0 %v630
    %2528 = vmatpush.msra.mxu0 %v622
    %2529 = vmatpush.msra.mxu0 %v614
    %2530 = vmatpush.msra.mxu0 %v606
    %2531 = vmatpush.msra.mxu0 %v598
    %2532 = vmatpush.msra.mxu0 %v590
    %2533 = vmatpush.msra.mxu0 %v582
    %2534 = vmatpush.msra.mxu0 %v574
    %2535 = vmatpush.msra.mxu0 %v566
    %2536 = vmatpush.msra.mxu0 %v558
    %2537 = vmatpush.msra.mxu0 %v550
    %2538 = vmatpush.msra.mxu0 %v542
    %2539 = vmatpush.msra.mxu0 %v534
    %2540 = vmatmul.f32.gmra.mxu0 %v2368
    %v2541 = vpop.f32.mrf.mxu0
    %v2542 = vadd.f32 0.0, %v2541
    %2543 = vdwg.mxu0
    %2544 = vmatpush.msra.mxu0 %v782
    %2545 = vmatpush.msra.mxu0 %v774
    %2546 = vmatpush.msra.mxu0 %v766
    %2547 = vmatpush.msra.mxu0 %v758
    %2548 = vmatpush.msra.mxu0 %v750
    %2549 = vmatpush.msra.mxu0 %v742
    %2550 = vmatpush.msra.mxu0 %v734
    %2551 = vmatpush.msra.mxu0 %v726
    %2552 = vmatpush.msra.mxu0 %v718
    %2553 = vmatpush.msra.mxu0 %v710
    %2554 = vmatpush.msra.mxu0 %v702
    %2555 = vmatpush.msra.mxu0 %v694
    %2556 = vmatpush.msra.mxu0 %v686
    %2557 = vmatpush.msra.mxu0 %v678
    %2558 = vmatpush.msra.mxu0 %v670
    %2559 = vmatpush.msra.mxu0 %v662
    %2560 = vmatmul.f32.gmra.mxu0 %v2369
    %v2561 = vpop.f32.mrf.mxu0
    %v2562 = vadd.f32 %v2542, %v2561
    %2563 = vdwg.mxu0
    %2564 = vmatpush.msra.mxu0 %v655
    %2565 = vmatpush.msra.mxu0 %v647
    %2566 = vmatpush.msra.mxu0 %v639
    %2567 = vmatpush.msra.mxu0 %v631
    %2568 = vmatpush.msra.mxu0 %v623
    %2569 = vmatpush.msra.mxu0 %v615
    %2570 = vmatpush.msra.mxu0 %v607
    %2571 = vmatpush.msra.mxu0 %v599
    %2572 = vmatpush.msra.mxu0 %v591
    %2573 = vmatpush.msra.mxu0 %v583
    %2574 = vmatpush.msra.mxu0 %v575
    %2575 = vmatpush.msra.mxu0 %v567
    %2576 = vmatpush.msra.mxu0 %v559
    %2577 = vmatpush.msra.mxu0 %v551
    %2578 = vmatpush.msra.mxu0 %v543
    %2579 = vmatpush.msra.mxu0 %v535
    %2580 = vmatmul.f32.gmra.mxu0 %v2368
    %v2581 = vpop.f32.mrf.mxu0
    %v2582 = vadd.f32 0.0, %v2581
    %2583 = vdwg.mxu0
    %2584 = vmatpush.msra.mxu0 %v783
    %2585 = vmatpush.msra.mxu0 %v775
    %2586 = vmatpush.msra.mxu0 %v767
    %2587 = vmatpush.msra.mxu0 %v759
    %2588 = vmatpush.msra.mxu0 %v751
    %2589 = vmatpush.msra.mxu0 %v743
    %2590 = vmatpush.msra.mxu0 %v735
    %2591 = vmatpush.msra.mxu0 %v727
    %2592 = vmatpush.msra.mxu0 %v719
    %2593 = vmatpush.msra.mxu0 %v711
    %2594 = vmatpush.msra.mxu0 %v703
    %2595 = vmatpush.msra.mxu0 %v695
    %2596 = vmatpush.msra.mxu0 %v687
    %2597 = vmatpush.msra.mxu0 %v679
    %2598 = vmatpush.msra.mxu0 %v671
    %2599 = vmatpush.msra.mxu0 %v663
    %2600 = vmatmul.f32.gmra.mxu0 %v2369
    %v2601 = vpop.f32.mrf.mxu0
    %v2602 = vadd.f32 %v2582, %v2601
    %2603 = vdwg.mxu0
    %2604 = vmatpush.msra.mxu0 %v656
    %2605 = vmatpush.msra.mxu0 %v648
    %2606 = vmatpush.msra.mxu0 %v640
    %2607 = vmatpush.msra.mxu0 %v632
    %2608 = vmatpush.msra.mxu0 %v624
    %2609 = vmatpush.msra.mxu0 %v616
    %2610 = vmatpush.msra.mxu0 %v608
    %2611 = vmatpush.msra.mxu0 %v600
    %2612 = vmatpush.msra.mxu0 %v592
    %2613 = vmatpush.msra.mxu0 %v584
    %2614 = vmatpush.msra.mxu0 %v576
    %2615 = vmatpush.msra.mxu0 %v568
    %2616 = vmatpush.msra.mxu0 %v560
    %2617 = vmatpush.msra.mxu0 %v552
    %2618 = vmatpush.msra.mxu0 %v544
    %2619 = vmatpush.msra.mxu0 %v536
    %2620 = vmatmul.f32.gmra.mxu0 %v2368
    %v2621 = vpop.f32.mrf.mxu0
    %v2622 = vadd.f32 0.0, %v2621
    %2623 = vdwg.mxu0
    %2624 = vmatpush.msra.mxu0 %v784
    %2625 = vmatpush.msra.mxu0 %v776
    %2626 = vmatpush.msra.mxu0 %v768
    %2627 = vmatpush.msra.mxu0 %v760
    %2628 = vmatpush.msra.mxu0 %v752
    %2629 = vmatpush.msra.mxu0 %v744
    %2630 = vmatpush.msra.mxu0 %v736
    %2631 = vmatpush.msra.mxu0 %v728
    %2632 = vmatpush.msra.mxu0 %v720
    %2633 = vmatpush.msra.mxu0 %v712
    %2634 = vmatpush.msra.mxu0 %v704
    %2635 = vmatpush.msra.mxu0 %v696
    %2636 = vmatpush.msra.mxu0 %v688
    %2637 = vmatpush.msra.mxu0 %v680
    %2638 = vmatpush.msra.mxu0 %v672
    %2639 = vmatpush.msra.mxu0 %v664
    %2640 = vmatmul.f32.gmra.mxu0 %v2369
    %v2641 = vpop.f32.mrf.mxu0
    %v2642 = vadd.f32 %v2622, %v2641
    %2643 = vdwg.mxu0
    %2644 = vmatpush.msra.mxu0 %v657
    %2645 = vmatpush.msra.mxu0 %v649
    %2646 = vmatpush.msra.mxu0 %v641
    %2647 = vmatpush.msra.mxu0 %v633
    %2648 = vmatpush.msra.mxu0 %v625
    %2649 = vmatpush.msra.mxu0 %v617
    %2650 = vmatpush.msra.mxu0 %v609
    %2651 = vmatpush.msra.mxu0 %v601
    %2652 = vmatpush.msra.mxu0 %v593
    %2653 = vmatpush.msra.mxu0 %v585
    %2654 = vmatpush.msra.mxu0 %v577
    %2655 = vmatpush.msra.mxu0 %v569
    %2656 = vmatpush.msra.mxu0 %v561
    %2657 = vmatpush.msra.mxu0 %v553
    %2658 = vmatpush.msra.mxu0 %v545
    %2659 = vmatpush.msra.mxu0 %v537
    %2660 = vmatmul.f32.gmra.mxu0 %v2368
    %v2661 = vpop.f32.mrf.mxu0
    %v2662 = vadd.f32 0.0, %v2661
    %2663 = vdwg.mxu0
    %2664 = vmatpush.msra.mxu0 %v785
    %2665 = vmatpush.msra.mxu0 %v777
    %2666 = vmatpush.msra.mxu0 %v769
    %2667 = vmatpush.msra.mxu0 %v761
    %2668 = vmatpush.msra.mxu0 %v753
    %2669 = vmatpush.msra.mxu0 %v745
    %2670 = vmatpush.msra.mxu0 %v737
    %2671 = vmatpush.msra.mxu0 %v729
    %2672 = vmatpush.msra.mxu0 %v721
    %2673 = vmatpush.msra.mxu0 %v713
    %2674 = vmatpush.msra.mxu0 %v705
    %2675 = vmatpush.msra.mxu0 %v697
    %2676 = vmatpush.msra.mxu0 %v689
    %2677 = vmatpush.msra.mxu0 %v681
    %2678 = vmatpush.msra.mxu0 %v673
    %2679 = vmatpush.msra.mxu0 %v665
    %2680 = vmatmul.f32.gmra.mxu0 %v2369
    %v2681 = vpop.f32.mrf.mxu0
    %v2682 = vadd.f32 %v2662, %v2681
    %2683 = vdwg.mxu0
    %2684 = vmatpush.msra.mxu0 %v658
    %2685 = vmatpush.msra.mxu0 %v650
    %2686 = vmatpush.msra.mxu0 %v642
    %2687 = vmatpush.msra.mxu0 %v634
    %2688 = vmatpush.msra.mxu0 %v626
    %2689 = vmatpush.msra.mxu0 %v618
    %2690 = vmatpush.msra.mxu0 %v610
    %2691 = vmatpush.msra.mxu0 %v602
    %2692 = vmatpush.msra.mxu0 %v594
    %2693 = vmatpush.msra.mxu0 %v586
    %2694 = vmatpush.msra.mxu0 %v578
    %2695 = vmatpush.msra.mxu0 %v570
    %2696 = vmatpush.msra.mxu0 %v562
    %2697 = vmatpush.msra.mxu0 %v554
    %2698 = vmatpush.msra.mxu0 %v546
    %2699 = vmatpush.msra.mxu0 %v538
    %2700 = vmatmul.f32.gmra.mxu0 %v2368
    %v2701 = vpop.f32.mrf.mxu0
    %v2702 = vadd.f32 0.0, %v2701
    %2703 = vdwg.mxu0
    %2704 = vmatpush.msra.mxu0 %v786
    %2705 = vmatpush.msra.mxu0 %v778
    %2706 = vmatpush.msra.mxu0 %v770
    %2707 = vmatpush.msra.mxu0 %v762
    %2708 = vmatpush.msra.mxu0 %v754
    %2709 = vmatpush.msra.mxu0 %v746
    %2710 = vmatpush.msra.mxu0 %v738
    %2711 = vmatpush.msra.mxu0 %v730
    %2712 = vmatpush.msra.mxu0 %v722
    %2713 = vmatpush.msra.mxu0 %v714
    %2714 = vmatpush.msra.mxu0 %v706
    %2715 = vmatpush.msra.mxu0 %v698
    %2716 = vmatpush.msra.mxu0 %v690
    %2717 = vmatpush.msra.mxu0 %v682
    %2718 = vmatpush.msra.mxu0 %v674
    %2719 = vmatpush.msra.mxu0 %v666
    %2720 = vmatmul.f32.gmra.mxu0 %v2369
    %v2721 = vpop.f32.mrf.mxu0
    %v2722 = vadd.f32 %v2702, %v2721
    %2723 = vdwg.mxu0
    %v2724 = vadd.f32 %v2396, %v2442
    %v2725 = vadd.f32 %v2397, %v2482
    %v2726 = vadd.f32 %v2398, %v2522
    %v2727 = vadd.f32 %v2399, %v2562
    %v2728 = vadd.f32 %v2400, %v2602
    %v2729 = vadd.f32 %v2401, %v2642
    %v2730 = vadd.f32 %v2402, %v2682
    %v2731 = vadd.f32 %v2403, %v2722
    %v2732 = vxor.u32 %v2724, 2147483648
    %v2733 = vxor.u32 %v2725, 2147483648
    %v2734 = vmul.f32 %v2732, 1.442695
    %v2735 = vpow.pop %v2734
    %v2736 = vmul.f32 %v2733, 1.442695
    %v2737 = vpow.pop %v2736
    %v2738 = vadd.f32 %v2735, 1.0
    %v2739 = vadd.f32 %v2737, 1.0
    %v2740 = vrcp.pop %v2738
    %v2741 = vmul.f32 %v2738, %v2740
    %v2742 = vsub.f32 1.0, %v2741
    %v2743 = vmul.f32 %v2740, %v2742
    %v2744 = vadd.f32 %v2740, %v2743
    %vm2745 = vweird.f32 %v2738
    %vm2746 = vweird.f32 %v2740
    %vm2747 = vmor %vm2745, %vm2746
    %v2748 = vsel %vm2747, %v2740, %v2744
    %v2749 = vand.u32 2147483647, %v2738
    %vm2750 = vcmp.eq.f32.partialorder %v2749, 8.507059e+37
    %v2751 = vand.u32 %v2738, 2147483648
    %v2752 = vor.u32 1.1754944e-38, %v2751
    %v2753 = vsel %vm2750, %v2752, %v2748
    %v2754 = vmul.f32 1.0, %v2753
    %v2755 = vrcp.pop %v2739
    %v2756 = vmul.f32 %v2739, %v2755
    %v2757 = vsub.f32 1.0, %v2756
    %v2758 = vmul.f32 %v2755, %v2757
    %v2759 = vadd.f32 %v2755, %v2758
    %vm2760 = vweird.f32 %v2739
    %vm2761 = vweird.f32 %v2755
    %vm2762 = vmor %vm2760, %vm2761
    %v2763 = vsel %vm2762, %v2755, %v2759
    %v2764 = vand.u32 2147483647, %v2739
    %vm2765 = vcmp.eq.f32.partialorder %v2764, 8.507059e+37
    %v2766 = vand.u32 %v2739, 2147483648
    %v2767 = vor.u32 1.1754944e-38, %v2766
    %v2768 = vsel %vm2765, %v2767, %v2763
    %v2769 = vmul.f32 1.0, %v2768
    %v2770 = vxor.u32 %v2726, 2147483648
    %v2771 = vxor.u32 %v2727, 2147483648
    %v2772 = vmul.f32 %v2770, 1.442695
    %v2773 = vpow.pop %v2772
    %v2774 = vmul.f32 %v2771, 1.442695
    %v2775 = vpow.pop %v2774
    %v2776 = vadd.f32 %v2773, 1.0
    %v2777 = vadd.f32 %v2775, 1.0
    %v2778 = vrcp.pop %v2776
    %v2779 = vmul.f32 %v2776, %v2778
    %v2780 = vsub.f32 1.0, %v2779
    %v2781 = vmul.f32 %v2778, %v2780
    %v2782 = vadd.f32 %v2778, %v2781
    %vm2783 = vweird.f32 %v2776
    %vm2784 = vweird.f32 %v2778
    %vm2785 = vmor %vm2783, %vm2784
    %v2786 = vsel %vm2785, %v2778, %v2782
    %v2787 = vand.u32 2147483647, %v2776
    %vm2788 = vcmp.eq.f32.partialorder %v2787, 8.507059e+37
    %v2789 = vand.u32 %v2776, 2147483648
    %v2790 = vor.u32 1.1754944e-38, %v2789
    %v2791 = vsel %vm2788, %v2790, %v2786
    %v2792 = vmul.f32 1.0, %v2791
    %v2793 = vrcp.pop %v2777
    %v2794 = vmul.f32 %v2777, %v2793
    %v2795 = vsub.f32 1.0, %v2794
    %v2796 = vmul.f32 %v2793, %v2795
    %v2797 = vadd.f32 %v2793, %v2796
    %vm2798 = vweird.f32 %v2777
    %vm2799 = vweird.f32 %v2793
    %vm2800 = vmor %vm2798, %vm2799
    %v2801 = vsel %vm2800, %v2793, %v2797
    %v2802 = vand.u32 2147483647, %v2777
    %vm2803 = vcmp.eq.f32.partialorder %v2802, 8.507059e+37
    %v2804 = vand.u32 %v2777, 2147483648
    %v2805 = vor.u32 1.1754944e-38, %v2804
    %v2806 = vsel %vm2803, %v2805, %v2801
    %v2807 = vmul.f32 1.0, %v2806
    %v2808 = vtanh.pop %v2728
    %v2809 = vtanh.pop %v2729
    %v2810 = vxor.u32 %v2730, 2147483648
    %v2811 = vxor.u32 %v2731, 2147483648
    %v2812 = vmul.f32 %v2810, 1.442695
    %v2813 = vpow.pop %v2812
    %v2814 = vmul.f32 %v2811, 1.442695
    %v2815 = vpow.pop %v2814
    %v2816 = vadd.f32 %v2813, 1.0
    %v2817 = vadd.f32 %v2815, 1.0
    %v2818 = vrcp.pop %v2816
    %v2819 = vmul.f32 %v2816, %v2818
    %v2820 = vsub.f32 1.0, %v2819
    %v2821 = vmul.f32 %v2818, %v2820
    %v2822 = vadd.f32 %v2818, %v2821
    %vm2823 = vweird.f32 %v2816
    %vm2824 = vweird.f32 %v2818
    %vm2825 = vmor %vm2823, %vm2824
    %v2826 = vsel %vm2825, %v2818, %v2822
    %v2827 = vand.u32 2147483647, %v2816
    %vm2828 = vcmp.eq.f32.partialorder %v2827, 8.507059e+37
    %v2829 = vand.u32 %v2816, 2147483648
    %v2830 = vor.u32 1.1754944e-38, %v2829
    %v2831 = vsel %vm2828, %v2830, %v2826
    %v2832 = vmul.f32 1.0, %v2831
    %v2833 = vrcp.pop %v2817
    %v2834 = vmul.f32 %v2817, %v2833
    %v2835 = vsub.f32 1.0, %v2834
    %v2836 = vmul.f32 %v2833, %v2835
    %v2837 = vadd.f32 %v2833, %v2836
    %vm2838 = vweird.f32 %v2817
    %vm2839 = vweird.f32 %v2833
    %vm2840 = vmor %vm2838, %vm2839
    %v2841 = vsel %vm2840, %v2833, %v2837
    %v2842 = vand.u32 2147483647, %v2817
    %vm2843 = vcmp.eq.f32.partialorder %v2842, 8.507059e+37
    %v2844 = vand.u32 %v2817, 2147483648
    %v2845 = vor.u32 1.1754944e-38, %v2844
    %v2846 = vsel %vm2843, %v2845, %v2841
    %v2847 = vmul.f32 1.0, %v2846
    %v2848 = vmul.f32 %v2792, %v2372
    %v2849 = vmul.f32 %v2807, %v2373
    %v2850 = vmul.f32 %v2754, %v2808
    %v2851 = vmul.f32 %v2769, %v2809
    %v2852 = vadd.f32 %v2848, %v2850
    %v2853 = vadd.f32 %v2849, %v2851
    %v2854 = vtanh.pop %v2852
    %v2855 = vtanh.pop %v2853
    %v2856 = vmul.f32 %v2832, %v2854
    %v2857 = vmul.f32 %v2847, %v2855
    %s2858 = scalar_lea.vmem [#allocation3], 24
    %v2859 = vld [vmem:[%s2858] sm:$0xff]
    %s2860 = scalar_lea.vmem [#allocation3], 32
    %v2861 = vld [vmem:[%s2860] sm:$0xff]
    %v2862 = vsub.f32 1.0, %v2859
    %v2863 = vsub.f32 1.0, %v2861
    %v2864 = vmul.f32 %v2859, %v2856
    %v2865 = vmul.f32 %v2861, %v2857
    %v2866 = vmul.f32 %v2859, %v2852
    %v2867 = vmul.f32 %v2861, %v2853
    %s2868 = scalar_lea.vmem [#allocation9], 24
    %2869 = vst [vmem:[%s2868] sm:$0xff] %v2864
    %s2870 = scalar_lea.vmem [#allocation10], 32
    %2871 = vst [vmem:[%s2870] sm:$0xff] %v2865
    %v2872 = vmul.f32 %v2862, %v2368
    %v2873 = vmul.f32 %v2863, %v2369
    %v2874 = vadd.f32 %v2864, %v2872
    %v2875 = vadd.f32 %v2865, %v2873
    %v2876 = vmul.f32 %v2862, %v2372
    %v2877 = vmul.f32 %v2863, %v2373
    %v2878 = vadd.f32 %v2866, %v2876
    %v2879 = vadd.f32 %v2867, %v2877
    %v2880 = vld [vmem:[%s2387] sm:$0xff]
    %v2881 = vld [vmem:[%s2387 + $0x8] sm:$0xff]
    %v2882 = vld [vmem:[%s2387 + $0x10] sm:$0xff]
    %v2883 = vld [vmem:[%s2387 + $0x18] sm:$0xff]
    %v2884 = vld [vmem:[%s2387 + $0x20] sm:$0xff]
    %v2885 = vld [vmem:[%s2387 + $0x28] sm:$0xff]
    %v2886 = vld [vmem:[%s2387 + $0x30] sm:$0xff]
    %v2887 = vld [vmem:[%s2387 + $0x38] sm:$0xff]
    %v2888 = vld [vmem:[%s2376] sm:$0xff]
    %v2889 = vld [vmem:[%s2376 + $0x8] sm:$0xff]
    %v2890 = vld [vmem:[%s2376 + $0x10] sm:$0xff]
    %v2891 = vld [vmem:[%s2376 + $0x18] sm:$0xff]
    %v2892 = vld [vmem:[%s2376 + $0x20] sm:$0xff]
    %v2893 = vld [vmem:[%s2376 + $0x28] sm:$0xff]
    %v2894 = vld [vmem:[%s2376 + $0x30] sm:$0xff]
    %v2895 = vld [vmem:[%s2376 + $0x38] sm:$0xff]
    %v2896 = vsel %vm852, %v2880, %v2888
    %v2897 = vsel %vm853, %v2881, %v2889
    %v2898 = vsel %vm854, %v2882, %v2890
    %v2899 = vsel %vm855, %v2883, %v2891
    %v2900 = vsel %vm856, %v2884, %v2892
    %v2901 = vsel %vm857, %v2885, %v2893
    %v2902 = vsel %vm858, %v2886, %v2894
    %v2903 = vsel %vm859, %v2887, %v2895
    %2904 = vmatpush.msra.mxu0 %v651
    %2905 = vmatpush.msra.mxu0 %v643
    %2906 = vmatpush.msra.mxu0 %v635
    %2907 = vmatpush.msra.mxu0 %v627
    %2908 = vmatpush.msra.mxu0 %v619
    %2909 = vmatpush.msra.mxu0 %v611
    %2910 = vmatpush.msra.mxu0 %v603
    %2911 = vmatpush.msra.mxu0 %v595
    %2912 = vmatpush.msra.mxu0 %v587
    %2913 = vmatpush.msra.mxu0 %v579
    %2914 = vmatpush.msra.mxu0 %v571
    %2915 = vmatpush.msra.mxu0 %v563
    %2916 = vmatpush.msra.mxu0 %v555
    %2917 = vmatpush.msra.mxu0 %v547
    %2918 = vmatpush.msra.mxu0 %v539
    %2919 = vmatpush.msra.mxu0 %v531
    %2920 = vmatmul.f32.gmra.mxu0 %v2874
    %v2921 = vpop.f32.mrf.mxu0
    %v2922 = vadd.f32 0.0, %v2921
    %2923 = vdwg.mxu0
    %2924 = vmatpush.msra.mxu0 %v779
    %2925 = vmatpush.msra.mxu0 %v771
    %2926 = vmatpush.msra.mxu0 %v763
    %2927 = vmatpush.msra.mxu0 %v755
    %2928 = vmatpush.msra.mxu0 %v747
    %2929 = vmatpush.msra.mxu0 %v739
    %2930 = vmatpush.msra.mxu0 %v731
    %2931 = vmatpush.msra.mxu0 %v723
    %2932 = vmatpush.msra.mxu0 %v715
    %2933 = vmatpush.msra.mxu0 %v707
    %2934 = vmatpush.msra.mxu0 %v699
    %2935 = vmatpush.msra.mxu0 %v691
    %2936 = vmatpush.msra.mxu0 %v683
    %2937 = vmatpush.msra.mxu0 %v675
    %2938 = vmatpush.msra.mxu0 %v667
    %2939 = vmatpush.msra.mxu0 %v659
    %2940 = vmatmul.f32.gmra.mxu0 %v2875
    %v2941 = vpop.f32.mrf.mxu0
    %v2942 = vadd.f32 %v2922, %v2941
    %2943 = vdwg.mxu0
    %2944 = vmatpush.msra.mxu0 %v652
    %2945 = vmatpush.msra.mxu0 %v644
    %2946 = vmatpush.msra.mxu0 %v636
    %2947 = vmatpush.msra.mxu0 %v628
    %2948 = vmatpush.msra.mxu0 %v620
    %2949 = vmatpush.msra.mxu0 %v612
    %2950 = vmatpush.msra.mxu0 %v604
    %2951 = vmatpush.msra.mxu0 %v596
    %2952 = vmatpush.msra.mxu0 %v588
    %2953 = vmatpush.msra.mxu0 %v580
    %2954 = vmatpush.msra.mxu0 %v572
    %2955 = vmatpush.msra.mxu0 %v564
    %2956 = vmatpush.msra.mxu0 %v556
    %2957 = vmatpush.msra.mxu0 %v548
    %2958 = vmatpush.msra.mxu0 %v540
    %2959 = vmatpush.msra.mxu0 %v532
    %2960 = vmatmul.f32.gmra.mxu0 %v2874
    %v2961 = vpop.f32.mrf.mxu0
    %v2962 = vadd.f32 0.0, %v2961
    %2963 = vdwg.mxu0
    %2964 = vmatpush.msra.mxu0 %v780
    %2965 = vmatpush.msra.mxu0 %v772
    %2966 = vmatpush.msra.mxu0 %v764
    %2967 = vmatpush.msra.mxu0 %v756
    %2968 = vmatpush.msra.mxu0 %v748
    %2969 = vmatpush.msra.mxu0 %v740
    %2970 = vmatpush.msra.mxu0 %v732
    %2971 = vmatpush.msra.mxu0 %v724
    %2972 = vmatpush.msra.mxu0 %v716
    %2973 = vmatpush.msra.mxu0 %v708
    %2974 = vmatpush.msra.mxu0 %v700
    %2975 = vmatpush.msra.mxu0 %v692
    %2976 = vmatpush.msra.mxu0 %v684
    %2977 = vmatpush.msra.mxu0 %v676
    %2978 = vmatpush.msra.mxu0 %v668
    %2979 = vmatpush.msra.mxu0 %v660
    %2980 = vmatmul.f32.gmra.mxu0 %v2875
    %v2981 = vpop.f32.mrf.mxu0
    %v2982 = vadd.f32 %v2962, %v2981
    %2983 = vdwg.mxu0
    %2984 = vmatpush.msra.mxu0 %v653
    %2985 = vmatpush.msra.mxu0 %v645
    %2986 = vmatpush.msra.mxu0 %v637
    %2987 = vmatpush.msra.mxu0 %v629
    %2988 = vmatpush.msra.mxu0 %v621
    %2989 = vmatpush.msra.mxu0 %v613
    %2990 = vmatpush.msra.mxu0 %v605
    %2991 = vmatpush.msra.mxu0 %v597
    %2992 = vmatpush.msra.mxu0 %v589
    %2993 = vmatpush.msra.mxu0 %v581
    %2994 = vmatpush.msra.mxu0 %v573
    %2995 = vmatpush.msra.mxu0 %v565
    %2996 = vmatpush.msra.mxu0 %v557
    %2997 = vmatpush.msra.mxu0 %v549
    %2998 = vmatpush.msra.mxu0 %v541
    %2999 = vmatpush.msra.mxu0 %v533
    %3000 = vmatmul.f32.gmra.mxu0 %v2874
    %v3001 = vpop.f32.mrf.mxu0
    %v3002 = vadd.f32 0.0, %v3001
    %3003 = vdwg.mxu0
    %3004 = vmatpush.msra.mxu0 %v781
    %3005 = vmatpush.msra.mxu0 %v773
    %3006 = vmatpush.msra.mxu0 %v765
    %3007 = vmatpush.msra.mxu0 %v757
    %3008 = vmatpush.msra.mxu0 %v749
    %3009 = vmatpush.msra.mxu0 %v741
    %3010 = vmatpush.msra.mxu0 %v733
    %3011 = vmatpush.msra.mxu0 %v725
    %3012 = vmatpush.msra.mxu0 %v717
    %3013 = vmatpush.msra.mxu0 %v709
    %3014 = vmatpush.msra.mxu0 %v701
    %3015 = vmatpush.msra.mxu0 %v693
    %3016 = vmatpush.msra.mxu0 %v685
    %3017 = vmatpush.msra.mxu0 %v677
    %3018 = vmatpush.msra.mxu0 %v669
    %3019 = vmatpush.msra.mxu0 %v661
    %3020 = vmatmul.f32.gmra.mxu0 %v2875
    %v3021 = vpop.f32.mrf.mxu0
    %v3022 = vadd.f32 %v3002, %v3021
    %3023 = vdwg.mxu0
    %3024 = vmatpush.msra.mxu0 %v654
    %3025 = vmatpush.msra.mxu0 %v646
    %3026 = vmatpush.msra.mxu0 %v638
    %3027 = vmatpush.msra.mxu0 %v630
    %3028 = vmatpush.msra.mxu0 %v622
    %3029 = vmatpush.msra.mxu0 %v614
    %3030 = vmatpush.msra.mxu0 %v606
    %3031 = vmatpush.msra.mxu0 %v598
    %3032 = vmatpush.msra.mxu0 %v590
    %3033 = vmatpush.msra.mxu0 %v582
    %3034 = vmatpush.msra.mxu0 %v574
    %3035 = vmatpush.msra.mxu0 %v566
    %3036 = vmatpush.msra.mxu0 %v558
    %3037 = vmatpush.msra.mxu0 %v550
    %3038 = vmatpush.msra.mxu0 %v542
    %3039 = vmatpush.msra.mxu0 %v534
    %3040 = vmatmul.f32.gmra.mxu0 %v2874
    %v3041 = vpop.f32.mrf.mxu0
    %v3042 = vadd.f32 0.0, %v3041
    %3043 = vdwg.mxu0
    %3044 = vmatpush.msra.mxu0 %v782
    %3045 = vmatpush.msra.mxu0 %v774
    %3046 = vmatpush.msra.mxu0 %v766
    %3047 = vmatpush.msra.mxu0 %v758
    %3048 = vmatpush.msra.mxu0 %v750
    %3049 = vmatpush.msra.mxu0 %v742
    %3050 = vmatpush.msra.mxu0 %v734
    %3051 = vmatpush.msra.mxu0 %v726
    %3052 = vmatpush.msra.mxu0 %v718
    %3053 = vmatpush.msra.mxu0 %v710
    %3054 = vmatpush.msra.mxu0 %v702
    %3055 = vmatpush.msra.mxu0 %v694
    %3056 = vmatpush.msra.mxu0 %v686
    %3057 = vmatpush.msra.mxu0 %v678
    %3058 = vmatpush.msra.mxu0 %v670
    %3059 = vmatpush.msra.mxu0 %v662
    %3060 = vmatmul.f32.gmra.mxu0 %v2875
    %v3061 = vpop.f32.mrf.mxu0
    %v3062 = vadd.f32 %v3042, %v3061
    %3063 = vdwg.mxu0
    %3064 = vmatpush.msra.mxu0 %v655
    %3065 = vmatpush.msra.mxu0 %v647
    %3066 = vmatpush.msra.mxu0 %v639
    %3067 = vmatpush.msra.mxu0 %v631
    %3068 = vmatpush.msra.mxu0 %v623
    %3069 = vmatpush.msra.mxu0 %v615
    %3070 = vmatpush.msra.mxu0 %v607
    %3071 = vmatpush.msra.mxu0 %v599
    %3072 = vmatpush.msra.mxu0 %v591
    %3073 = vmatpush.msra.mxu0 %v583
    %3074 = vmatpush.msra.mxu0 %v575
    %3075 = vmatpush.msra.mxu0 %v567
    %3076 = vmatpush.msra.mxu0 %v559
    %3077 = vmatpush.msra.mxu0 %v551
    %3078 = vmatpush.msra.mxu0 %v543
    %3079 = vmatpush.msra.mxu0 %v535
    %3080 = vmatmul.f32.gmra.mxu0 %v2874
    %v3081 = vpop.f32.mrf.mxu0
    %v3082 = vadd.f32 0.0, %v3081
    %3083 = vdwg.mxu0
    %3084 = vmatpush.msra.mxu0 %v783
    %3085 = vmatpush.msra.mxu0 %v775
    %3086 = vmatpush.msra.mxu0 %v767
    %3087 = vmatpush.msra.mxu0 %v759
    %3088 = vmatpush.msra.mxu0 %v751
    %3089 = vmatpush.msra.mxu0 %v743
    %3090 = vmatpush.msra.mxu0 %v735
    %3091 = vmatpush.msra.mxu0 %v727
    %3092 = vmatpush.msra.mxu0 %v719
    %3093 = vmatpush.msra.mxu0 %v711
    %3094 = vmatpush.msra.mxu0 %v703
    %3095 = vmatpush.msra.mxu0 %v695
    %3096 = vmatpush.msra.mxu0 %v687
    %3097 = vmatpush.msra.mxu0 %v679
    %3098 = vmatpush.msra.mxu0 %v671
    %3099 = vmatpush.msra.mxu0 %v663
    %3100 = vmatmul.f32.gmra.mxu0 %v2875
    %v3101 = vpop.f32.mrf.mxu0
    %v3102 = vadd.f32 %v3082, %v3101
    %3103 = vdwg.mxu0
    %3104 = vmatpush.msra.mxu0 %v656
    %3105 = vmatpush.msra.mxu0 %v648
    %3106 = vmatpush.msra.mxu0 %v640
    %3107 = vmatpush.msra.mxu0 %v632
    %3108 = vmatpush.msra.mxu0 %v624
    %3109 = vmatpush.msra.mxu0 %v616
    %3110 = vmatpush.msra.mxu0 %v608
    %3111 = vmatpush.msra.mxu0 %v600
    %3112 = vmatpush.msra.mxu0 %v592
    %3113 = vmatpush.msra.mxu0 %v584
    %3114 = vmatpush.msra.mxu0 %v576
    %3115 = vmatpush.msra.mxu0 %v568
    %3116 = vmatpush.msra.mxu0 %v560
    %3117 = vmatpush.msra.mxu0 %v552
    %3118 = vmatpush.msra.mxu0 %v544
    %3119 = vmatpush.msra.mxu0 %v536
    %3120 = vmatmul.f32.gmra.mxu0 %v2874
    %v3121 = vpop.f32.mrf.mxu0
    %v3122 = vadd.f32 0.0, %v3121
    %3123 = vdwg.mxu0
    %3124 = vmatpush.msra.mxu0 %v784
    %3125 = vmatpush.msra.mxu0 %v776
    %3126 = vmatpush.msra.mxu0 %v768
    %3127 = vmatpush.msra.mxu0 %v760
    %3128 = vmatpush.msra.mxu0 %v752
    %3129 = vmatpush.msra.mxu0 %v744
    %3130 = vmatpush.msra.mxu0 %v736
    %3131 = vmatpush.msra.mxu0 %v728
    %3132 = vmatpush.msra.mxu0 %v720
    %3133 = vmatpush.msra.mxu0 %v712
    %3134 = vmatpush.msra.mxu0 %v704
    %3135 = vmatpush.msra.mxu0 %v696
    %3136 = vmatpush.msra.mxu0 %v688
    %3137 = vmatpush.msra.mxu0 %v680
    %3138 = vmatpush.msra.mxu0 %v672
    %3139 = vmatpush.msra.mxu0 %v664
    %3140 = vmatmul.f32.gmra.mxu0 %v2875
    %v3141 = vpop.f32.mrf.mxu0
    %v3142 = vadd.f32 %v3122, %v3141
    %3143 = vdwg.mxu0
    %3144 = vmatpush.msra.mxu0 %v657
    %3145 = vmatpush.msra.mxu0 %v649
    %3146 = vmatpush.msra.mxu0 %v641
    %3147 = vmatpush.msra.mxu0 %v633
    %3148 = vmatpush.msra.mxu0 %v625
    %3149 = vmatpush.msra.mxu0 %v617
    %3150 = vmatpush.msra.mxu0 %v609
    %3151 = vmatpush.msra.mxu0 %v601
    %3152 = vmatpush.msra.mxu0 %v593
    %3153 = vmatpush.msra.mxu0 %v585
    %3154 = vmatpush.msra.mxu0 %v577
    %3155 = vmatpush.msra.mxu0 %v569
    %3156 = vmatpush.msra.mxu0 %v561
    %3157 = vmatpush.msra.mxu0 %v553
    %3158 = vmatpush.msra.mxu0 %v545
    %3159 = vmatpush.msra.mxu0 %v537
    %3160 = vmatmul.f32.gmra.mxu0 %v2874
    %v3161 = vpop.f32.mrf.mxu0
    %v3162 = vadd.f32 0.0, %v3161
    %3163 = vdwg.mxu0
    %3164 = vmatpush.msra.mxu0 %v785
    %3165 = vmatpush.msra.mxu0 %v777
    %3166 = vmatpush.msra.mxu0 %v769
    %3167 = vmatpush.msra.mxu0 %v761
    %3168 = vmatpush.msra.mxu0 %v753
    %3169 = vmatpush.msra.mxu0 %v745
    %3170 = vmatpush.msra.mxu0 %v737
    %3171 = vmatpush.msra.mxu0 %v729
    %3172 = vmatpush.msra.mxu0 %v721
    %3173 = vmatpush.msra.mxu0 %v713
    %3174 = vmatpush.msra.mxu0 %v705
    %3175 = vmatpush.msra.mxu0 %v697
    %3176 = vmatpush.msra.mxu0 %v689
    %3177 = vmatpush.msra.mxu0 %v681
    %3178 = vmatpush.msra.mxu0 %v673
    %3179 = vmatpush.msra.mxu0 %v665
    %3180 = vmatmul.f32.gmra.mxu0 %v2875
    %v3181 = vpop.f32.mrf.mxu0
    %v3182 = vadd.f32 %v3162, %v3181
    %3183 = vdwg.mxu0
    %3184 = vmatpush.msra.mxu0 %v658
    %3185 = vmatpush.msra.mxu0 %v650
    %3186 = vmatpush.msra.mxu0 %v642
    %3187 = vmatpush.msra.mxu0 %v634
    %3188 = vmatpush.msra.mxu0 %v626
    %3189 = vmatpush.msra.mxu0 %v618
    %3190 = vmatpush.msra.mxu0 %v610
    %3191 = vmatpush.msra.mxu0 %v602
    %3192 = vmatpush.msra.mxu0 %v594
    %3193 = vmatpush.msra.mxu0 %v586
    %3194 = vmatpush.msra.mxu0 %v578
    %3195 = vmatpush.msra.mxu0 %v570
    %3196 = vmatpush.msra.mxu0 %v562
    %3197 = vmatpush.msra.mxu0 %v554
    %3198 = vmatpush.msra.mxu0 %v546
    %3199 = vmatpush.msra.mxu0 %v538
    %3200 = vmatmul.f32.gmra.mxu0 %v2874
    %v3201 = vpop.f32.mrf.mxu0
    %v3202 = vadd.f32 0.0, %v3201
    %3203 = vdwg.mxu0
    %3204 = vmatpush.msra.mxu0 %v786
    %3205 = vmatpush.msra.mxu0 %v778
    %3206 = vmatpush.msra.mxu0 %v770
    %3207 = vmatpush.msra.mxu0 %v762
    %3208 = vmatpush.msra.mxu0 %v754
    %3209 = vmatpush.msra.mxu0 %v746
    %3210 = vmatpush.msra.mxu0 %v738
    %3211 = vmatpush.msra.mxu0 %v730
    %3212 = vmatpush.msra.mxu0 %v722
    %3213 = vmatpush.msra.mxu0 %v714
    %3214 = vmatpush.msra.mxu0 %v706
    %3215 = vmatpush.msra.mxu0 %v698
    %3216 = vmatpush.msra.mxu0 %v690
    %3217 = vmatpush.msra.mxu0 %v682
    %3218 = vmatpush.msra.mxu0 %v674
    %3219 = vmatpush.msra.mxu0 %v666
    %3220 = vmatmul.f32.gmra.mxu0 %v2875
    %v3221 = vpop.f32.mrf.mxu0
    %v3222 = vadd.f32 %v3202, %v3221
    %3223 = vdwg.mxu0
    %v3224 = vadd.f32 %v2896, %v2942
    %v3225 = vadd.f32 %v2897, %v2982
    %v3226 = vadd.f32 %v2898, %v3022
    %v3227 = vadd.f32 %v2899, %v3062
    %v3228 = vadd.f32 %v2900, %v3102
    %v3229 = vadd.f32 %v2901, %v3142
    %v3230 = vadd.f32 %v2902, %v3182
    %v3231 = vadd.f32 %v2903, %v3222
    %v3232 = vxor.u32 %v3224, 2147483648
    %v3233 = vxor.u32 %v3225, 2147483648
    %v3234 = vmul.f32 %v3232, 1.442695
    %v3235 = vpow.pop %v3234
    %v3236 = vmul.f32 %v3233, 1.442695
    %v3237 = vpow.pop %v3236
    %v3238 = vadd.f32 %v3235, 1.0
    %v3239 = vadd.f32 %v3237, 1.0
    %v3240 = vrcp.pop %v3238
    %v3241 = vmul.f32 %v3238, %v3240
    %v3242 = vsub.f32 1.0, %v3241
    %v3243 = vmul.f32 %v3240, %v3242
    %v3244 = vadd.f32 %v3240, %v3243
    %vm3245 = vweird.f32 %v3238
    %vm3246 = vweird.f32 %v3240
    %vm3247 = vmor %vm3245, %vm3246
    %v3248 = vsel %vm3247, %v3240, %v3244
    %v3249 = vand.u32 2147483647, %v3238
    %vm3250 = vcmp.eq.f32.partialorder %v3249, 8.507059e+37
    %v3251 = vand.u32 %v3238, 2147483648
    %v3252 = vor.u32 1.1754944e-38, %v3251
    %v3253 = vsel %vm3250, %v3252, %v3248
    %v3254 = vmul.f32 1.0, %v3253
    %v3255 = vrcp.pop %v3239
    %v3256 = vmul.f32 %v3239, %v3255
    %v3257 = vsub.f32 1.0, %v3256
    %v3258 = vmul.f32 %v3255, %v3257
    %v3259 = vadd.f32 %v3255, %v3258
    %vm3260 = vweird.f32 %v3239
    %vm3261 = vweird.f32 %v3255
    %vm3262 = vmor %vm3260, %vm3261
    %v3263 = vsel %vm3262, %v3255, %v3259
    %v3264 = vand.u32 2147483647, %v3239
    %vm3265 = vcmp.eq.f32.partialorder %v3264, 8.507059e+37
    %v3266 = vand.u32 %v3239, 2147483648
    %v3267 = vor.u32 1.1754944e-38, %v3266
    %v3268 = vsel %vm3265, %v3267, %v3263
    %v3269 = vmul.f32 1.0, %v3268
    %v3270 = vxor.u32 %v3226, 2147483648
    %v3271 = vxor.u32 %v3227, 2147483648
    %v3272 = vmul.f32 %v3270, 1.442695
    %v3273 = vpow.pop %v3272
    %v3274 = vmul.f32 %v3271, 1.442695
    %v3275 = vpow.pop %v3274
    %v3276 = vadd.f32 %v3273, 1.0
    %v3277 = vadd.f32 %v3275, 1.0
    %v3278 = vrcp.pop %v3276
    %v3279 = vmul.f32 %v3276, %v3278
    %v3280 = vsub.f32 1.0, %v3279
    %v3281 = vmul.f32 %v3278, %v3280
    %v3282 = vadd.f32 %v3278, %v3281
    %vm3283 = vweird.f32 %v3276
    %vm3284 = vweird.f32 %v3278
    %vm3285 = vmor %vm3283, %vm3284
    %v3286 = vsel %vm3285, %v3278, %v3282
    %v3287 = vand.u32 2147483647, %v3276
    %vm3288 = vcmp.eq.f32.partialorder %v3287, 8.507059e+37
    %v3289 = vand.u32 %v3276, 2147483648
    %v3290 = vor.u32 1.1754944e-38, %v3289
    %v3291 = vsel %vm3288, %v3290, %v3286
    %v3292 = vmul.f32 1.0, %v3291
    %v3293 = vrcp.pop %v3277
    %v3294 = vmul.f32 %v3277, %v3293
    %v3295 = vsub.f32 1.0, %v3294
    %v3296 = vmul.f32 %v3293, %v3295
    %v3297 = vadd.f32 %v3293, %v3296
    %vm3298 = vweird.f32 %v3277
    %vm3299 = vweird.f32 %v3293
    %vm3300 = vmor %vm3298, %vm3299
    %v3301 = vsel %vm3300, %v3293, %v3297
    %v3302 = vand.u32 2147483647, %v3277
    %vm3303 = vcmp.eq.f32.partialorder %v3302, 8.507059e+37
    %v3304 = vand.u32 %v3277, 2147483648
    %v3305 = vor.u32 1.1754944e-38, %v3304
    %v3306 = vsel %vm3303, %v3305, %v3301
    %v3307 = vmul.f32 1.0, %v3306
    %v3308 = vtanh.pop %v3228
    %v3309 = vtanh.pop %v3229
    %v3310 = vxor.u32 %v3230, 2147483648
    %v3311 = vxor.u32 %v3231, 2147483648
    %v3312 = vmul.f32 %v3310, 1.442695
    %v3313 = vpow.pop %v3312
    %v3314 = vmul.f32 %v3311, 1.442695
    %v3315 = vpow.pop %v3314
    %v3316 = vadd.f32 %v3313, 1.0
    %v3317 = vadd.f32 %v3315, 1.0
    %v3318 = vrcp.pop %v3316
    %v3319 = vmul.f32 %v3316, %v3318
    %v3320 = vsub.f32 1.0, %v3319
    %v3321 = vmul.f32 %v3318, %v3320
    %v3322 = vadd.f32 %v3318, %v3321
    %vm3323 = vweird.f32 %v3316
    %vm3324 = vweird.f32 %v3318
    %vm3325 = vmor %vm3323, %vm3324
    %v3326 = vsel %vm3325, %v3318, %v3322
    %v3327 = vand.u32 2147483647, %v3316
    %vm3328 = vcmp.eq.f32.partialorder %v3327, 8.507059e+37
    %v3329 = vand.u32 %v3316, 2147483648
    %v3330 = vor.u32 1.1754944e-38, %v3329
    %v3331 = vsel %vm3328, %v3330, %v3326
    %v3332 = vmul.f32 1.0, %v3331
    %v3333 = vrcp.pop %v3317
    %v3334 = vmul.f32 %v3317, %v3333
    %v3335 = vsub.f32 1.0, %v3334
    %v3336 = vmul.f32 %v3333, %v3335
    %v3337 = vadd.f32 %v3333, %v3336
    %vm3338 = vweird.f32 %v3317
    %vm3339 = vweird.f32 %v3333
    %vm3340 = vmor %vm3338, %vm3339
    %v3341 = vsel %vm3340, %v3333, %v3337
    %v3342 = vand.u32 2147483647, %v3317
    %vm3343 = vcmp.eq.f32.partialorder %v3342, 8.507059e+37
    %v3344 = vand.u32 %v3317, 2147483648
    %v3345 = vor.u32 1.1754944e-38, %v3344
    %v3346 = vsel %vm3343, %v3345, %v3341
    %v3347 = vmul.f32 1.0, %v3346
    %v3348 = vmul.f32 %v3292, %v2878
    %v3349 = vmul.f32 %v3307, %v2879
    %v3350 = vmul.f32 %v3254, %v3308
    %v3351 = vmul.f32 %v3269, %v3309
    %v3352 = vadd.f32 %v3348, %v3350
    %v3353 = vadd.f32 %v3349, %v3351
    %v3354 = vtanh.pop %v3352
    %v3355 = vtanh.pop %v3353
    %v3356 = vmul.f32 %v3332, %v3354
    %v3357 = vmul.f32 %v3347, %v3355
    %v3358 = vld [vmem:[%s2860] sm:$0xff]
    %v3359 = vld [vmem:[%s2858] sm:$0xff]
    %v3360 = vsub.f32 1.0, %v3358
    %v3361 = vsub.f32 1.0, %v3359
    %v3362 = vmul.f32 %v3358, %v3356
    %v3363 = vmul.f32 %v3359, %v3357
    %v3364 = vmul.f32 %v3358, %v3352
    %v3365 = vmul.f32 %v3359, %v3353
    %s3366 = scalar_lea.vmem [#allocation9], 32
    %3367 = vst [vmem:[%s3366] sm:$0xff] %v3362
    %s3368 = scalar_lea.vmem [#allocation10], 24
    %3369 = vst [vmem:[%s3368] sm:$0xff] %v3363
    %v3370 = vmul.f32 %v3360, %v2874
    %v3371 = vmul.f32 %v3361, %v2875
    %v3372 = vadd.f32 %v3362, %v3370
    %v3373 = vadd.f32 %v3363, %v3371
    %v3374 = vmul.f32 %v3360, %v2878
    %v3375 = vmul.f32 %v3361, %v2879
    %v3376 = vadd.f32 %v3364, %v3374
    %v3377 = vadd.f32 %v3365, %v3375
    %v3378 = vld [vmem:[%s1881] sm:$0xff]
    %v3379 = vld [vmem:[%s1881 + $0x8] sm:$0xff]
    %v3380 = vld [vmem:[%s1881 + $0x10] sm:$0xff]
    %v3381 = vld [vmem:[%s1881 + $0x18] sm:$0xff]
    %v3382 = vld [vmem:[%s1881 + $0x20] sm:$0xff]
    %v3383 = vld [vmem:[%s1881 + $0x28] sm:$0xff]
    %v3384 = vld [vmem:[%s1881 + $0x30] sm:$0xff]
    %v3385 = vld [vmem:[%s1881 + $0x38] sm:$0xff]
    %v3386 = vld [vmem:[%s1870] sm:$0xff]
    %v3387 = vld [vmem:[%s1870 + $0x8] sm:$0xff]
    %v3388 = vld [vmem:[%s1870 + $0x10] sm:$0xff]
    %v3389 = vld [vmem:[%s1870 + $0x18] sm:$0xff]
    %v3390 = vld [vmem:[%s1870 + $0x20] sm:$0xff]
    %v3391 = vld [vmem:[%s1870 + $0x28] sm:$0xff]
    %v3392 = vld [vmem:[%s1870 + $0x30] sm:$0xff]
    %v3393 = vld [vmem:[%s1870 + $0x38] sm:$0xff]
    %v3394 = vsel %vm852, %v3378, %v3386
    %v3395 = vsel %vm853, %v3379, %v3387
    %v3396 = vsel %vm854, %v3380, %v3388
    %v3397 = vsel %vm855, %v3381, %v3389
    %v3398 = vsel %vm856, %v3382, %v3390
    %v3399 = vsel %vm857, %v3383, %v3391
    %v3400 = vsel %vm858, %v3384, %v3392
    %v3401 = vsel %vm859, %v3385, %v3393
    %3402 = vmatpush.msra.mxu0 %v651
    %3403 = vmatpush.msra.mxu0 %v643
    %3404 = vmatpush.msra.mxu0 %v635
    %3405 = vmatpush.msra.mxu0 %v627
    %3406 = vmatpush.msra.mxu0 %v619
    %3407 = vmatpush.msra.mxu0 %v611
    %3408 = vmatpush.msra.mxu0 %v603
    %3409 = vmatpush.msra.mxu0 %v595
    %3410 = vmatpush.msra.mxu0 %v587
    %3411 = vmatpush.msra.mxu0 %v579
    %3412 = vmatpush.msra.mxu0 %v571
    %3413 = vmatpush.msra.mxu0 %v563
    %3414 = vmatpush.msra.mxu0 %v555
    %3415 = vmatpush.msra.mxu0 %v547
    %3416 = vmatpush.msra.mxu0 %v539
    %3417 = vmatpush.msra.mxu0 %v531
    %3418 = vmatmul.f32.gmra.mxu0 %v3372
    %v3419 = vpop.f32.mrf.mxu0
    %v3420 = vadd.f32 0.0, %v3419
    %3421 = vdwg.mxu0
    %3422 = vmatpush.msra.mxu0 %v779
    %3423 = vmatpush.msra.mxu0 %v771
    %3424 = vmatpush.msra.mxu0 %v763
    %3425 = vmatpush.msra.mxu0 %v755
    %3426 = vmatpush.msra.mxu0 %v747
    %3427 = vmatpush.msra.mxu0 %v739
    %3428 = vmatpush.msra.mxu0 %v731
    %3429 = vmatpush.msra.mxu0 %v723
    %3430 = vmatpush.msra.mxu0 %v715
    %3431 = vmatpush.msra.mxu0 %v707
    %3432 = vmatpush.msra.mxu0 %v699
    %3433 = vmatpush.msra.mxu0 %v691
    %3434 = vmatpush.msra.mxu0 %v683
    %3435 = vmatpush.msra.mxu0 %v675
    %3436 = vmatpush.msra.mxu0 %v667
    %3437 = vmatpush.msra.mxu0 %v659
    %3438 = vmatmul.f32.gmra.mxu0 %v3373
    %v3439 = vpop.f32.mrf.mxu0
    %v3440 = vadd.f32 %v3420, %v3439
    %3441 = vdwg.mxu0
    %3442 = vmatpush.msra.mxu0 %v652
    %3443 = vmatpush.msra.mxu0 %v644
    %3444 = vmatpush.msra.mxu0 %v636
    %3445 = vmatpush.msra.mxu0 %v628
    %3446 = vmatpush.msra.mxu0 %v620
    %3447 = vmatpush.msra.mxu0 %v612
    %3448 = vmatpush.msra.mxu0 %v604
    %3449 = vmatpush.msra.mxu0 %v596
    %3450 = vmatpush.msra.mxu0 %v588
    %3451 = vmatpush.msra.mxu0 %v580
    %3452 = vmatpush.msra.mxu0 %v572
    %3453 = vmatpush.msra.mxu0 %v564
    %3454 = vmatpush.msra.mxu0 %v556
    %3455 = vmatpush.msra.mxu0 %v548
    %3456 = vmatpush.msra.mxu0 %v540
    %3457 = vmatpush.msra.mxu0 %v532
    %3458 = vmatmul.f32.gmra.mxu0 %v3372
    %v3459 = vpop.f32.mrf.mxu0
    %v3460 = vadd.f32 0.0, %v3459
    %3461 = vdwg.mxu0
    %3462 = vmatpush.msra.mxu0 %v780
    %3463 = vmatpush.msra.mxu0 %v772
    %3464 = vmatpush.msra.mxu0 %v764
    %3465 = vmatpush.msra.mxu0 %v756
    %3466 = vmatpush.msra.mxu0 %v748
    %3467 = vmatpush.msra.mxu0 %v740
    %3468 = vmatpush.msra.mxu0 %v732
    %3469 = vmatpush.msra.mxu0 %v724
    %3470 = vmatpush.msra.mxu0 %v716
    %3471 = vmatpush.msra.mxu0 %v708
    %3472 = vmatpush.msra.mxu0 %v700
    %3473 = vmatpush.msra.mxu0 %v692
    %3474 = vmatpush.msra.mxu0 %v684
    %3475 = vmatpush.msra.mxu0 %v676
    %3476 = vmatpush.msra.mxu0 %v668
    %3477 = vmatpush.msra.mxu0 %v660
    %3478 = vmatmul.f32.gmra.mxu0 %v3373
    %v3479 = vpop.f32.mrf.mxu0
    %v3480 = vadd.f32 %v3460, %v3479
    %3481 = vdwg.mxu0
    %3482 = vmatpush.msra.mxu0 %v653
    %3483 = vmatpush.msra.mxu0 %v645
    %3484 = vmatpush.msra.mxu0 %v637
    %3485 = vmatpush.msra.mxu0 %v629
    %3486 = vmatpush.msra.mxu0 %v621
    %3487 = vmatpush.msra.mxu0 %v613
    %3488 = vmatpush.msra.mxu0 %v605
    %3489 = vmatpush.msra.mxu0 %v597
    %3490 = vmatpush.msra.mxu0 %v589
    %3491 = vmatpush.msra.mxu0 %v581
    %3492 = vmatpush.msra.mxu0 %v573
    %3493 = vmatpush.msra.mxu0 %v565
    %3494 = vmatpush.msra.mxu0 %v557
    %3495 = vmatpush.msra.mxu0 %v549
    %3496 = vmatpush.msra.mxu0 %v541
    %3497 = vmatpush.msra.mxu0 %v533
    %3498 = vmatmul.f32.gmra.mxu0 %v3372
    %v3499 = vpop.f32.mrf.mxu0
    %v3500 = vadd.f32 0.0, %v3499
    %3501 = vdwg.mxu0
    %3502 = vmatpush.msra.mxu0 %v781
    %3503 = vmatpush.msra.mxu0 %v773
    %3504 = vmatpush.msra.mxu0 %v765
    %3505 = vmatpush.msra.mxu0 %v757
    %3506 = vmatpush.msra.mxu0 %v749
    %3507 = vmatpush.msra.mxu0 %v741
    %3508 = vmatpush.msra.mxu0 %v733
    %3509 = vmatpush.msra.mxu0 %v725
    %3510 = vmatpush.msra.mxu0 %v717
    %3511 = vmatpush.msra.mxu0 %v709
    %3512 = vmatpush.msra.mxu0 %v701
    %3513 = vmatpush.msra.mxu0 %v693
    %3514 = vmatpush.msra.mxu0 %v685
    %3515 = vmatpush.msra.mxu0 %v677
    %3516 = vmatpush.msra.mxu0 %v669
    %3517 = vmatpush.msra.mxu0 %v661
    %3518 = vmatmul.f32.gmra.mxu0 %v3373
    %v3519 = vpop.f32.mrf.mxu0
    %v3520 = vadd.f32 %v3500, %v3519
    %3521 = vdwg.mxu0
    %3522 = vmatpush.msra.mxu0 %v654
    %3523 = vmatpush.msra.mxu0 %v646
    %3524 = vmatpush.msra.mxu0 %v638
    %3525 = vmatpush.msra.mxu0 %v630
    %3526 = vmatpush.msra.mxu0 %v622
    %3527 = vmatpush.msra.mxu0 %v614
    %3528 = vmatpush.msra.mxu0 %v606
    %3529 = vmatpush.msra.mxu0 %v598
    %3530 = vmatpush.msra.mxu0 %v590
    %3531 = vmatpush.msra.mxu0 %v582
    %3532 = vmatpush.msra.mxu0 %v574
    %3533 = vmatpush.msra.mxu0 %v566
    %3534 = vmatpush.msra.mxu0 %v558
    %3535 = vmatpush.msra.mxu0 %v550
    %3536 = vmatpush.msra.mxu0 %v542
    %3537 = vmatpush.msra.mxu0 %v534
    %3538 = vmatmul.f32.gmra.mxu0 %v3372
    %v3539 = vpop.f32.mrf.mxu0
    %v3540 = vadd.f32 0.0, %v3539
    %3541 = vdwg.mxu0
    %3542 = vmatpush.msra.mxu0 %v782
    %3543 = vmatpush.msra.mxu0 %v774
    %3544 = vmatpush.msra.mxu0 %v766
    %3545 = vmatpush.msra.mxu0 %v758
    %3546 = vmatpush.msra.mxu0 %v750
    %3547 = vmatpush.msra.mxu0 %v742
    %3548 = vmatpush.msra.mxu0 %v734
    %3549 = vmatpush.msra.mxu0 %v726
    %3550 = vmatpush.msra.mxu0 %v718
    %3551 = vmatpush.msra.mxu0 %v710
    %3552 = vmatpush.msra.mxu0 %v702
    %3553 = vmatpush.msra.mxu0 %v694
    %3554 = vmatpush.msra.mxu0 %v686
    %3555 = vmatpush.msra.mxu0 %v678
    %3556 = vmatpush.msra.mxu0 %v670
    %3557 = vmatpush.msra.mxu0 %v662
    %3558 = vmatmul.f32.gmra.mxu0 %v3373
    %v3559 = vpop.f32.mrf.mxu0
    %v3560 = vadd.f32 %v3540, %v3559
    %3561 = vdwg.mxu0
    %3562 = vmatpush.msra.mxu0 %v655
    %3563 = vmatpush.msra.mxu0 %v647
    %3564 = vmatpush.msra.mxu0 %v639
    %3565 = vmatpush.msra.mxu0 %v631
    %3566 = vmatpush.msra.mxu0 %v623
    %3567 = vmatpush.msra.mxu0 %v615
    %3568 = vmatpush.msra.mxu0 %v607
    %3569 = vmatpush.msra.mxu0 %v599
    %3570 = vmatpush.msra.mxu0 %v591
    %3571 = vmatpush.msra.mxu0 %v583
    %3572 = vmatpush.msra.mxu0 %v575
    %3573 = vmatpush.msra.mxu0 %v567
    %3574 = vmatpush.msra.mxu0 %v559
    %3575 = vmatpush.msra.mxu0 %v551
    %3576 = vmatpush.msra.mxu0 %v543
    %3577 = vmatpush.msra.mxu0 %v535
    %3578 = vmatmul.f32.gmra.mxu0 %v3372
    %v3579 = vpop.f32.mrf.mxu0
    %v3580 = vadd.f32 0.0, %v3579
    %3581 = vdwg.mxu0
    %3582 = vmatpush.msra.mxu0 %v783
    %3583 = vmatpush.msra.mxu0 %v775
    %3584 = vmatpush.msra.mxu0 %v767
    %3585 = vmatpush.msra.mxu0 %v759
    %3586 = vmatpush.msra.mxu0 %v751
    %3587 = vmatpush.msra.mxu0 %v743
    %3588 = vmatpush.msra.mxu0 %v735
    %3589 = vmatpush.msra.mxu0 %v727
    %3590 = vmatpush.msra.mxu0 %v719
    %3591 = vmatpush.msra.mxu0 %v711
    %3592 = vmatpush.msra.mxu0 %v703
    %3593 = vmatpush.msra.mxu0 %v695
    %3594 = vmatpush.msra.mxu0 %v687
    %3595 = vmatpush.msra.mxu0 %v679
    %3596 = vmatpush.msra.mxu0 %v671
    %3597 = vmatpush.msra.mxu0 %v663
    %3598 = vmatmul.f32.gmra.mxu0 %v3373
    %v3599 = vpop.f32.mrf.mxu0
    %v3600 = vadd.f32 %v3580, %v3599
    %3601 = vdwg.mxu0
    %3602 = vmatpush.msra.mxu0 %v656
    %3603 = vmatpush.msra.mxu0 %v648
    %3604 = vmatpush.msra.mxu0 %v640
    %3605 = vmatpush.msra.mxu0 %v632
    %3606 = vmatpush.msra.mxu0 %v624
    %3607 = vmatpush.msra.mxu0 %v616
    %3608 = vmatpush.msra.mxu0 %v608
    %3609 = vmatpush.msra.mxu0 %v600
    %3610 = vmatpush.msra.mxu0 %v592
    %3611 = vmatpush.msra.mxu0 %v584
    %3612 = vmatpush.msra.mxu0 %v576
    %3613 = vmatpush.msra.mxu0 %v568
    %3614 = vmatpush.msra.mxu0 %v560
    %3615 = vmatpush.msra.mxu0 %v552
    %3616 = vmatpush.msra.mxu0 %v544
    %3617 = vmatpush.msra.mxu0 %v536
    %3618 = vmatmul.f32.gmra.mxu0 %v3372
    %v3619 = vpop.f32.mrf.mxu0
    %v3620 = vadd.f32 0.0, %v3619
    %3621 = vdwg.mxu0
    %3622 = vmatpush.msra.mxu0 %v784
    %3623 = vmatpush.msra.mxu0 %v776
    %3624 = vmatpush.msra.mxu0 %v768
    %3625 = vmatpush.msra.mxu0 %v760
    %3626 = vmatpush.msra.mxu0 %v752
    %3627 = vmatpush.msra.mxu0 %v744
    %3628 = vmatpush.msra.mxu0 %v736
    %3629 = vmatpush.msra.mxu0 %v728
    %3630 = vmatpush.msra.mxu0 %v720
    %3631 = vmatpush.msra.mxu0 %v712
    %3632 = vmatpush.msra.mxu0 %v704
    %3633 = vmatpush.msra.mxu0 %v696
    %3634 = vmatpush.msra.mxu0 %v688
    %3635 = vmatpush.msra.mxu0 %v680
    %3636 = vmatpush.msra.mxu0 %v672
    %3637 = vmatpush.msra.mxu0 %v664
    %3638 = vmatmul.f32.gmra.mxu0 %v3373
    %v3639 = vpop.f32.mrf.mxu0
    %v3640 = vadd.f32 %v3620, %v3639
    %3641 = vdwg.mxu0
    %3642 = vmatpush.msra.mxu0 %v657
    %3643 = vmatpush.msra.mxu0 %v649
    %3644 = vmatpush.msra.mxu0 %v641
    %3645 = vmatpush.msra.mxu0 %v633
    %3646 = vmatpush.msra.mxu0 %v625
    %3647 = vmatpush.msra.mxu0 %v617
    %3648 = vmatpush.msra.mxu0 %v609
    %3649 = vmatpush.msra.mxu0 %v601
    %3650 = vmatpush.msra.mxu0 %v593
    %3651 = vmatpush.msra.mxu0 %v585
    %3652 = vmatpush.msra.mxu0 %v577
    %3653 = vmatpush.msra.mxu0 %v569
    %3654 = vmatpush.msra.mxu0 %v561
    %3655 = vmatpush.msra.mxu0 %v553
    %3656 = vmatpush.msra.mxu0 %v545
    %3657 = vmatpush.msra.mxu0 %v537
    %3658 = vmatmul.f32.gmra.mxu0 %v3372
    %v3659 = vpop.f32.mrf.mxu0
    %v3660 = vadd.f32 0.0, %v3659
    %3661 = vdwg.mxu0
    %3662 = vmatpush.msra.mxu0 %v785
    %3663 = vmatpush.msra.mxu0 %v777
    %3664 = vmatpush.msra.mxu0 %v769
    %3665 = vmatpush.msra.mxu0 %v761
    %3666 = vmatpush.msra.mxu0 %v753
    %3667 = vmatpush.msra.mxu0 %v745
    %3668 = vmatpush.msra.mxu0 %v737
    %3669 = vmatpush.msra.mxu0 %v729
    %3670 = vmatpush.msra.mxu0 %v721
    %3671 = vmatpush.msra.mxu0 %v713
    %3672 = vmatpush.msra.mxu0 %v705
    %3673 = vmatpush.msra.mxu0 %v697
    %3674 = vmatpush.msra.mxu0 %v689
    %3675 = vmatpush.msra.mxu0 %v681
    %3676 = vmatpush.msra.mxu0 %v673
    %3677 = vmatpush.msra.mxu0 %v665
    %3678 = vmatmul.f32.gmra.mxu0 %v3373
    %v3679 = vpop.f32.mrf.mxu0
    %v3680 = vadd.f32 %v3660, %v3679
    %3681 = vdwg.mxu0
    %3682 = vmatpush.msra.mxu0 %v658
    %3683 = vmatpush.msra.mxu0 %v650
    %3684 = vmatpush.msra.mxu0 %v642
    %3685 = vmatpush.msra.mxu0 %v634
    %3686 = vmatpush.msra.mxu0 %v626
    %3687 = vmatpush.msra.mxu0 %v618
    %3688 = vmatpush.msra.mxu0 %v610
    %3689 = vmatpush.msra.mxu0 %v602
    %3690 = vmatpush.msra.mxu0 %v594
    %3691 = vmatpush.msra.mxu0 %v586
    %3692 = vmatpush.msra.mxu0 %v578
    %3693 = vmatpush.msra.mxu0 %v570
    %3694 = vmatpush.msra.mxu0 %v562
    %3695 = vmatpush.msra.mxu0 %v554
    %3696 = vmatpush.msra.mxu0 %v546
    %3697 = vmatpush.msra.mxu0 %v538
    %3698 = vmatmul.f32.gmra.mxu0 %v3372
    %v3699 = vpop.f32.mrf.mxu0
    %v3700 = vadd.f32 0.0, %v3699
    %3701 = vdwg.mxu0
    %3702 = vmatpush.msra.mxu0 %v786
    %3703 = vmatpush.msra.mxu0 %v778
    %3704 = vmatpush.msra.mxu0 %v770
    %3705 = vmatpush.msra.mxu0 %v762
    %3706 = vmatpush.msra.mxu0 %v754
    %3707 = vmatpush.msra.mxu0 %v746
    %3708 = vmatpush.msra.mxu0 %v738
    %3709 = vmatpush.msra.mxu0 %v730
    %3710 = vmatpush.msra.mxu0 %v722
    %3711 = vmatpush.msra.mxu0 %v714
    %3712 = vmatpush.msra.mxu0 %v706
    %3713 = vmatpush.msra.mxu0 %v698
    %3714 = vmatpush.msra.mxu0 %v690
    %3715 = vmatpush.msra.mxu0 %v682
    %3716 = vmatpush.msra.mxu0 %v674
    %3717 = vmatpush.msra.mxu0 %v666
    %3718 = vmatmul.f32.gmra.mxu0 %v3373
    %v3719 = vpop.f32.mrf.mxu0
    %v3720 = vadd.f32 %v3700, %v3719
    %3721 = vdwg.mxu0
    %v3722 = vadd.f32 %v3394, %v3440
    %v3723 = vadd.f32 %v3395, %v3480
    %v3724 = vadd.f32 %v3396, %v3520
    %v3725 = vadd.f32 %v3397, %v3560
    %v3726 = vadd.f32 %v3398, %v3600
    %v3727 = vadd.f32 %v3399, %v3640
    %v3728 = vadd.f32 %v3400, %v3680
    %v3729 = vadd.f32 %v3401, %v3720
    %v3730 = vxor.u32 %v3722, 2147483648
    %v3731 = vxor.u32 %v3723, 2147483648
    %v3732 = vmul.f32 %v3730, 1.442695
    %v3733 = vpow.pop %v3732
    %v3734 = vmul.f32 %v3731, 1.442695
    %v3735 = vpow.pop %v3734
    %v3736 = vadd.f32 %v3733, 1.0
    %v3737 = vadd.f32 %v3735, 1.0
    %v3738 = vrcp.pop %v3736
    %v3739 = vmul.f32 %v3736, %v3738
    %v3740 = vsub.f32 1.0, %v3739
    %v3741 = vmul.f32 %v3738, %v3740
    %v3742 = vadd.f32 %v3738, %v3741
    %vm3743 = vweird.f32 %v3736
    %vm3744 = vweird.f32 %v3738
    %vm3745 = vmor %vm3743, %vm3744
    %v3746 = vsel %vm3745, %v3738, %v3742
    %v3747 = vand.u32 2147483647, %v3736
    %vm3748 = vcmp.eq.f32.partialorder %v3747, 8.507059e+37
    %v3749 = vand.u32 %v3736, 2147483648
    %v3750 = vor.u32 1.1754944e-38, %v3749
    %v3751 = vsel %vm3748, %v3750, %v3746
    %v3752 = vmul.f32 1.0, %v3751
    %v3753 = vrcp.pop %v3737
    %v3754 = vmul.f32 %v3737, %v3753
    %v3755 = vsub.f32 1.0, %v3754
    %v3756 = vmul.f32 %v3753, %v3755
    %v3757 = vadd.f32 %v3753, %v3756
    %vm3758 = vweird.f32 %v3737
    %vm3759 = vweird.f32 %v3753
    %vm3760 = vmor %vm3758, %vm3759
    %v3761 = vsel %vm3760, %v3753, %v3757
    %v3762 = vand.u32 2147483647, %v3737
    %vm3763 = vcmp.eq.f32.partialorder %v3762, 8.507059e+37
    %v3764 = vand.u32 %v3737, 2147483648
    %v3765 = vor.u32 1.1754944e-38, %v3764
    %v3766 = vsel %vm3763, %v3765, %v3761
    %v3767 = vmul.f32 1.0, %v3766
    %v3768 = vxor.u32 %v3724, 2147483648
    %v3769 = vxor.u32 %v3725, 2147483648
    %v3770 = vmul.f32 %v3768, 1.442695
    %v3771 = vpow.pop %v3770
    %v3772 = vmul.f32 %v3769, 1.442695
    %v3773 = vpow.pop %v3772
    %v3774 = vadd.f32 %v3771, 1.0
    %v3775 = vadd.f32 %v3773, 1.0
    %v3776 = vrcp.pop %v3774
    %v3777 = vmul.f32 %v3774, %v3776
    %v3778 = vsub.f32 1.0, %v3777
    %v3779 = vmul.f32 %v3776, %v3778
    %v3780 = vadd.f32 %v3776, %v3779
    %vm3781 = vweird.f32 %v3774
    %vm3782 = vweird.f32 %v3776
    %vm3783 = vmor %vm3781, %vm3782
    %v3784 = vsel %vm3783, %v3776, %v3780
    %v3785 = vand.u32 2147483647, %v3774
    %vm3786 = vcmp.eq.f32.partialorder %v3785, 8.507059e+37
    %v3787 = vand.u32 %v3774, 2147483648
    %v3788 = vor.u32 1.1754944e-38, %v3787
    %v3789 = vsel %vm3786, %v3788, %v3784
    %v3790 = vmul.f32 1.0, %v3789
    %v3791 = vrcp.pop %v3775
    %v3792 = vmul.f32 %v3775, %v3791
    %v3793 = vsub.f32 1.0, %v3792
    %v3794 = vmul.f32 %v3791, %v3793
    %v3795 = vadd.f32 %v3791, %v3794
    %vm3796 = vweird.f32 %v3775
    %vm3797 = vweird.f32 %v3791
    %vm3798 = vmor %vm3796, %vm3797
    %v3799 = vsel %vm3798, %v3791, %v3795
    %v3800 = vand.u32 2147483647, %v3775
    %vm3801 = vcmp.eq.f32.partialorder %v3800, 8.507059e+37
    %v3802 = vand.u32 %v3775, 2147483648
    %v3803 = vor.u32 1.1754944e-38, %v3802
    %v3804 = vsel %vm3801, %v3803, %v3799
    %v3805 = vmul.f32 1.0, %v3804
    %v3806 = vtanh.pop %v3726
    %v3807 = vtanh.pop %v3727
    %v3808 = vxor.u32 %v3728, 2147483648
    %v3809 = vxor.u32 %v3729, 2147483648
    %v3810 = vmul.f32 %v3808, 1.442695
    %v3811 = vpow.pop %v3810
    %v3812 = vmul.f32 %v3809, 1.442695
    %v3813 = vpow.pop %v3812
    %v3814 = vadd.f32 %v3811, 1.0
    %v3815 = vadd.f32 %v3813, 1.0
    %v3816 = vrcp.pop %v3814
    %v3817 = vmul.f32 %v3814, %v3816
    %v3818 = vsub.f32 1.0, %v3817
    %v3819 = vmul.f32 %v3816, %v3818
    %v3820 = vadd.f32 %v3816, %v3819
    %vm3821 = vweird.f32 %v3814
    %vm3822 = vweird.f32 %v3816
    %vm3823 = vmor %vm3821, %vm3822
    %v3824 = vsel %vm3823, %v3816, %v3820
    %v3825 = vand.u32 2147483647, %v3814
    %vm3826 = vcmp.eq.f32.partialorder %v3825, 8.507059e+37
    %v3827 = vand.u32 %v3814, 2147483648
    %v3828 = vor.u32 1.1754944e-38, %v3827
    %v3829 = vsel %vm3826, %v3828, %v3824
    %v3830 = vmul.f32 1.0, %v3829
    %v3831 = vrcp.pop %v3815
    %v3832 = vmul.f32 %v3815, %v3831
    %v3833 = vsub.f32 1.0, %v3832
    %v3834 = vmul.f32 %v3831, %v3833
    %v3835 = vadd.f32 %v3831, %v3834
    %vm3836 = vweird.f32 %v3815
    %vm3837 = vweird.f32 %v3831
    %vm3838 = vmor %vm3836, %vm3837
    %v3839 = vsel %vm3838, %v3831, %v3835
    %v3840 = vand.u32 2147483647, %v3815
    %vm3841 = vcmp.eq.f32.partialorder %v3840, 8.507059e+37
    %v3842 = vand.u32 %v3815, 2147483648
    %v3843 = vor.u32 1.1754944e-38, %v3842
    %v3844 = vsel %vm3841, %v3843, %v3839
    %v3845 = vmul.f32 1.0, %v3844
    %v3846 = vmul.f32 %v3790, %v3376
    %v3847 = vmul.f32 %v3805, %v3377
    %v3848 = vmul.f32 %v3752, %v3806
    %v3849 = vmul.f32 %v3767, %v3807
    %v3850 = vadd.f32 %v3846, %v3848
    %v3851 = vadd.f32 %v3847, %v3849
    %v3852 = vtanh.pop %v3850
    %v3853 = vtanh.pop %v3851
    %v3854 = vmul.f32 %v3830, %v3852
    %v3855 = vmul.f32 %v3845, %v3853
    %v3856 = vld [vmem:[%s2354] sm:$0xff]
    %v3857 = vld [vmem:[%s2352] sm:$0xff]
    %v3858 = vsub.f32 1.0, %v3856
    %v3859 = vsub.f32 1.0, %v3857
    %v3860 = vmul.f32 %v3856, %v3854
    %v3861 = vmul.f32 %v3857, %v3855
    %v3862 = vmul.f32 %v3856, %v3850
    %v3863 = vmul.f32 %v3857, %v3851
    %s3864 = scalar_lea.vmem [#allocation9], 40
    %3865 = vst [vmem:[%s3864] sm:$0xff] %v3860
    %s3866 = scalar_lea.vmem [#allocation10], 16
    %3867 = vst [vmem:[%s3866] sm:$0xff] %v3861
    %v3868 = vmul.f32 %v3858, %v3372
    %v3869 = vmul.f32 %v3859, %v3373
    %v3870 = vadd.f32 %v3860, %v3868
    %v3871 = vadd.f32 %v3861, %v3869
    %v3872 = vmul.f32 %v3858, %v3376
    %v3873 = vmul.f32 %v3859, %v3377
    %v3874 = vadd.f32 %v3862, %v3872
    %v3875 = vadd.f32 %v3863, %v3873
    %v3876 = vld [vmem:[%s1375] sm:$0xff]
    %v3877 = vld [vmem:[%s1375 + $0x8] sm:$0xff]
    %v3878 = vld [vmem:[%s1375 + $0x10] sm:$0xff]
    %v3879 = vld [vmem:[%s1375 + $0x18] sm:$0xff]
    %v3880 = vld [vmem:[%s1375 + $0x20] sm:$0xff]
    %v3881 = vld [vmem:[%s1375 + $0x28] sm:$0xff]
    %v3882 = vld [vmem:[%s1375 + $0x30] sm:$0xff]
    %v3883 = vld [vmem:[%s1375 + $0x38] sm:$0xff]
    %v3884 = vld [vmem:[%s1364] sm:$0xff]
    %v3885 = vld [vmem:[%s1364 + $0x8] sm:$0xff]
    %v3886 = vld [vmem:[%s1364 + $0x10] sm:$0xff]
    %v3887 = vld [vmem:[%s1364 + $0x18] sm:$0xff]
    %v3888 = vld [vmem:[%s1364 + $0x20] sm:$0xff]
    %v3889 = vld [vmem:[%s1364 + $0x28] sm:$0xff]
    %v3890 = vld [vmem:[%s1364 + $0x30] sm:$0xff]
    %v3891 = vld [vmem:[%s1364 + $0x38] sm:$0xff]
    %v3892 = vsel %vm852, %v3876, %v3884
    %v3893 = vsel %vm853, %v3877, %v3885
    %v3894 = vsel %vm854, %v3878, %v3886
    %v3895 = vsel %vm855, %v3879, %v3887
    %v3896 = vsel %vm856, %v3880, %v3888
    %v3897 = vsel %vm857, %v3881, %v3889
    %v3898 = vsel %vm858, %v3882, %v3890
    %v3899 = vsel %vm859, %v3883, %v3891
    %3900 = vmatpush.msra.mxu0 %v651
    %3901 = vmatpush.msra.mxu0 %v643
    %3902 = vmatpush.msra.mxu0 %v635
    %3903 = vmatpush.msra.mxu0 %v627
    %3904 = vmatpush.msra.mxu0 %v619
    %3905 = vmatpush.msra.mxu0 %v611
    %3906 = vmatpush.msra.mxu0 %v603
    %3907 = vmatpush.msra.mxu0 %v595
    %3908 = vmatpush.msra.mxu0 %v587
    %3909 = vmatpush.msra.mxu0 %v579
    %3910 = vmatpush.msra.mxu0 %v571
    %3911 = vmatpush.msra.mxu0 %v563
    %3912 = vmatpush.msra.mxu0 %v555
    %3913 = vmatpush.msra.mxu0 %v547
    %3914 = vmatpush.msra.mxu0 %v539
    %3915 = vmatpush.msra.mxu0 %v531
    %3916 = vmatmul.f32.gmra.mxu0 %v3870
    %v3917 = vpop.f32.mrf.mxu0
    %v3918 = vadd.f32 0.0, %v3917
    %3919 = vdwg.mxu0
    %3920 = vmatpush.msra.mxu0 %v779
    %3921 = vmatpush.msra.mxu0 %v771
    %3922 = vmatpush.msra.mxu0 %v763
    %3923 = vmatpush.msra.mxu0 %v755
    %3924 = vmatpush.msra.mxu0 %v747
    %3925 = vmatpush.msra.mxu0 %v739
    %3926 = vmatpush.msra.mxu0 %v731
    %3927 = vmatpush.msra.mxu0 %v723
    %3928 = vmatpush.msra.mxu0 %v715
    %3929 = vmatpush.msra.mxu0 %v707
    %3930 = vmatpush.msra.mxu0 %v699
    %3931 = vmatpush.msra.mxu0 %v691
    %3932 = vmatpush.msra.mxu0 %v683
    %3933 = vmatpush.msra.mxu0 %v675
    %3934 = vmatpush.msra.mxu0 %v667
    %3935 = vmatpush.msra.mxu0 %v659
    %3936 = vmatmul.f32.gmra.mxu0 %v3871
    %v3937 = vpop.f32.mrf.mxu0
    %v3938 = vadd.f32 %v3918, %v3937
    %3939 = vdwg.mxu0
    %3940 = vmatpush.msra.mxu0 %v652
    %3941 = vmatpush.msra.mxu0 %v644
    %3942 = vmatpush.msra.mxu0 %v636
    %3943 = vmatpush.msra.mxu0 %v628
    %3944 = vmatpush.msra.mxu0 %v620
    %3945 = vmatpush.msra.mxu0 %v612
    %3946 = vmatpush.msra.mxu0 %v604
    %3947 = vmatpush.msra.mxu0 %v596
    %3948 = vmatpush.msra.mxu0 %v588
    %3949 = vmatpush.msra.mxu0 %v580
    %3950 = vmatpush.msra.mxu0 %v572
    %3951 = vmatpush.msra.mxu0 %v564
    %3952 = vmatpush.msra.mxu0 %v556
    %3953 = vmatpush.msra.mxu0 %v548
    %3954 = vmatpush.msra.mxu0 %v540
    %3955 = vmatpush.msra.mxu0 %v532
    %3956 = vmatmul.f32.gmra.mxu0 %v3870
    %v3957 = vpop.f32.mrf.mxu0
    %v3958 = vadd.f32 0.0, %v3957
    %3959 = vdwg.mxu0
    %3960 = vmatpush.msra.mxu0 %v780
    %3961 = vmatpush.msra.mxu0 %v772
    %3962 = vmatpush.msra.mxu0 %v764
    %3963 = vmatpush.msra.mxu0 %v756
    %3964 = vmatpush.msra.mxu0 %v748
    %3965 = vmatpush.msra.mxu0 %v740
    %3966 = vmatpush.msra.mxu0 %v732
    %3967 = vmatpush.msra.mxu0 %v724
    %3968 = vmatpush.msra.mxu0 %v716
    %3969 = vmatpush.msra.mxu0 %v708
    %3970 = vmatpush.msra.mxu0 %v700
    %3971 = vmatpush.msra.mxu0 %v692
    %3972 = vmatpush.msra.mxu0 %v684
    %3973 = vmatpush.msra.mxu0 %v676
    %3974 = vmatpush.msra.mxu0 %v668
    %3975 = vmatpush.msra.mxu0 %v660
    %3976 = vmatmul.f32.gmra.mxu0 %v3871
    %v3977 = vpop.f32.mrf.mxu0
    %v3978 = vadd.f32 %v3958, %v3977
    %3979 = vdwg.mxu0
    %3980 = vmatpush.msra.mxu0 %v653
    %3981 = vmatpush.msra.mxu0 %v645
    %3982 = vmatpush.msra.mxu0 %v637
    %3983 = vmatpush.msra.mxu0 %v629
    %3984 = vmatpush.msra.mxu0 %v621
    %3985 = vmatpush.msra.mxu0 %v613
    %3986 = vmatpush.msra.mxu0 %v605
    %3987 = vmatpush.msra.mxu0 %v597
    %3988 = vmatpush.msra.mxu0 %v589
    %3989 = vmatpush.msra.mxu0 %v581
    %3990 = vmatpush.msra.mxu0 %v573
    %3991 = vmatpush.msra.mxu0 %v565
    %3992 = vmatpush.msra.mxu0 %v557
    %3993 = vmatpush.msra.mxu0 %v549
    %3994 = vmatpush.msra.mxu0 %v541
    %3995 = vmatpush.msra.mxu0 %v533
    %3996 = vmatmul.f32.gmra.mxu0 %v3870
    %v3997 = vpop.f32.mrf.mxu0
    %v3998 = vadd.f32 0.0, %v3997
    %3999 = vdwg.mxu0
    %4000 = vmatpush.msra.mxu0 %v781
    %4001 = vmatpush.msra.mxu0 %v773
    %4002 = vmatpush.msra.mxu0 %v765
    %4003 = vmatpush.msra.mxu0 %v757
    %4004 = vmatpush.msra.mxu0 %v749
    %4005 = vmatpush.msra.mxu0 %v741
    %4006 = vmatpush.msra.mxu0 %v733
    %4007 = vmatpush.msra.mxu0 %v725
    %4008 = vmatpush.msra.mxu0 %v717
    %4009 = vmatpush.msra.mxu0 %v709
    %4010 = vmatpush.msra.mxu0 %v701
    %4011 = vmatpush.msra.mxu0 %v693
    %4012 = vmatpush.msra.mxu0 %v685
    %4013 = vmatpush.msra.mxu0 %v677
    %4014 = vmatpush.msra.mxu0 %v669
    %4015 = vmatpush.msra.mxu0 %v661
    %4016 = vmatmul.f32.gmra.mxu0 %v3871
    %v4017 = vpop.f32.mrf.mxu0
    %v4018 = vadd.f32 %v3998, %v4017
    %4019 = vdwg.mxu0
    %4020 = vmatpush.msra.mxu0 %v654
    %4021 = vmatpush.msra.mxu0 %v646
    %4022 = vmatpush.msra.mxu0 %v638
    %4023 = vmatpush.msra.mxu0 %v630
    %4024 = vmatpush.msra.mxu0 %v622
    %4025 = vmatpush.msra.mxu0 %v614
    %4026 = vmatpush.msra.mxu0 %v606
    %4027 = vmatpush.msra.mxu0 %v598
    %4028 = vmatpush.msra.mxu0 %v590
    %4029 = vmatpush.msra.mxu0 %v582
    %4030 = vmatpush.msra.mxu0 %v574
    %4031 = vmatpush.msra.mxu0 %v566
    %4032 = vmatpush.msra.mxu0 %v558
    %4033 = vmatpush.msra.mxu0 %v550
    %4034 = vmatpush.msra.mxu0 %v542
    %4035 = vmatpush.msra.mxu0 %v534
    %4036 = vmatmul.f32.gmra.mxu0 %v3870
    %v4037 = vpop.f32.mrf.mxu0
    %v4038 = vadd.f32 0.0, %v4037
    %4039 = vdwg.mxu0
    %4040 = vmatpush.msra.mxu0 %v782
    %4041 = vmatpush.msra.mxu0 %v774
    %4042 = vmatpush.msra.mxu0 %v766
    %4043 = vmatpush.msra.mxu0 %v758
    %4044 = vmatpush.msra.mxu0 %v750
    %4045 = vmatpush.msra.mxu0 %v742
    %4046 = vmatpush.msra.mxu0 %v734
    %4047 = vmatpush.msra.mxu0 %v726
    %4048 = vmatpush.msra.mxu0 %v718
    %4049 = vmatpush.msra.mxu0 %v710
    %4050 = vmatpush.msra.mxu0 %v702
    %4051 = vmatpush.msra.mxu0 %v694
    %4052 = vmatpush.msra.mxu0 %v686
    %4053 = vmatpush.msra.mxu0 %v678
    %4054 = vmatpush.msra.mxu0 %v670
    %4055 = vmatpush.msra.mxu0 %v662
    %4056 = vmatmul.f32.gmra.mxu0 %v3871
    %v4057 = vpop.f32.mrf.mxu0
    %v4058 = vadd.f32 %v4038, %v4057
    %4059 = vdwg.mxu0
    %4060 = vmatpush.msra.mxu0 %v655
    %4061 = vmatpush.msra.mxu0 %v647
    %4062 = vmatpush.msra.mxu0 %v639
    %4063 = vmatpush.msra.mxu0 %v631
    %4064 = vmatpush.msra.mxu0 %v623
    %4065 = vmatpush.msra.mxu0 %v615
    %4066 = vmatpush.msra.mxu0 %v607
    %4067 = vmatpush.msra.mxu0 %v599
    %4068 = vmatpush.msra.mxu0 %v591
    %4069 = vmatpush.msra.mxu0 %v583
    %4070 = vmatpush.msra.mxu0 %v575
    %4071 = vmatpush.msra.mxu0 %v567
    %4072 = vmatpush.msra.mxu0 %v559
    %4073 = vmatpush.msra.mxu0 %v551
    %4074 = vmatpush.msra.mxu0 %v543
    %4075 = vmatpush.msra.mxu0 %v535
    %4076 = vmatmul.f32.gmra.mxu0 %v3870
    %v4077 = vpop.f32.mrf.mxu0
    %v4078 = vadd.f32 0.0, %v4077
    %4079 = vdwg.mxu0
    %4080 = vmatpush.msra.mxu0 %v783
    %4081 = vmatpush.msra.mxu0 %v775
    %4082 = vmatpush.msra.mxu0 %v767
    %4083 = vmatpush.msra.mxu0 %v759
    %4084 = vmatpush.msra.mxu0 %v751
    %4085 = vmatpush.msra.mxu0 %v743
    %4086 = vmatpush.msra.mxu0 %v735
    %4087 = vmatpush.msra.mxu0 %v727
    %4088 = vmatpush.msra.mxu0 %v719
    %4089 = vmatpush.msra.mxu0 %v711
    %4090 = vmatpush.msra.mxu0 %v703
    %4091 = vmatpush.msra.mxu0 %v695
    %4092 = vmatpush.msra.mxu0 %v687
    %4093 = vmatpush.msra.mxu0 %v679
    %4094 = vmatpush.msra.mxu0 %v671
    %4095 = vmatpush.msra.mxu0 %v663
    %4096 = vmatmul.f32.gmra.mxu0 %v3871
    %v4097 = vpop.f32.mrf.mxu0
    %v4098 = vadd.f32 %v4078, %v4097
    %4099 = vdwg.mxu0
    %4100 = vmatpush.msra.mxu0 %v656
    %4101 = vmatpush.msra.mxu0 %v648
    %4102 = vmatpush.msra.mxu0 %v640
    %4103 = vmatpush.msra.mxu0 %v632
    %4104 = vmatpush.msra.mxu0 %v624
    %4105 = vmatpush.msra.mxu0 %v616
    %4106 = vmatpush.msra.mxu0 %v608
    %4107 = vmatpush.msra.mxu0 %v600
    %4108 = vmatpush.msra.mxu0 %v592
    %4109 = vmatpush.msra.mxu0 %v584
    %4110 = vmatpush.msra.mxu0 %v576
    %4111 = vmatpush.msra.mxu0 %v568
    %4112 = vmatpush.msra.mxu0 %v560
    %4113 = vmatpush.msra.mxu0 %v552
    %4114 = vmatpush.msra.mxu0 %v544
    %4115 = vmatpush.msra.mxu0 %v536
    %4116 = vmatmul.f32.gmra.mxu0 %v3870
    %v4117 = vpop.f32.mrf.mxu0
    %v4118 = vadd.f32 0.0, %v4117
    %4119 = vdwg.mxu0
    %4120 = vmatpush.msra.mxu0 %v784
    %4121 = vmatpush.msra.mxu0 %v776
    %4122 = vmatpush.msra.mxu0 %v768
    %4123 = vmatpush.msra.mxu0 %v760
    %4124 = vmatpush.msra.mxu0 %v752
    %4125 = vmatpush.msra.mxu0 %v744
    %4126 = vmatpush.msra.mxu0 %v736
    %4127 = vmatpush.msra.mxu0 %v728
    %4128 = vmatpush.msra.mxu0 %v720
    %4129 = vmatpush.msra.mxu0 %v712
    %4130 = vmatpush.msra.mxu0 %v704
    %4131 = vmatpush.msra.mxu0 %v696
    %4132 = vmatpush.msra.mxu0 %v688
    %4133 = vmatpush.msra.mxu0 %v680
    %4134 = vmatpush.msra.mxu0 %v672
    %4135 = vmatpush.msra.mxu0 %v664
    %4136 = vmatmul.f32.gmra.mxu0 %v3871
    %v4137 = vpop.f32.mrf.mxu0
    %v4138 = vadd.f32 %v4118, %v4137
    %4139 = vdwg.mxu0
    %4140 = vmatpush.msra.mxu0 %v657
    %4141 = vmatpush.msra.mxu0 %v649
    %4142 = vmatpush.msra.mxu0 %v641
    %4143 = vmatpush.msra.mxu0 %v633
    %4144 = vmatpush.msra.mxu0 %v625
    %4145 = vmatpush.msra.mxu0 %v617
    %4146 = vmatpush.msra.mxu0 %v609
    %4147 = vmatpush.msra.mxu0 %v601
    %4148 = vmatpush.msra.mxu0 %v593
    %4149 = vmatpush.msra.mxu0 %v585
    %4150 = vmatpush.msra.mxu0 %v577
    %4151 = vmatpush.msra.mxu0 %v569
    %4152 = vmatpush.msra.mxu0 %v561
    %4153 = vmatpush.msra.mxu0 %v553
    %4154 = vmatpush.msra.mxu0 %v545
    %4155 = vmatpush.msra.mxu0 %v537
    %4156 = vmatmul.f32.gmra.mxu0 %v3870
    %v4157 = vpop.f32.mrf.mxu0
    %v4158 = vadd.f32 0.0, %v4157
    %4159 = vdwg.mxu0
    %4160 = vmatpush.msra.mxu0 %v785
    %4161 = vmatpush.msra.mxu0 %v777
    %4162 = vmatpush.msra.mxu0 %v769
    %4163 = vmatpush.msra.mxu0 %v761
    %4164 = vmatpush.msra.mxu0 %v753
    %4165 = vmatpush.msra.mxu0 %v745
    %4166 = vmatpush.msra.mxu0 %v737
    %4167 = vmatpush.msra.mxu0 %v729
    %4168 = vmatpush.msra.mxu0 %v721
    %4169 = vmatpush.msra.mxu0 %v713
    %4170 = vmatpush.msra.mxu0 %v705
    %4171 = vmatpush.msra.mxu0 %v697
    %4172 = vmatpush.msra.mxu0 %v689
    %4173 = vmatpush.msra.mxu0 %v681
    %4174 = vmatpush.msra.mxu0 %v673
    %4175 = vmatpush.msra.mxu0 %v665
    %4176 = vmatmul.f32.gmra.mxu0 %v3871
    %v4177 = vpop.f32.mrf.mxu0
    %v4178 = vadd.f32 %v4158, %v4177
    %4179 = vdwg.mxu0
    %4180 = vmatpush.msra.mxu0 %v658
    %4181 = vmatpush.msra.mxu0 %v650
    %4182 = vmatpush.msra.mxu0 %v642
    %4183 = vmatpush.msra.mxu0 %v634
    %4184 = vmatpush.msra.mxu0 %v626
    %4185 = vmatpush.msra.mxu0 %v618
    %4186 = vmatpush.msra.mxu0 %v610
    %4187 = vmatpush.msra.mxu0 %v602
    %4188 = vmatpush.msra.mxu0 %v594
    %4189 = vmatpush.msra.mxu0 %v586
    %4190 = vmatpush.msra.mxu0 %v578
    %4191 = vmatpush.msra.mxu0 %v570
    %4192 = vmatpush.msra.mxu0 %v562
    %4193 = vmatpush.msra.mxu0 %v554
    %4194 = vmatpush.msra.mxu0 %v546
    %4195 = vmatpush.msra.mxu0 %v538
    %4196 = vmatmul.f32.gmra.mxu0 %v3870
    %v4197 = vpop.f32.mrf.mxu0
    %v4198 = vadd.f32 0.0, %v4197
    %4199 = vdwg.mxu0
    %4200 = vmatpush.msra.mxu0 %v786
    %4201 = vmatpush.msra.mxu0 %v778
    %4202 = vmatpush.msra.mxu0 %v770
    %4203 = vmatpush.msra.mxu0 %v762
    %4204 = vmatpush.msra.mxu0 %v754
    %4205 = vmatpush.msra.mxu0 %v746
    %4206 = vmatpush.msra.mxu0 %v738
    %4207 = vmatpush.msra.mxu0 %v730
    %4208 = vmatpush.msra.mxu0 %v722
    %4209 = vmatpush.msra.mxu0 %v714
    %4210 = vmatpush.msra.mxu0 %v706
    %4211 = vmatpush.msra.mxu0 %v698
    %4212 = vmatpush.msra.mxu0 %v690
    %4213 = vmatpush.msra.mxu0 %v682
    %4214 = vmatpush.msra.mxu0 %v674
    %4215 = vmatpush.msra.mxu0 %v666
    %4216 = vmatmul.f32.gmra.mxu0 %v3871
    %v4217 = vpop.f32.mrf.mxu0
    %v4218 = vadd.f32 %v4198, %v4217
    %4219 = vdwg.mxu0
    %v4220 = vadd.f32 %v3892, %v3938
    %v4221 = vadd.f32 %v3893, %v3978
    %v4222 = vadd.f32 %v3894, %v4018
    %v4223 = vadd.f32 %v3895, %v4058
    %v4224 = vadd.f32 %v3896, %v4098
    %v4225 = vadd.f32 %v3897, %v4138
    %v4226 = vadd.f32 %v3898, %v4178
    %v4227 = vadd.f32 %v3899, %v4218
    %v4228 = vxor.u32 %v4220, 2147483648
    %v4229 = vxor.u32 %v4221, 2147483648
    %v4230 = vmul.f32 %v4228, 1.442695
    %v4231 = vpow.pop %v4230
    %v4232 = vmul.f32 %v4229, 1.442695
    %v4233 = vpow.pop %v4232
    %v4234 = vadd.f32 %v4231, 1.0
    %v4235 = vadd.f32 %v4233, 1.0
    %v4236 = vrcp.pop %v4234
    %v4237 = vmul.f32 %v4234, %v4236
    %v4238 = vsub.f32 1.0, %v4237
    %v4239 = vmul.f32 %v4236, %v4238
    %v4240 = vadd.f32 %v4236, %v4239
    %vm4241 = vweird.f32 %v4234
    %vm4242 = vweird.f32 %v4236
    %vm4243 = vmor %vm4241, %vm4242
    %v4244 = vsel %vm4243, %v4236, %v4240
    %v4245 = vand.u32 2147483647, %v4234
    %vm4246 = vcmp.eq.f32.partialorder %v4245, 8.507059e+37
    %v4247 = vand.u32 %v4234, 2147483648
    %v4248 = vor.u32 1.1754944e-38, %v4247
    %v4249 = vsel %vm4246, %v4248, %v4244
    %v4250 = vmul.f32 1.0, %v4249
    %v4251 = vrcp.pop %v4235
    %v4252 = vmul.f32 %v4235, %v4251
    %v4253 = vsub.f32 1.0, %v4252
    %v4254 = vmul.f32 %v4251, %v4253
    %v4255 = vadd.f32 %v4251, %v4254
    %vm4256 = vweird.f32 %v4235
    %vm4257 = vweird.f32 %v4251
    %vm4258 = vmor %vm4256, %vm4257
    %v4259 = vsel %vm4258, %v4251, %v4255
    %v4260 = vand.u32 2147483647, %v4235
    %vm4261 = vcmp.eq.f32.partialorder %v4260, 8.507059e+37
    %v4262 = vand.u32 %v4235, 2147483648
    %v4263 = vor.u32 1.1754944e-38, %v4262
    %v4264 = vsel %vm4261, %v4263, %v4259
    %v4265 = vmul.f32 1.0, %v4264
    %v4266 = vxor.u32 %v4222, 2147483648
    %v4267 = vxor.u32 %v4223, 2147483648
    %v4268 = vmul.f32 %v4266, 1.442695
    %v4269 = vpow.pop %v4268
    %v4270 = vmul.f32 %v4267, 1.442695
    %v4271 = vpow.pop %v4270
    %v4272 = vadd.f32 %v4269, 1.0
    %v4273 = vadd.f32 %v4271, 1.0
    %v4274 = vrcp.pop %v4272
    %v4275 = vmul.f32 %v4272, %v4274
    %v4276 = vsub.f32 1.0, %v4275
    %v4277 = vmul.f32 %v4274, %v4276
    %v4278 = vadd.f32 %v4274, %v4277
    %vm4279 = vweird.f32 %v4272
    %vm4280 = vweird.f32 %v4274
    %vm4281 = vmor %vm4279, %vm4280
    %v4282 = vsel %vm4281, %v4274, %v4278
    %v4283 = vand.u32 2147483647, %v4272
    %vm4284 = vcmp.eq.f32.partialorder %v4283, 8.507059e+37
    %v4285 = vand.u32 %v4272, 2147483648
    %v4286 = vor.u32 1.1754944e-38, %v4285
    %v4287 = vsel %vm4284, %v4286, %v4282
    %v4288 = vmul.f32 1.0, %v4287
    %v4289 = vrcp.pop %v4273
    %v4290 = vmul.f32 %v4273, %v4289
    %v4291 = vsub.f32 1.0, %v4290
    %v4292 = vmul.f32 %v4289, %v4291
    %v4293 = vadd.f32 %v4289, %v4292
    %vm4294 = vweird.f32 %v4273
    %vm4295 = vweird.f32 %v4289
    %vm4296 = vmor %vm4294, %vm4295
    %v4297 = vsel %vm4296, %v4289, %v4293
    %v4298 = vand.u32 2147483647, %v4273
    %vm4299 = vcmp.eq.f32.partialorder %v4298, 8.507059e+37
    %v4300 = vand.u32 %v4273, 2147483648
    %v4301 = vor.u32 1.1754944e-38, %v4300
    %v4302 = vsel %vm4299, %v4301, %v4297
    %v4303 = vmul.f32 1.0, %v4302
    %v4304 = vtanh.pop %v4224
    %v4305 = vtanh.pop %v4225
    %v4306 = vxor.u32 %v4226, 2147483648
    %v4307 = vxor.u32 %v4227, 2147483648
    %v4308 = vmul.f32 %v4306, 1.442695
    %v4309 = vpow.pop %v4308
    %v4310 = vmul.f32 %v4307, 1.442695
    %v4311 = vpow.pop %v4310
    %v4312 = vadd.f32 %v4309, 1.0
    %v4313 = vadd.f32 %v4311, 1.0
    %v4314 = vrcp.pop %v4312
    %v4315 = vmul.f32 %v4312, %v4314
    %v4316 = vsub.f32 1.0, %v4315
    %v4317 = vmul.f32 %v4314, %v4316
    %v4318 = vadd.f32 %v4314, %v4317
    %vm4319 = vweird.f32 %v4312
    %vm4320 = vweird.f32 %v4314
    %vm4321 = vmor %vm4319, %vm4320
    %v4322 = vsel %vm4321, %v4314, %v4318
    %v4323 = vand.u32 2147483647, %v4312
    %vm4324 = vcmp.eq.f32.partialorder %v4323, 8.507059e+37
    %v4325 = vand.u32 %v4312, 2147483648
    %v4326 = vor.u32 1.1754944e-38, %v4325
    %v4327 = vsel %vm4324, %v4326, %v4322
    %v4328 = vmul.f32 1.0, %v4327
    %v4329 = vrcp.pop %v4313
    %v4330 = vmul.f32 %v4313, %v4329
    %v4331 = vsub.f32 1.0, %v4330
    %v4332 = vmul.f32 %v4329, %v4331
    %v4333 = vadd.f32 %v4329, %v4332
    %vm4334 = vweird.f32 %v4313
    %vm4335 = vweird.f32 %v4329
    %vm4336 = vmor %vm4334, %vm4335
    %v4337 = vsel %vm4336, %v4329, %v4333
    %v4338 = vand.u32 2147483647, %v4313
    %vm4339 = vcmp.eq.f32.partialorder %v4338, 8.507059e+37
    %v4340 = vand.u32 %v4313, 2147483648
    %v4341 = vor.u32 1.1754944e-38, %v4340
    %v4342 = vsel %vm4339, %v4341, %v4337
    %v4343 = vmul.f32 1.0, %v4342
    %v4344 = vmul.f32 %v4288, %v3874
    %v4345 = vmul.f32 %v4303, %v3875
    %v4346 = vmul.f32 %v4250, %v4304
    %v4347 = vmul.f32 %v4265, %v4305
    %v4348 = vadd.f32 %v4344, %v4346
    %v4349 = vadd.f32 %v4345, %v4347
    %v4350 = vtanh.pop %v4348
    %v4351 = vtanh.pop %v4349
    %v4352 = vmul.f32 %v4328, %v4350
    %v4353 = vmul.f32 %v4343, %v4351
    %v4354 = vld [vmem:[%s1848] sm:$0xff]
    %v4355 = vld [vmem:[%s1846] sm:$0xff]
    %v4356 = vsub.f32 1.0, %v4354
    %v4357 = vsub.f32 1.0, %v4355
    %v4358 = vmul.f32 %v4354, %v4352
    %v4359 = vmul.f32 %v4355, %v4353
    %v4360 = vmul.f32 %v4354, %v4348
    %v4361 = vmul.f32 %v4355, %v4349
    %s4362 = scalar_lea.vmem [#allocation9], 48
    %4363 = vst [vmem:[%s4362] sm:$0xff] %v4358
    %s4364 = scalar_lea.vmem [#allocation10], 8
    %4365 = vst [vmem:[%s4364] sm:$0xff] %v4359
    %v4366 = vmul.f32 %v4356, %v3870
    %v4367 = vmul.f32 %v4357, %v3871
    %v4368 = vadd.f32 %v4358, %v4366
    %v4369 = vadd.f32 %v4359, %v4367
    %v4370 = vmul.f32 %v4356, %v3874
    %v4371 = vmul.f32 %v4357, %v3875
    %v4372 = vadd.f32 %v4360, %v4370
    %v4373 = vadd.f32 %v4361, %v4371
    %v4374 = vld [vmem:[%s873] sm:$0xff]
    %v4375 = vld [vmem:[%s873 + $0x8] sm:$0xff]
    %v4376 = vld [vmem:[%s873 + $0x10] sm:$0xff]
    %v4377 = vld [vmem:[%s873 + $0x18] sm:$0xff]
    %v4378 = vld [vmem:[%s873 + $0x20] sm:$0xff]
    %v4379 = vld [vmem:[%s873 + $0x28] sm:$0xff]
    %v4380 = vld [vmem:[%s873 + $0x30] sm:$0xff]
    %v4381 = vld [vmem:[%s873 + $0x38] sm:$0xff]
    %v4382 = vld [vmem:[%s862] sm:$0xff]
    %v4383 = vld [vmem:[%s862 + $0x8] sm:$0xff]
    %v4384 = vld [vmem:[%s862 + $0x10] sm:$0xff]
    %v4385 = vld [vmem:[%s862 + $0x18] sm:$0xff]
    %v4386 = vld [vmem:[%s862 + $0x20] sm:$0xff]
    %v4387 = vld [vmem:[%s862 + $0x28] sm:$0xff]
    %v4388 = vld [vmem:[%s862 + $0x30] sm:$0xff]
    %v4389 = vld [vmem:[%s862 + $0x38] sm:$0xff]
    %v4390 = vsel %vm852, %v4374, %v4382
    %v4391 = vsel %vm853, %v4375, %v4383
    %v4392 = vsel %vm854, %v4376, %v4384
    %v4393 = vsel %vm855, %v4377, %v4385
    %v4394 = vsel %vm856, %v4378, %v4386
    %v4395 = vsel %vm857, %v4379, %v4387
    %v4396 = vsel %vm858, %v4380, %v4388
    %v4397 = vsel %vm859, %v4381, %v4389
    %4398 = vmatpush.msra.mxu0 %v651
    %4399 = vmatpush.msra.mxu0 %v643
    %4400 = vmatpush.msra.mxu0 %v635
    %4401 = vmatpush.msra.mxu0 %v627
    %4402 = vmatpush.msra.mxu0 %v619
    %4403 = vmatpush.msra.mxu0 %v611
    %4404 = vmatpush.msra.mxu0 %v603
    %4405 = vmatpush.msra.mxu0 %v595
    %4406 = vmatpush.msra.mxu0 %v587
    %4407 = vmatpush.msra.mxu0 %v579
    %4408 = vmatpush.msra.mxu0 %v571
    %4409 = vmatpush.msra.mxu0 %v563
    %4410 = vmatpush.msra.mxu0 %v555
    %4411 = vmatpush.msra.mxu0 %v547
    %4412 = vmatpush.msra.mxu0 %v539
    %4413 = vmatpush.msra.mxu0 %v531
    %4414 = vmatmul.f32.gmra.mxu0 %v4368
    %v4415 = vpop.f32.mrf.mxu0
    %v4416 = vadd.f32 0.0, %v4415
    %4417 = vdwg.mxu0
    %4418 = vmatpush.msra.mxu0 %v779
    %4419 = vmatpush.msra.mxu0 %v771
    %4420 = vmatpush.msra.mxu0 %v763
    %4421 = vmatpush.msra.mxu0 %v755
    %4422 = vmatpush.msra.mxu0 %v747
    %4423 = vmatpush.msra.mxu0 %v739
    %4424 = vmatpush.msra.mxu0 %v731
    %4425 = vmatpush.msra.mxu0 %v723
    %4426 = vmatpush.msra.mxu0 %v715
    %4427 = vmatpush.msra.mxu0 %v707
    %4428 = vmatpush.msra.mxu0 %v699
    %4429 = vmatpush.msra.mxu0 %v691
    %4430 = vmatpush.msra.mxu0 %v683
    %4431 = vmatpush.msra.mxu0 %v675
    %4432 = vmatpush.msra.mxu0 %v667
    %4433 = vmatpush.msra.mxu0 %v659
    %4434 = vmatmul.f32.gmra.mxu0 %v4369
    %v4435 = vpop.f32.mrf.mxu0
    %v4436 = vadd.f32 %v4416, %v4435
    %4437 = vdwg.mxu0
    %4438 = vmatpush.msra.mxu0 %v652
    %4439 = vmatpush.msra.mxu0 %v644
    %4440 = vmatpush.msra.mxu0 %v636
    %4441 = vmatpush.msra.mxu0 %v628
    %4442 = vmatpush.msra.mxu0 %v620
    %4443 = vmatpush.msra.mxu0 %v612
    %4444 = vmatpush.msra.mxu0 %v604
    %4445 = vmatpush.msra.mxu0 %v596
    %4446 = vmatpush.msra.mxu0 %v588
    %4447 = vmatpush.msra.mxu0 %v580
    %4448 = vmatpush.msra.mxu0 %v572
    %4449 = vmatpush.msra.mxu0 %v564
    %4450 = vmatpush.msra.mxu0 %v556
    %4451 = vmatpush.msra.mxu0 %v548
    %4452 = vmatpush.msra.mxu0 %v540
    %4453 = vmatpush.msra.mxu0 %v532
    %4454 = vmatmul.f32.gmra.mxu0 %v4368
    %v4455 = vpop.f32.mrf.mxu0
    %v4456 = vadd.f32 0.0, %v4455
    %4457 = vdwg.mxu0
    %4458 = vmatpush.msra.mxu0 %v780
    %4459 = vmatpush.msra.mxu0 %v772
    %4460 = vmatpush.msra.mxu0 %v764
    %4461 = vmatpush.msra.mxu0 %v756
    %4462 = vmatpush.msra.mxu0 %v748
    %4463 = vmatpush.msra.mxu0 %v740
    %4464 = vmatpush.msra.mxu0 %v732
    %4465 = vmatpush.msra.mxu0 %v724
    %4466 = vmatpush.msra.mxu0 %v716
    %4467 = vmatpush.msra.mxu0 %v708
    %4468 = vmatpush.msra.mxu0 %v700
    %4469 = vmatpush.msra.mxu0 %v692
    %4470 = vmatpush.msra.mxu0 %v684
    %4471 = vmatpush.msra.mxu0 %v676
    %4472 = vmatpush.msra.mxu0 %v668
    %4473 = vmatpush.msra.mxu0 %v660
    %4474 = vmatmul.f32.gmra.mxu0 %v4369
    %v4475 = vpop.f32.mrf.mxu0
    %v4476 = vadd.f32 %v4456, %v4475
    %4477 = vdwg.mxu0
    %4478 = vmatpush.msra.mxu0 %v653
    %4479 = vmatpush.msra.mxu0 %v645
    %4480 = vmatpush.msra.mxu0 %v637
    %4481 = vmatpush.msra.mxu0 %v629
    %4482 = vmatpush.msra.mxu0 %v621
    %4483 = vmatpush.msra.mxu0 %v613
    %4484 = vmatpush.msra.mxu0 %v605
    %4485 = vmatpush.msra.mxu0 %v597
    %4486 = vmatpush.msra.mxu0 %v589
    %4487 = vmatpush.msra.mxu0 %v581
    %4488 = vmatpush.msra.mxu0 %v573
    %4489 = vmatpush.msra.mxu0 %v565
    %4490 = vmatpush.msra.mxu0 %v557
    %4491 = vmatpush.msra.mxu0 %v549
    %4492 = vmatpush.msra.mxu0 %v541
    %4493 = vmatpush.msra.mxu0 %v533
    %4494 = vmatmul.f32.gmra.mxu0 %v4368
    %v4495 = vpop.f32.mrf.mxu0
    %v4496 = vadd.f32 0.0, %v4495
    %4497 = vdwg.mxu0
    %4498 = vmatpush.msra.mxu0 %v781
    %4499 = vmatpush.msra.mxu0 %v773
    %4500 = vmatpush.msra.mxu0 %v765
    %4501 = vmatpush.msra.mxu0 %v757
    %4502 = vmatpush.msra.mxu0 %v749
    %4503 = vmatpush.msra.mxu0 %v741
    %4504 = vmatpush.msra.mxu0 %v733
    %4505 = vmatpush.msra.mxu0 %v725
    %4506 = vmatpush.msra.mxu0 %v717
    %4507 = vmatpush.msra.mxu0 %v709
    %4508 = vmatpush.msra.mxu0 %v701
    %4509 = vmatpush.msra.mxu0 %v693
    %4510 = vmatpush.msra.mxu0 %v685
    %4511 = vmatpush.msra.mxu0 %v677
    %4512 = vmatpush.msra.mxu0 %v669
    %4513 = vmatpush.msra.mxu0 %v661
    %4514 = vmatmul.f32.gmra.mxu0 %v4369
    %v4515 = vpop.f32.mrf.mxu0
    %v4516 = vadd.f32 %v4496, %v4515
    %4517 = vdwg.mxu0
    %4518 = vmatpush.msra.mxu0 %v654
    %4519 = vmatpush.msra.mxu0 %v646
    %4520 = vmatpush.msra.mxu0 %v638
    %4521 = vmatpush.msra.mxu0 %v630
    %4522 = vmatpush.msra.mxu0 %v622
    %4523 = vmatpush.msra.mxu0 %v614
    %4524 = vmatpush.msra.mxu0 %v606
    %4525 = vmatpush.msra.mxu0 %v598
    %4526 = vmatpush.msra.mxu0 %v590
    %4527 = vmatpush.msra.mxu0 %v582
    %4528 = vmatpush.msra.mxu0 %v574
    %4529 = vmatpush.msra.mxu0 %v566
    %4530 = vmatpush.msra.mxu0 %v558
    %4531 = vmatpush.msra.mxu0 %v550
    %4532 = vmatpush.msra.mxu0 %v542
    %4533 = vmatpush.msra.mxu0 %v534
    %4534 = vmatmul.f32.gmra.mxu0 %v4368
    %v4535 = vpop.f32.mrf.mxu0
    %v4536 = vadd.f32 0.0, %v4535
    %4537 = vdwg.mxu0
    %4538 = vmatpush.msra.mxu0 %v782
    %4539 = vmatpush.msra.mxu0 %v774
    %4540 = vmatpush.msra.mxu0 %v766
    %4541 = vmatpush.msra.mxu0 %v758
    %4542 = vmatpush.msra.mxu0 %v750
    %4543 = vmatpush.msra.mxu0 %v742
    %4544 = vmatpush.msra.mxu0 %v734
    %4545 = vmatpush.msra.mxu0 %v726
    %4546 = vmatpush.msra.mxu0 %v718
    %4547 = vmatpush.msra.mxu0 %v710
    %4548 = vmatpush.msra.mxu0 %v702
    %4549 = vmatpush.msra.mxu0 %v694
    %4550 = vmatpush.msra.mxu0 %v686
    %4551 = vmatpush.msra.mxu0 %v678
    %4552 = vmatpush.msra.mxu0 %v670
    %4553 = vmatpush.msra.mxu0 %v662
    %4554 = vmatmul.f32.gmra.mxu0 %v4369
    %v4555 = vpop.f32.mrf.mxu0
    %v4556 = vadd.f32 %v4536, %v4555
    %4557 = vdwg.mxu0
    %4558 = vmatpush.msra.mxu0 %v655
    %4559 = vmatpush.msra.mxu0 %v647
    %4560 = vmatpush.msra.mxu0 %v639
    %4561 = vmatpush.msra.mxu0 %v631
    %4562 = vmatpush.msra.mxu0 %v623
    %4563 = vmatpush.msra.mxu0 %v615
    %4564 = vmatpush.msra.mxu0 %v607
    %4565 = vmatpush.msra.mxu0 %v599
    %4566 = vmatpush.msra.mxu0 %v591
    %4567 = vmatpush.msra.mxu0 %v583
    %4568 = vmatpush.msra.mxu0 %v575
    %4569 = vmatpush.msra.mxu0 %v567
    %4570 = vmatpush.msra.mxu0 %v559
    %4571 = vmatpush.msra.mxu0 %v551
    %4572 = vmatpush.msra.mxu0 %v543
    %4573 = vmatpush.msra.mxu0 %v535
    %4574 = vmatmul.f32.gmra.mxu0 %v4368
    %v4575 = vpop.f32.mrf.mxu0
    %v4576 = vadd.f32 0.0, %v4575
    %4577 = vdwg.mxu0
    %4578 = vmatpush.msra.mxu0 %v783
    %4579 = vmatpush.msra.mxu0 %v775
    %4580 = vmatpush.msra.mxu0 %v767
    %4581 = vmatpush.msra.mxu0 %v759
    %4582 = vmatpush.msra.mxu0 %v751
    %4583 = vmatpush.msra.mxu0 %v743
    %4584 = vmatpush.msra.mxu0 %v735
    %4585 = vmatpush.msra.mxu0 %v727
    %4586 = vmatpush.msra.mxu0 %v719
    %4587 = vmatpush.msra.mxu0 %v711
    %4588 = vmatpush.msra.mxu0 %v703
    %4589 = vmatpush.msra.mxu0 %v695
    %4590 = vmatpush.msra.mxu0 %v687
    %4591 = vmatpush.msra.mxu0 %v679
    %4592 = vmatpush.msra.mxu0 %v671
    %4593 = vmatpush.msra.mxu0 %v663
    %4594 = vmatmul.f32.gmra.mxu0 %v4369
    %v4595 = vpop.f32.mrf.mxu0
    %v4596 = vadd.f32 %v4576, %v4595
    %4597 = vdwg.mxu0
    %4598 = vmatpush.msra.mxu0 %v656
    %4599 = vmatpush.msra.mxu0 %v648
    %4600 = vmatpush.msra.mxu0 %v640
    %4601 = vmatpush.msra.mxu0 %v632
    %4602 = vmatpush.msra.mxu0 %v624
    %4603 = vmatpush.msra.mxu0 %v616
    %4604 = vmatpush.msra.mxu0 %v608
    %4605 = vmatpush.msra.mxu0 %v600
    %4606 = vmatpush.msra.mxu0 %v592
    %4607 = vmatpush.msra.mxu0 %v584
    %4608 = vmatpush.msra.mxu0 %v576
    %4609 = vmatpush.msra.mxu0 %v568
    %4610 = vmatpush.msra.mxu0 %v560
    %4611 = vmatpush.msra.mxu0 %v552
    %4612 = vmatpush.msra.mxu0 %v544
    %4613 = vmatpush.msra.mxu0 %v536
    %4614 = vmatmul.f32.gmra.mxu0 %v4368
    %v4615 = vpop.f32.mrf.mxu0
    %v4616 = vadd.f32 0.0, %v4615
    %4617 = vdwg.mxu0
    %4618 = vmatpush.msra.mxu0 %v784
    %4619 = vmatpush.msra.mxu0 %v776
    %4620 = vmatpush.msra.mxu0 %v768
    %4621 = vmatpush.msra.mxu0 %v760
    %4622 = vmatpush.msra.mxu0 %v752
    %4623 = vmatpush.msra.mxu0 %v744
    %4624 = vmatpush.msra.mxu0 %v736
    %4625 = vmatpush.msra.mxu0 %v728
    %4626 = vmatpush.msra.mxu0 %v720
    %4627 = vmatpush.msra.mxu0 %v712
    %4628 = vmatpush.msra.mxu0 %v704
    %4629 = vmatpush.msra.mxu0 %v696
    %4630 = vmatpush.msra.mxu0 %v688
    %4631 = vmatpush.msra.mxu0 %v680
    %4632 = vmatpush.msra.mxu0 %v672
    %4633 = vmatpush.msra.mxu0 %v664
    %4634 = vmatmul.f32.gmra.mxu0 %v4369
    %v4635 = vpop.f32.mrf.mxu0
    %v4636 = vadd.f32 %v4616, %v4635
    %4637 = vdwg.mxu0
    %4638 = vmatpush.msra.mxu0 %v657
    %4639 = vmatpush.msra.mxu0 %v649
    %4640 = vmatpush.msra.mxu0 %v641
    %4641 = vmatpush.msra.mxu0 %v633
    %4642 = vmatpush.msra.mxu0 %v625
    %4643 = vmatpush.msra.mxu0 %v617
    %4644 = vmatpush.msra.mxu0 %v609
    %4645 = vmatpush.msra.mxu0 %v601
    %4646 = vmatpush.msra.mxu0 %v593
    %4647 = vmatpush.msra.mxu0 %v585
    %4648 = vmatpush.msra.mxu0 %v577
    %4649 = vmatpush.msra.mxu0 %v569
    %4650 = vmatpush.msra.mxu0 %v561
    %4651 = vmatpush.msra.mxu0 %v553
    %4652 = vmatpush.msra.mxu0 %v545
    %4653 = vmatpush.msra.mxu0 %v537
    %4654 = vmatmul.f32.gmra.mxu0 %v4368
    %v4655 = vpop.f32.mrf.mxu0
    %v4656 = vadd.f32 0.0, %v4655
    %4657 = vdwg.mxu0
    %4658 = vmatpush.msra.mxu0 %v785
    %4659 = vmatpush.msra.mxu0 %v777
    %4660 = vmatpush.msra.mxu0 %v769
    %4661 = vmatpush.msra.mxu0 %v761
    %4662 = vmatpush.msra.mxu0 %v753
    %4663 = vmatpush.msra.mxu0 %v745
    %4664 = vmatpush.msra.mxu0 %v737
    %4665 = vmatpush.msra.mxu0 %v729
    %4666 = vmatpush.msra.mxu0 %v721
    %4667 = vmatpush.msra.mxu0 %v713
    %4668 = vmatpush.msra.mxu0 %v705
    %4669 = vmatpush.msra.mxu0 %v697
    %4670 = vmatpush.msra.mxu0 %v689
    %4671 = vmatpush.msra.mxu0 %v681
    %4672 = vmatpush.msra.mxu0 %v673
    %4673 = vmatpush.msra.mxu0 %v665
    %4674 = vmatmul.f32.gmra.mxu0 %v4369
    %v4675 = vpop.f32.mrf.mxu0
    %v4676 = vadd.f32 %v4656, %v4675
    %4677 = vdwg.mxu0
    %4678 = vmatpush.msra.mxu0 %v658
    %4679 = vmatpush.msra.mxu0 %v650
    %4680 = vmatpush.msra.mxu0 %v642
    %4681 = vmatpush.msra.mxu0 %v634
    %4682 = vmatpush.msra.mxu0 %v626
    %4683 = vmatpush.msra.mxu0 %v618
    %4684 = vmatpush.msra.mxu0 %v610
    %4685 = vmatpush.msra.mxu0 %v602
    %4686 = vmatpush.msra.mxu0 %v594
    %4687 = vmatpush.msra.mxu0 %v586
    %4688 = vmatpush.msra.mxu0 %v578
    %4689 = vmatpush.msra.mxu0 %v570
    %4690 = vmatpush.msra.mxu0 %v562
    %4691 = vmatpush.msra.mxu0 %v554
    %4692 = vmatpush.msra.mxu0 %v546
    %4693 = vmatpush.msra.mxu0 %v538
    %4694 = vmatmul.f32.gmra.mxu0 %v4368
    %v4695 = vpop.f32.mrf.mxu0
    %v4696 = vadd.f32 0.0, %v4695
    %4697 = vdwg.mxu0
    %4698 = vmatpush.msra.mxu0 %v786
    %4699 = vmatpush.msra.mxu0 %v778
    %4700 = vmatpush.msra.mxu0 %v770
    %4701 = vmatpush.msra.mxu0 %v762
    %4702 = vmatpush.msra.mxu0 %v754
    %4703 = vmatpush.msra.mxu0 %v746
    %4704 = vmatpush.msra.mxu0 %v738
    %4705 = vmatpush.msra.mxu0 %v730
    %4706 = vmatpush.msra.mxu0 %v722
    %4707 = vmatpush.msra.mxu0 %v714
    %4708 = vmatpush.msra.mxu0 %v706
    %4709 = vmatpush.msra.mxu0 %v698
    %4710 = vmatpush.msra.mxu0 %v690
    %4711 = vmatpush.msra.mxu0 %v682
    %4712 = vmatpush.msra.mxu0 %v674
    %4713 = vmatpush.msra.mxu0 %v666
    %4714 = vmatmul.f32.gmra.mxu0 %v4369
    %v4715 = vpop.f32.mrf.mxu0
    %v4716 = vadd.f32 %v4696, %v4715
    %4717 = vdwg.mxu0
    %v4718 = vadd.f32 %v4390, %v4436
    %v4719 = vadd.f32 %v4391, %v4476
    %v4720 = vadd.f32 %v4392, %v4516
    %v4721 = vadd.f32 %v4393, %v4556
    %v4722 = vadd.f32 %v4394, %v4596
    %v4723 = vadd.f32 %v4395, %v4636
    %v4724 = vadd.f32 %v4396, %v4676
    %v4725 = vadd.f32 %v4397, %v4716
    %v4726 = vxor.u32 %v4718, 2147483648
    %v4727 = vxor.u32 %v4719, 2147483648
    %v4728 = vmul.f32 %v4726, 1.442695
    %v4729 = vpow.pop %v4728
    %v4730 = vmul.f32 %v4727, 1.442695
    %v4731 = vpow.pop %v4730
    %v4732 = vadd.f32 %v4729, 1.0
    %v4733 = vadd.f32 %v4731, 1.0
    %v4734 = vrcp.pop %v4732
    %v4735 = vmul.f32 %v4732, %v4734
    %v4736 = vsub.f32 1.0, %v4735
    %v4737 = vmul.f32 %v4734, %v4736
    %v4738 = vadd.f32 %v4734, %v4737
    %vm4739 = vweird.f32 %v4732
    %vm4740 = vweird.f32 %v4734
    %vm4741 = vmor %vm4739, %vm4740
    %v4742 = vsel %vm4741, %v4734, %v4738
    %v4743 = vand.u32 2147483647, %v4732
    %vm4744 = vcmp.eq.f32.partialorder %v4743, 8.507059e+37
    %v4745 = vand.u32 %v4732, 2147483648
    %v4746 = vor.u32 1.1754944e-38, %v4745
    %v4747 = vsel %vm4744, %v4746, %v4742
    %v4748 = vmul.f32 1.0, %v4747
    %v4749 = vrcp.pop %v4733
    %v4750 = vmul.f32 %v4733, %v4749
    %v4751 = vsub.f32 1.0, %v4750
    %v4752 = vmul.f32 %v4749, %v4751
    %v4753 = vadd.f32 %v4749, %v4752
    %vm4754 = vweird.f32 %v4733
    %vm4755 = vweird.f32 %v4749
    %vm4756 = vmor %vm4754, %vm4755
    %v4757 = vsel %vm4756, %v4749, %v4753
    %v4758 = vand.u32 2147483647, %v4733
    %vm4759 = vcmp.eq.f32.partialorder %v4758, 8.507059e+37
    %v4760 = vand.u32 %v4733, 2147483648
    %v4761 = vor.u32 1.1754944e-38, %v4760
    %v4762 = vsel %vm4759, %v4761, %v4757
    %v4763 = vmul.f32 1.0, %v4762
    %v4764 = vxor.u32 %v4720, 2147483648
    %v4765 = vxor.u32 %v4721, 2147483648
    %v4766 = vmul.f32 %v4764, 1.442695
    %v4767 = vpow.pop %v4766
    %v4768 = vmul.f32 %v4765, 1.442695
    %v4769 = vpow.pop %v4768
    %v4770 = vadd.f32 %v4767, 1.0
    %v4771 = vadd.f32 %v4769, 1.0
    %v4772 = vrcp.pop %v4770
    %v4773 = vmul.f32 %v4770, %v4772
    %v4774 = vsub.f32 1.0, %v4773
    %v4775 = vmul.f32 %v4772, %v4774
    %v4776 = vadd.f32 %v4772, %v4775
    %vm4777 = vweird.f32 %v4770
    %vm4778 = vweird.f32 %v4772
    %vm4779 = vmor %vm4777, %vm4778
    %v4780 = vsel %vm4779, %v4772, %v4776
    %v4781 = vand.u32 2147483647, %v4770
    %vm4782 = vcmp.eq.f32.partialorder %v4781, 8.507059e+37
    %v4783 = vand.u32 %v4770, 2147483648
    %v4784 = vor.u32 1.1754944e-38, %v4783
    %v4785 = vsel %vm4782, %v4784, %v4780
    %v4786 = vmul.f32 1.0, %v4785
    %v4787 = vrcp.pop %v4771
    %v4788 = vmul.f32 %v4771, %v4787
    %v4789 = vsub.f32 1.0, %v4788
    %v4790 = vmul.f32 %v4787, %v4789
    %v4791 = vadd.f32 %v4787, %v4790
    %vm4792 = vweird.f32 %v4771
    %vm4793 = vweird.f32 %v4787
    %vm4794 = vmor %vm4792, %vm4793
    %v4795 = vsel %vm4794, %v4787, %v4791
    %v4796 = vand.u32 2147483647, %v4771
    %vm4797 = vcmp.eq.f32.partialorder %v4796, 8.507059e+37
    %v4798 = vand.u32 %v4771, 2147483648
    %v4799 = vor.u32 1.1754944e-38, %v4798
    %v4800 = vsel %vm4797, %v4799, %v4795
    %v4801 = vmul.f32 1.0, %v4800
    %v4802 = vtanh.pop %v4722
    %v4803 = vtanh.pop %v4723
    %v4804 = vxor.u32 %v4724, 2147483648
    %v4805 = vxor.u32 %v4725, 2147483648
    %v4806 = vmul.f32 %v4804, 1.442695
    %v4807 = vpow.pop %v4806
    %v4808 = vmul.f32 %v4805, 1.442695
    %v4809 = vpow.pop %v4808
    %v4810 = vadd.f32 %v4807, 1.0
    %v4811 = vadd.f32 %v4809, 1.0
    %v4812 = vrcp.pop %v4810
    %v4813 = vmul.f32 %v4810, %v4812
    %v4814 = vsub.f32 1.0, %v4813
    %v4815 = vmul.f32 %v4812, %v4814
    %v4816 = vadd.f32 %v4812, %v4815
    %vm4817 = vweird.f32 %v4810
    %vm4818 = vweird.f32 %v4812
    %vm4819 = vmor %vm4817, %vm4818
    %v4820 = vsel %vm4819, %v4812, %v4816
    %v4821 = vand.u32 2147483647, %v4810
    %vm4822 = vcmp.eq.f32.partialorder %v4821, 8.507059e+37
    %v4823 = vand.u32 %v4810, 2147483648
    %v4824 = vor.u32 1.1754944e-38, %v4823
    %v4825 = vsel %vm4822, %v4824, %v4820
    %v4826 = vmul.f32 1.0, %v4825
    %v4827 = vrcp.pop %v4811
    %v4828 = vmul.f32 %v4811, %v4827
    %v4829 = vsub.f32 1.0, %v4828
    %v4830 = vmul.f32 %v4827, %v4829
    %v4831 = vadd.f32 %v4827, %v4830
    %vm4832 = vweird.f32 %v4811
    %vm4833 = vweird.f32 %v4827
    %vm4834 = vmor %vm4832, %vm4833
    %v4835 = vsel %vm4834, %v4827, %v4831
    %v4836 = vand.u32 2147483647, %v4811
    %vm4837 = vcmp.eq.f32.partialorder %v4836, 8.507059e+37
    %v4838 = vand.u32 %v4811, 2147483648
    %v4839 = vor.u32 1.1754944e-38, %v4838
    %v4840 = vsel %vm4837, %v4839, %v4835
    %v4841 = vmul.f32 1.0, %v4840
    %v4842 = vmul.f32 %v4786, %v4372
    %v4843 = vmul.f32 %v4801, %v4373
    %v4844 = vmul.f32 %v4748, %v4802
    %v4845 = vmul.f32 %v4763, %v4803
    %v4846 = vadd.f32 %v4842, %v4844
    %v4847 = vadd.f32 %v4843, %v4845
    %v4848 = vtanh.pop %v4846
    %v4849 = vtanh.pop %v4847
    %v4850 = vmul.f32 %v4826, %v4848
    %v4851 = vmul.f32 %v4841, %v4849
    %v4852 = vld [vmem:[%s1345] sm:$0xff]
    %v4853 = vld [vmem:[#allocation3] sm:$0xff]
    %v4854 = vsub.f32 1.0, %v4852
    %v4855 = vsub.f32 1.0, %v4853
    %v4856 = vmul.f32 %v4852, %v4850
    %v4857 = vmul.f32 %v4853, %v4851
    %v4858 = vmul.f32 %v4852, %v4846
    %v4859 = vmul.f32 %v4853, %v4847
    %s4860 = scalar_lea.vmem [#allocation9], 56
    %4861 = vst [vmem:[%s4860] sm:$0xff] %v4856
    %4862 = vst [vmem:[#allocation10] sm:$0xff] %v4857
    %v4863 = vmul.f32 %v4854, %v4368
    %v4864 = vmul.f32 %v4855, %v4369
    %v4865 = vadd.f32 %v4856, %v4863
    %v4866 = vadd.f32 %v4857, %v4864
    %v4867 = vmul.f32 %v4854, %v4372
    %v4868 = vmul.f32 %v4855, %v4373
    %v4869 = vadd.f32 %v4858, %v4867
    %v4870 = vadd.f32 %v4859, %v4868
    %4871 = vst [vmem:[#allocation12] sm:$0xff] %v4865
    %4872 = vst [vmem:[#allocation12 + $0x8] sm:$0xff] %v4866
    %4873 = vst [vmem:[#allocation13] sm:$0xff] %v4869
    %4874 = vst [vmem:[#allocation13 + $0x8] sm:$0xff] %v4870
    // Predicated region
    $region30: #{tpu_custom_call.1} parent=1 // pred_check
      _
    $region31: #{tpu_custom_call.1} parent=1 // pred_check_branch
      %4876 = sbr.rel (0) target = $region33
    $region32: #{tpu_custom_call.1} parent=1 // pred_region
      %4878 = vsyncadd [#allocation6], 0
      %s4879 = sshll.u32 [#allocation9], 4
      %s4880 = int_to_ptr.vmem [resolvable:$true] %s4879
      %s4881 = sshll.u32 %s5, 4
      %s4882 = int_to_ptr.hbm [resolvable:$true] %s4881
      %4887 = dma.vmem_to_hbm [thread:$0]  %s4880, 1024, %s4882, [#allocation6], 128, 128, 8
    $region33: #{tpu_custom_call.1} parent=1 // pred_fallthru
      _
    // Predicated region
    $region34: #{tpu_custom_call.1} parent=1 // pred_check
      _
    $region35: #{tpu_custom_call.1} parent=1 // pred_check_branch
      %4889 = sbr.rel (0) target = $region37
    $region36: #{tpu_custom_call.1} parent=1 // pred_region
      %4891 = vsyncadd [#allocation11], 0
      %s4892 = sshll.u32 [#allocation10], 4
      %s4893 = int_to_ptr.vmem [resolvable:$true] %s4892
      %s4894 = sshll.u32 %s6, 4
      %s4895 = int_to_ptr.hbm [resolvable:$true] %s4894
      %4900 = dma.vmem_to_hbm [thread:$0]  %s4893, 1024, %s4895, [#allocation11], 128, 128, 8
    $region37: #{tpu_custom_call.1} parent=1 // pred_fallthru
      _
    // Predicated region
    $region38: #{tpu_custom_call.1} parent=1 // pred_check
      _
    $region39: #{tpu_custom_call.1} parent=1 // pred_check_branch
      %4902 = sbr.rel (0) target = $region41
    $region40: #{tpu_custom_call.1} parent=1 // pred_region
      %4904 = vsyncadd [#allocation11], 0
      %s4906 = sshll.u32 [#allocation12], 4
      %s4907 = int_to_ptr.vmem [resolvable:$true] %s4906
      %s4908 = sshll.u32 %s7, 4
      %s4909 = int_to_ptr.hbm [resolvable:$true] %s4908
      %4911 = dma.vmem_to_hbm [thread:$0]  %s4907, 256, %s4909, [#allocation11]
    $region41: #{tpu_custom_call.1} parent=1 // pred_fallthru
      _
    // Predicated region
    $region42: #{tpu_custom_call.1} parent=1 // pred_check
      _
    $region43: #{tpu_custom_call.1} parent=1 // pred_check_branch
      %4913 = sbr.rel (0) target = $region45
    $region44: #{tpu_custom_call.1} parent=1 // pred_region
      %4915 = vsyncadd [#allocation14], 0
      %s4917 = sshll.u32 [#allocation13], 4
      %s4918 = int_to_ptr.vmem [resolvable:$true] %s4917
      %s4919 = sshll.u32 %s8, 4
      %s4920 = int_to_ptr.hbm [resolvable:$true] %s4919
      %4922 = dma.vmem_to_hbm [thread:$0]  %s4918, 256, %s4920, [#allocation14]
    $region45: #{tpu_custom_call.1} parent=1 // pred_fallthru
      _
    // Predicated region
    $region46: #{tpu_custom_call.1} parent=1 // pred_check
      _
    $region47: #{tpu_custom_call.1} parent=1 // pred_check_branch
      %4924 = sbr.rel (0) target = $region49
    $region48: #{tpu_custom_call.1} parent=1 // pred_region
      %4926 = dma.done [#allocation6], 1024
    $region49: #{tpu_custom_call.1} parent=1 // pred_fallthru
      _
    // Predicated region
    $region50: #{tpu_custom_call.1} parent=1 // pred_check
      _
    $region51: #{tpu_custom_call.1} parent=1 // pred_check_branch
      %4928 = sbr.rel (0) target = $region53
    $region52: #{tpu_custom_call.1} parent=1 // pred_region
      %4930 = dma.done [#allocation11], 1024
    $region53: #{tpu_custom_call.1} parent=1 // pred_fallthru
      _
    // Predicated region
    $region54: #{tpu_custom_call.1} parent=1 // pred_check
      _
    $region55: #{tpu_custom_call.1} parent=1 // pred_check_branch
      %4932 = sbr.rel (0) target = $region57
    $region56: #{tpu_custom_call.1} parent=1 // pred_region
      %4934 = dma.done [#allocation11], 256
    $region57: #{tpu_custom_call.1} parent=1 // pred_fallthru
      _
    // Predicated region
    $region58: #{tpu_custom_call.1} parent=1 // pred_check
      _
    $region59: #{tpu_custom_call.1} parent=1 // pred_check_branch
      %4936 = sbr.rel (0) target = $region61
    $region60: #{tpu_custom_call.1} parent=1 // pred_region
      %4938 = dma.done [#allocation14], 256
    $region61: #{tpu_custom_call.1} parent=1 // pred_fallthru
      _
    %4939 = vsyncpa [#allocation5], 1
    %4940 = vsyncpa [#allocation8], 1
    %4941 = vsyncpa [#allocation6], 1
    %4942 = vsyncpa [#allocation11], 1
    %4943 = vsyncpa [#allocation14], 1

</llo_original>
